<compile_context>
chip_gen: v7x
topology: tpu7x:2x2x1
jax: 0.10.0
libtpu: 0.0.40
codegen_flags: <defaults>
</compile_context>

<pallas_src>
import functools
import math

import jax
import jax.numpy as jnp
from jax import lax
from jax.experimental import pallas as pl
from jax.experimental.pallas import tpu as pltpu


def _relu(v):
    return jnp.maximum(v, 0.0)


def _row_pos_in_block(m, n):
    """Row index modulo n, as an (m, 1) int32 column (m, n are Python ints)."""
    rows = lax.broadcasted_iota(jnp.int32, (m, 1), 0)
    if (n & (n - 1)) == 0:                 # power of two -> cheap bit mask
        return jnp.bitwise_and(rows, n - 1)
    return jnp.mod(rows, jnp.int32(n))


def encoders_kernel(x_ref,
                    wd1, bd1, w12, b12,
                    d2a, d2b, d2c, bd2, w22, b22,
                    d3a, d3b, d3c, bd3, w32, b32,
                    d4a, d4b, d4c, bd4, w42, b42,
                    o_ref,
                    pool_buf,
                    *, n1):
    """R (batch, height) rows through all four encoder blocks."""
    R = x_ref.shape[0]

    def pointwise(v, w_ref, b_ref):
        # 1x1 conv (+ folded BN) + ReLU as one MXU matmul; bf16 operands,
        # f32 accumulation (w_ref is pre-cast to bf16 on the host).
        return _relu(jnp.dot(v.astype(jnp.bfloat16), w_ref[...],
                             preferred_element_type=jnp.float32) + b_ref[...])

    def depthwise_same(v, d0, d1, d2, b_ref, n):
        # Depthwise (1,3) conv with zero 'same' padding along W, on the
        # collapsed (R*n, C) layout.  Neighbours come from XLU sublane rolls
        # (shift must be non-negative -> roll by m-1 for the "+1" neighbour);
        # rows that would cross a W-block boundary (or wrap around) are masked
        # back to the zero-padding value.
        m = v.shape[0]
        v_prev = pltpu.roll(v, shift=1, axis=0)        # row i <- v[i - 1]
        v_next = pltpu.roll(v, shift=m - 1, axis=0)    # row i <- v[i + 1]
        wpos = _row_pos_in_block(m, n)
        v_prev = jnp.where(wpos == 0, 0.0, v_prev)
        v_next = jnp.where(wpos == n - 1, 0.0, v_next)
        return _relu(v_prev * d0[...] + v * d1[...] + v_next * d2[...]
                     + b_ref[...])

    def maxpool2(v):
        # MaxPool2d((1,2)) along W: max over adjacent sublane pairs via the
        # single shared VMEM scratch + strided pl.ds loads.
        m, c = v.shape
        pool_buf[0:m, 0:c] = v
        even = pool_buf[pl.ds(0, m // 2, 2), 0:c]
        odd = pool_buf[pl.ds(1, m // 2, 2), 0:c]
        return jnp.maximum(even, odd)

    # --- block 1: depthwise (1,3) VALID conv as an im2col matmul, then 1x1 --
    x = x_ref[...].reshape(R * n1, x_ref.shape[2])     # (R*n1, 3*C_in)
    h = _relu(jnp.dot(x.astype(jnp.bfloat16), wd1[...],
                      preferred_element_type=jnp.float32) + bd1[...])
    y = pointwise(h, w12, b12)                         # (R*n1, 32)

    # --- block 2 ---
    y = depthwise_same(y, d2a, d2b, d2c, bd2, n1)      # (R*n1, 32)
    y = pointwise(y, w22, b22)                         # (R*n1, 64)
    y = maxpool2(y)                                    # (R*n1/2, 64)

    # --- block 3 ---
    y = depthwise_same(y, d3a, d3b, d3c, bd3, n1 // 2)
    y = pointwise(y, w32, b32)                         # (R*n1/2, 96)
    y = maxpool2(y)                                    # (R*n1/4, 96)

    # --- block 4 ---
    y = depthwise_same(y, d4a, d4b, d4c, bd4, n1 // 4)
    y = pointwise(y, w42, b42)                         # (R*n1/4, 128)
    y = maxpool2(y)                                    # (R*n1/8, 128)

    o_ref[...] = y


def init_folded_params(key, in_ch=8, eps=1e-5):
    """Conv + BN params (PyTorch layout) with eval-mode BN folded in.

    Returns (kernel_params, ref_params):
      kernel_params: flat list fed to the Pallas kernel (matmul weights bf16).
      ref_params: per-block (dw(3,C), db(1,C), pw(Cin,Cout), pb(1,Cout)) in f32
                  for the pure-JAX reference.
    """
    chans = [in_ch, 32, 64, 96, 128]
    ki = iter(jax.random.split(key, 64))
    kernel_params, ref_params = [], []

    def bn(c):
        gamma = 0.5 + jax.random.uniform(next(ki), (c,), jnp.float32)
        beta = 0.1 * jax.random.normal(next(ki), (c,), jnp.float32)
        mean = 0.1 * jax.random.normal(next(ki), (c,), jnp.float32)
        var = 0.5 + jax.random.uniform(next(ki), (c,), jnp.float32)
        return gamma, beta, mean, var

    for s in range(4):
        cin, cout = chans[s], chans[s + 1]
        # depthwise conv: torch weight (cin, 1, 1, 3), bias (cin,)
        wd = jax.random.normal(next(ki), (cin, 1, 1, 3), jnp.float32) / math.sqrt(3.0)
        bd = 0.1 * jax.random.normal(next(ki), (cin,), jnp.float32)
        g, be, mu, var = bn(cin)
        sc = g / jnp.sqrt(var + eps)
        dw = jnp.transpose(wd[:, 0, 0, :], (1, 0)) * sc[None, :]      # (3, cin)
        db = ((bd - mu) * sc + be)[None, :]                           # (1, cin)
        # pointwise conv: torch weight (cout, cin, 1, 1), bias (cout,)
        wp = jax.random.normal(next(ki), (cout, cin, 1, 1), jnp.float32) / math.sqrt(cin)
        bp = 0.1 * jax.random.normal(next(ki), (cout,), jnp.float32)
        g, be, mu, var = bn(cout)
        sc = g / jnp.sqrt(var + eps)
        pw = jnp.transpose(wp[:, :, 0, 0], (1, 0)) * sc[None, :]      # (cin, cout)
        pb = ((bp - mu) * sc + be)[None, :]                           # (1, cout)
        ref_params.append((dw, db, pw, pb))

        if s == 0:
            # Block 1's VALID depthwise conv as an im2col matmul: weight
            # (3*cin, cin) with dw[t, c] placed at row t*cin + c, column c.
            wmat = jnp.zeros((3 * cin, cin), jnp.float32)
            for t in range(3):
                wmat = wmat.at[t * cin:(t + 1) * cin, :].set(jnp.diag(dw[t]))
            kernel_params += [wmat.astype(jnp.bfloat16), db,
                              pw.astype(jnp.bfloat16), pb]
        else:
            kernel_params += [dw[0:1], dw[1:2], dw[2:3], db,
                              pw.astype(jnp.bfloat16), pb]
    return kernel_params, ref_params


def encoders_forward(x_nchw, kernel_params, rows_per_step=64):
    """x_nchw: (N, C_in, H, W) float32  ->  (N, 128, H, (W-2)//8)."""
    N, C0, H, W = x_nchw.shape
    n1 = W - 2
    assert n1 % 8 == 0, "demo requires (W-2) divisible by 8 (three 1x2 maxpools)"
    Wout = n1 // 8
    P = N * H

    # NCHW -> rows (P, W, C), then host-side im2col to (P, n1, 3*C):
    # lane blocks [tap0 | tap1 | tap2], matching the (3*C, C) depthwise matrix.
    x_rows = jnp.transpose(x_nchw, (0, 2, 3, 1)).reshape(P, W, C0)
    x_im = jnp.concatenate([x_rows[:, 0:n1, :],
                            x_rows[:, 1:n1 + 1, :],
                            x_rows[:, 2:n1 + 2, :]], axis=-1)

    # ---- rows per grid step (R) -------------------------------------------
    # Keep the output block (R*Wout, 128) sublane-aligned, and keep the
    # per-step VMEM footprint (double-buffered input/output, shared maxpool
    # scratch, live intermediates -- everything lane-padded to 128) under a
    # budget that fits v7x's 64 MiB physical VMEM with headroom.
    align = 8 // math.gcd(Wout, 8)
    lane = 128
    per_r_bytes = 4 * lane * (2 * n1        # double-buffered input block
                              + 2 * Wout    # double-buffered output block
                              + n1          # shared maxpool scratch
                              + 4 * n1)     # live intermediates / spill headroom
    vmem_budget = 44 * 1024 * 1024
    r_cap = max(align, (vmem_budget // per_r_bytes) // align * align)
    R = max(align, (min(rows_per_step, r_cap) // align) * align)
    # Keep grid >= 2 where possible so the "parallel" row axis can be split
    # across v7x's two TensorCores.
    if R >= P and P > align:
        R = max(align, (-(-(P // 2) // align)) * align)
    grid = -(-P // R)
    P_pad = grid * R
    if P_pad != P:                          # pad the tail instead of R=P fallback
        x_im = jnp.pad(x_im, ((0, P_pad - P), (0, 0), (0, 0)))

    vmem_limit = int(min(max(per_r_bytes * R * 1.5 + (4 << 20), 32 << 20),
                         48 << 20))

    param_specs = [pl.BlockSpec(p.shape, lambda i: (0, 0))
                   for p in kernel_params]

    out = pl.pallas_call(
        functools.partial(encoders_kernel, n1=n1),
        out_shape=jax.ShapeDtypeStruct((P_pad * Wout, 128), jnp.float32),
        grid_spec=pltpu.PrefetchScalarGridSpec(
            num_scalar_prefetch=0,
            grid=(grid,),
            in_specs=[pl.BlockSpec((R, n1, 3 * C0), lambda i: (i, 0, 0))]
                     + param_specs,
            out_specs=pl.BlockSpec((R * Wout, 128), lambda i: (i, 0)),
            scratch_shapes=[
                # single shared maxpool scratch (largest user: block 2)
                pltpu.VMEM((R * n1, 128), jnp.float32),
            ],
        ),
        compiler_params=pltpu.CompilerParams(
            dimension_semantics=("parallel",),   # independent rows
            vmem_limit_bytes=vmem_limit),
    )(x_im, *kernel_params)

    out = out[:P * Wout]
    # (P*Wout, 128) -> NCHW (N, 128, H, Wout)
    return jnp.transpose(out.reshape(N, H, Wout, 128), (0, 3, 1, 2))


def encoders_reference(x_nchw, ref_params):
    """Pure-JAX f32 reference of the PyTorch forward (from BN-folded params)."""
    x = jnp.transpose(x_nchw, (0, 2, 3, 1))            # (N, H, W, C)

    def dw_valid(v, dw, db):
        return jnp.maximum(v[:, :, :-2, :] * dw[0] + v[:, :, 1:-1, :] * dw[1]
                           + v[:, :, 2:, :] * dw[2] + db, 0.0)

    def dw_same(v, dw, db):
        vp = jnp.pad(v, ((0, 0), (0, 0), (1, 1), (0, 0)))
        return jnp.maximum(vp[:, :, :-2, :] * dw[0] + vp[:, :, 1:-1, :] * dw[1]
                           + vp[:, :, 2:, :] * dw[2] + db, 0.0)

    def pw(v, w, b):
        return jnp.maximum(v @ w + b, 0.0)

    def pool(v):
        half = v.shape[2] // 2
        return jnp.maximum(v[:, :, 0:2 * half:2, :], v[:, :, 1:2 * half:2, :])

    (d1, b1, w1, c1), (d2, b2, w2, c2), (d3, b3, w3, c3), (d4, b4, w4, c4) = ref_params
    y = pw(dw_valid(x, d1, b1), w1, c1)
    y = pool(pw(dw_same(y, d2, b2), w2, c2))
    y = pool(pw(dw_same(y, d3, b3), w3, c3))
    y = pool(pw(dw_same(y, d4, b4), w4, c4))
    return jnp.transpose(y, (0, 3, 1, 2))


if __name__ == "__main__":
    key = jax.random.PRNGKey(0)
    kx, kp = jax.random.split(key)

    N, C_in, H, W = 2, 8, 8, 66       # (W - 2) = 64 -> pools to 32 -> 16 -> 8
    x = jax.random.normal(kx, (N, C_in, H, W), jnp.float32)
    kernel_params, ref_params = init_folded_params(kp, in_ch=C_in)

    # rows_per_step=8 -> R=8, grid=(2,): exercises multi-step row batching.
    out = encoders_forward(x, kernel_params, rows_per_step=8)
    out = jax.block_until_ready(out)

    assert out.shape == (N, 128, H, (W - 2) // 8), out.shape
    assert bool(jnp.all(jnp.isfinite(out)))

    # f32 reference check (kernel matmuls use bf16 operands -> loose tolerance)
    ref = encoders_reference(x, ref_params)
    max_err = float(jnp.max(jnp.abs(out - ref)))
    scale = float(jnp.max(jnp.abs(ref))) + 1e-6
    assert max_err <= 0.05 * scale + 0.05, (max_err, scale)

    print("KERNEL_OK")
</pallas_src>

<mosaic_0001>
module attributes {stable_mosaic.version = 11 : i64} {
  func.func @encoders_kernel(%arg0: i32, %arg1: memref<8x64x24xf32, #tpu.memory_space<vmem>>, %arg2: memref<24x8xbf16, #tpu.memory_space<vmem>>, %arg3: memref<1x8xf32, #tpu.memory_space<vmem>>, %arg4: memref<8x32xbf16, #tpu.memory_space<vmem>>, %arg5: memref<1x32xf32, #tpu.memory_space<vmem>>, %arg6: memref<1x32xf32, #tpu.memory_space<vmem>>, %arg7: memref<1x32xf32, #tpu.memory_space<vmem>>, %arg8: memref<1x32xf32, #tpu.memory_space<vmem>>, %arg9: memref<1x32xf32, #tpu.memory_space<vmem>>, %arg10: memref<32x64xbf16, #tpu.memory_space<vmem>>, %arg11: memref<1x64xf32, #tpu.memory_space<vmem>>, %arg12: memref<1x64xf32, #tpu.memory_space<vmem>>, %arg13: memref<1x64xf32, #tpu.memory_space<vmem>>, %arg14: memref<1x64xf32, #tpu.memory_space<vmem>>, %arg15: memref<1x64xf32, #tpu.memory_space<vmem>>, %arg16: memref<64x96xbf16, #tpu.memory_space<vmem>>, %arg17: memref<1x96xf32, #tpu.memory_space<vmem>>, %arg18: memref<1x96xf32, #tpu.memory_space<vmem>>, %arg19: memref<1x96xf32, #tpu.memory_space<vmem>>, %arg20: memref<1x96xf32, #tpu.memory_space<vmem>>, %arg21: memref<1x96xf32, #tpu.memory_space<vmem>>, %arg22: memref<96x128xbf16, #tpu.memory_space<vmem>>, %arg23: memref<1x128xf32, #tpu.memory_space<vmem>>, %arg24: memref<64x128xf32, #tpu.memory_space<vmem>>, %arg25: memref<512x128xf32, #tpu.memory_space<vmem>>) attributes {dimension_semantics = [#tpu.dimension_semantics<parallel>], iteration_bounds = array<i64: 2>, scalar_prefetch = 0 : i64, scratch_operands = 1 : i64, tpu.core_type = #tpu.core_type<tc>, window_params = [{transform_indices = @transform_0, window_bounds = array<i64: 8, 64, 24>}, {pipeline_mode = #tpu.pipeline_mode<synchronous>, transform_indices = @transform_1, window_bounds = array<i64: 24, 8>}, {pipeline_mode = #tpu.pipeline_mode<synchronous>, transform_indices = @transform_2, window_bounds = array<i64: 1, 8>}, {pipeline_mode = #tpu.pipeline_mode<synchronous>, transform_indices = @transform_3, window_bounds = array<i64: 8, 32>}, {pipeline_mode = #tpu.pipeline_mode<synchronous>, transform_indices = @transform_4, window_bounds = array<i64: 1, 32>}, {pipeline_mode = #tpu.pipeline_mode<synchronous>, transform_indices = @transform_5, window_bounds = array<i64: 1, 32>}, {pipeline_mode = #tpu.pipeline_mode<synchronous>, transform_indices = @transform_6, window_bounds = array<i64: 1, 32>}, {pipeline_mode = #tpu.pipeline_mode<synchronous>, transform_indices = @transform_7, window_bounds = array<i64: 1, 32>}, {pipeline_mode = #tpu.pipeline_mode<synchronous>, transform_indices = @transform_8, window_bounds = array<i64: 1, 32>}, {pipeline_mode = #tpu.pipeline_mode<synchronous>, transform_indices = @transform_9, window_bounds = array<i64: 32, 64>}, {pipeline_mode = #tpu.pipeline_mode<synchronous>, transform_indices = @transform_10, window_bounds = array<i64: 1, 64>}, {pipeline_mode = #tpu.pipeline_mode<synchronous>, transform_indices = @transform_11, window_bounds = array<i64: 1, 64>}, {pipeline_mode = #tpu.pipeline_mode<synchronous>, transform_indices = @transform_12, window_bounds = array<i64: 1, 64>}, {pipeline_mode = #tpu.pipeline_mode<synchronous>, transform_indices = @transform_13, window_bounds = array<i64: 1, 64>}, {pipeline_mode = #tpu.pipeline_mode<synchronous>, transform_indices = @transform_14, window_bounds = array<i64: 1, 64>}, {pipeline_mode = #tpu.pipeline_mode<synchronous>, transform_indices = @transform_15, window_bounds = array<i64: 64, 96>}, {pipeline_mode = #tpu.pipeline_mode<synchronous>, transform_indices = @transform_16, window_bounds = array<i64: 1, 96>}, {pipeline_mode = #tpu.pipeline_mode<synchronous>, transform_indices = @transform_17, window_bounds = array<i64: 1, 96>}, {pipeline_mode = #tpu.pipeline_mode<synchronous>, transform_indices = @transform_18, window_bounds = array<i64: 1, 96>}, {pipeline_mode = #tpu.pipeline_mode<synchronous>, transform_indices = @transform_19, window_bounds = array<i64: 1, 96>}, {pipeline_mode = #tpu.pipeline_mode<synchronous>, transform_indices = @transform_20, window_bounds = array<i64: 1, 96>}, {pipeline_mode = #tpu.pipeline_mode<synchronous>, transform_indices = @transform_21, window_bounds = array<i64: 96, 128>}, {pipeline_mode = #tpu.pipeline_mode<synchronous>, transform_indices = @transform_22, window_bounds = array<i64: 1, 128>}, {transform_indices = @transform_23, window_bounds = array<i64: 64, 128>}]} {
    %c0 = arith.constant 0 : index
    %c0_0 = arith.constant 0 : index
    %c0_1 = arith.constant 0 : index
    %0 = vector.load %arg1[%c0, %c0_0, %c0_1] : memref<8x64x24xf32, #tpu.memory_space<vmem>>, vector<8x64x24xf32>
    %1 = vector.shape_cast %0 : vector<8x64x24xf32> to vector<512x24xf32>
    %2 = arith.truncf %1 : vector<512x24xf32> to vector<512x24xbf16>
    %c0_2 = arith.constant 0 : index
    %c0_3 = arith.constant 0 : index
    %3 = vector.load %arg2[%c0_2, %c0_3] : memref<24x8xbf16, #tpu.memory_space<vmem>>, vector<24x8xbf16>
    %cst = arith.constant dense<0.000000e+00> : vector<512x8xf32>
    %4 = tpu.matmul %2, %3, %cst {dimension_numbers = #tpu.dot_dimension_numbers<[1], [0], [0], [1], [0, 0, 1, 1], [], []>} : vector<512x24xbf16>, vector<24x8xbf16>, vector<512x8xf32> -> vector<512x8xf32>
    %c0_4 = arith.constant 0 : index
    %c0_5 = arith.constant 0 : index
    %5 = vector.load %arg3[%c0_4, %c0_5] : memref<1x8xf32, #tpu.memory_space<vmem>>, vector<1x8xf32>
    %6 = vector.broadcast %5 : vector<1x8xf32> to vector<512x8xf32>
    %7 = arith.addf %4, %6 : vector<512x8xf32>
    %cst_6 = arith.constant 0.000000e+00 : f32
    %8 = vector.broadcast %cst_6 : f32 to vector<512x8xf32>
    %9 = arith.maximumf %7, %8 : vector<512x8xf32>
    %10 = arith.truncf %9 : vector<512x8xf32> to vector<512x8xbf16>
    %c0_7 = arith.constant 0 : index
    %c0_8 = arith.constant 0 : index
    %11 = vector.load %arg4[%c0_7, %c0_8] : memref<8x32xbf16, #tpu.memory_space<vmem>>, vector<8x32xbf16>
    %cst_9 = arith.constant dense<0.000000e+00> : vector<512x32xf32>
    %12 = tpu.matmul %10, %11, %cst_9 {dimension_numbers = #tpu.dot_dimension_numbers<[1], [0], [0], [1], [0, 0, 1, 1], [], []>} : vector<512x8xbf16>, vector<8x32xbf16>, vector<512x32xf32> -> vector<512x32xf32>
    %c0_10 = arith.constant 0 : index
    %c0_11 = arith.constant 0 : index
    %13 = vector.load %arg5[%c0_10, %c0_11] : memref<1x32xf32, #tpu.memory_space<vmem>>, vector<1x32xf32>
    %14 = vector.broadcast %13 : vector<1x32xf32> to vector<512x32xf32>
    %15 = arith.addf %12, %14 : vector<512x32xf32>
    %cst_12 = arith.constant 0.000000e+00 : f32
    %16 = vector.broadcast %cst_12 : f32 to vector<512x32xf32>
    %17 = arith.maximumf %15, %16 : vector<512x32xf32>
    %c1_i32 = arith.constant 1 : i32
    %18 = tpu.dynamic_rotate %17 by %c1_i32 dim 0 : vector<512x32xf32>, i32 -> vector<512x32xf32>
    %c511_i32 = arith.constant 511 : i32
    %19 = tpu.dynamic_rotate %17 by %c511_i32 dim 0 : vector<512x32xf32>, i32 -> vector<512x32xf32>
    %20 = tpu.iota {dimensions = array<i32: 0>} : vector<512x1xi32>
    %c63_i32 = arith.constant 63 : i32
    %21 = vector.broadcast %c63_i32 : i32 to vector<512x1xi32>
    %22 = arith.andi %20, %21 : vector<512x1xi32>
    %c0_i32 = arith.constant 0 : i32
    %23 = vector.broadcast %c0_i32 : i32 to vector<512x1xi32>
    %24 = arith.cmpi eq, %22, %23 : vector<512x1xi32>
    %cst_13 = arith.constant 0.000000e+00 : f32
    %25 = vector.shape_cast %24 : vector<512x1xi1> to vector<512x1xi1>
    %26 = vector.broadcast %25 : vector<512x1xi1> to vector<512x32xi1>
    %27 = vector.broadcast %cst_13 : f32 to vector<512x32xf32>
    %28 = arith.select %26, %27, %18 : vector<512x32xi1>, vector<512x32xf32>
    %c63_i32_14 = arith.constant 63 : i32
    %29 = vector.broadcast %c63_i32_14 : i32 to vector<512x1xi32>
    %30 = arith.cmpi eq, %22, %29 : vector<512x1xi32>
    %cst_15 = arith.constant 0.000000e+00 : f32
    %31 = vector.shape_cast %30 : vector<512x1xi1> to vector<512x1xi1>
    %32 = vector.broadcast %31 : vector<512x1xi1> to vector<512x32xi1>
    %33 = vector.broadcast %cst_15 : f32 to vector<512x32xf32>
    %34 = arith.select %32, %33, %19 : vector<512x32xi1>, vector<512x32xf32>
    %c0_16 = arith.constant 0 : index
    %c0_17 = arith.constant 0 : index
    %35 = vector.load %arg6[%c0_16, %c0_17] : memref<1x32xf32, #tpu.memory_space<vmem>>, vector<1x32xf32>
    %36 = vector.broadcast %35 : vector<1x32xf32> to vector<512x32xf32>
    %37 = arith.mulf %28, %36 : vector<512x32xf32>
    %c0_18 = arith.constant 0 : index
    %c0_19 = arith.constant 0 : index
    %38 = vector.load %arg7[%c0_18, %c0_19] : memref<1x32xf32, #tpu.memory_space<vmem>>, vector<1x32xf32>
    %39 = vector.broadcast %38 : vector<1x32xf32> to vector<512x32xf32>
    %40 = arith.mulf %17, %39 : vector<512x32xf32>
    %41 = arith.addf %37, %40 : vector<512x32xf32>
    %c0_20 = arith.constant 0 : index
    %c0_21 = arith.constant 0 : index
    %42 = vector.load %arg8[%c0_20, %c0_21] : memref<1x32xf32, #tpu.memory_space<vmem>>, vector<1x32xf32>
    %43 = vector.broadcast %42 : vector<1x32xf32> to vector<512x32xf32>
    %44 = arith.mulf %34, %43 : vector<512x32xf32>
    %45 = arith.addf %41, %44 : vector<512x32xf32>
    %c0_22 = arith.constant 0 : index
    %c0_23 = arith.constant 0 : index
    %46 = vector.load %arg9[%c0_22, %c0_23] : memref<1x32xf32, #tpu.memory_space<vmem>>, vector<1x32xf32>
    %47 = vector.broadcast %46 : vector<1x32xf32> to vector<512x32xf32>
    %48 = arith.addf %45, %47 : vector<512x32xf32>
    %cst_24 = arith.constant 0.000000e+00 : f32
    %49 = vector.broadcast %cst_24 : f32 to vector<512x32xf32>
    %50 = arith.maximumf %48, %49 : vector<512x32xf32>
    %51 = arith.truncf %50 : vector<512x32xf32> to vector<512x32xbf16>
    %c0_25 = arith.constant 0 : index
    %c0_26 = arith.constant 0 : index
    %52 = vector.load %arg10[%c0_25, %c0_26] : memref<32x64xbf16, #tpu.memory_space<vmem>>, vector<32x64xbf16>
    %cst_27 = arith.constant dense<0.000000e+00> : vector<512x64xf32>
    %53 = tpu.matmul %51, %52, %cst_27 {dimension_numbers = #tpu.dot_dimension_numbers<[1], [0], [0], [1], [0, 0, 1, 1], [], []>} : vector<512x32xbf16>, vector<32x64xbf16>, vector<512x64xf32> -> vector<512x64xf32>
    %c0_28 = arith.constant 0 : index
    %c0_29 = arith.constant 0 : index
    %54 = vector.load %arg11[%c0_28, %c0_29] : memref<1x64xf32, #tpu.memory_space<vmem>>, vector<1x64xf32>
    %55 = vector.broadcast %54 : vector<1x64xf32> to vector<512x64xf32>
    %56 = arith.addf %53, %55 : vector<512x64xf32>
    %cst_30 = arith.constant 0.000000e+00 : f32
    %57 = vector.broadcast %cst_30 : f32 to vector<512x64xf32>
    %58 = arith.maximumf %56, %57 : vector<512x64xf32>
    %c0_31 = arith.constant 0 : index
    %c0_32 = arith.constant 0 : index
    %59 = vector.load %arg25[%c0_31, %c0_32] : memref<512x128xf32, #tpu.memory_space<vmem>>, vector<512x64xf32>
    tpu.vector_store %arg25[%c0_31, %c0_32], %58 {strides = array<i32>} : memref<512x128xf32, #tpu.memory_space<vmem>>, vector<512x64xf32>,
    %c0_33 = arith.constant 0 : index
    %c0_34 = arith.constant 0 : index
    %60 = tpu.strided_load %arg25[%c0_33, %c0_34] {strides = array<i32: 2, 1>} : memref<512x128xf32, #tpu.memory_space<vmem>>, vector<256x64xf32>
    %c1 = arith.constant 1 : index
    %c0_35 = arith.constant 0 : index
    %61 = tpu.strided_load %arg25[%c1, %c0_35] {strides = array<i32: 2, 1>} : memref<512x128xf32, #tpu.memory_space<vmem>>, vector<256x64xf32>
    %62 = arith.maximumf %60, %61 : vector<256x64xf32>
    %c1_i32_36 = arith.constant 1 : i32
    %63 = tpu.dynamic_rotate %62 by %c1_i32_36 dim 0 : vector<256x64xf32>, i32 -> vector<256x64xf32>
    %c255_i32 = arith.constant 255 : i32
    %64 = tpu.dynamic_rotate %62 by %c255_i32 dim 0 : vector<256x64xf32>, i32 -> vector<256x64xf32>
    %65 = tpu.iota {dimensions = array<i32: 0>} : vector<256x1xi32>
    %c31_i32 = arith.constant 31 : i32
    %66 = vector.broadcast %c31_i32 : i32 to vector<256x1xi32>
    %67 = arith.andi %65, %66 : vector<256x1xi32>
    %c0_i32_37 = arith.constant 0 : i32
    %68 = vector.broadcast %c0_i32_37 : i32 to vector<256x1xi32>
    %69 = arith.cmpi eq, %67, %68 : vector<256x1xi32>
    %cst_38 = arith.constant 0.000000e+00 : f32
    %70 = vector.shape_cast %69 : vector<256x1xi1> to vector<256x1xi1>
    %71 = vector.broadcast %70 : vector<256x1xi1> to vector<256x64xi1>
    %72 = vector.broadcast %cst_38 : f32 to vector<256x64xf32>
    %73 = arith.select %71, %72, %63 : vector<256x64xi1>, vector<256x64xf32>
    %c31_i32_39 = arith.constant 31 : i32
    %74 = vector.broadcast %c31_i32_39 : i32 to vector<256x1xi32>
    %75 = arith.cmpi eq, %67, %74 : vector<256x1xi32>
    %cst_40 = arith.constant 0.000000e+00 : f32
    %76 = vector.shape_cast %75 : vector<256x1xi1> to vector<256x1xi1>
    %77 = vector.broadcast %76 : vector<256x1xi1> to vector<256x64xi1>
    %78 = vector.broadcast %cst_40 : f32 to vector<256x64xf32>
    %79 = arith.select %77, %78, %64 : vector<256x64xi1>, vector<256x64xf32>
    %c0_41 = arith.constant 0 : index
    %c0_42 = arith.constant 0 : index
    %80 = vector.load %arg12[%c0_41, %c0_42] : memref<1x64xf32, #tpu.memory_space<vmem>>, vector<1x64xf32>
    %81 = vector.broadcast %80 : vector<1x64xf32> to vector<256x64xf32>
    %82 = arith.mulf %73, %81 : vector<256x64xf32>
    %c0_43 = arith.constant 0 : index
    %c0_44 = arith.constant 0 : index
    %83 = vector.load %arg13[%c0_43, %c0_44] : memref<1x64xf32, #tpu.memory_space<vmem>>, vector<1x64xf32>
    %84 = vector.broadcast %83 : vector<1x64xf32> to vector<256x64xf32>
    %85 = arith.mulf %62, %84 : vector<256x64xf32>
    %86 = arith.addf %82, %85 : vector<256x64xf32>
    %c0_45 = arith.constant 0 : index
    %c0_46 = arith.constant 0 : index
    %87 = vector.load %arg14[%c0_45, %c0_46] : memref<1x64xf32, #tpu.memory_space<vmem>>, vector<1x64xf32>
    %88 = vector.broadcast %87 : vector<1x64xf32> to vector<256x64xf32>
    %89 = arith.mulf %79, %88 : vector<256x64xf32>
    %90 = arith.addf %86, %89 : vector<256x64xf32>
    %c0_47 = arith.constant 0 : index
    %c0_48 = arith.constant 0 : index
    %91 = vector.load %arg15[%c0_47, %c0_48] : memref<1x64xf32, #tpu.memory_space<vmem>>, vector<1x64xf32>
    %92 = vector.broadcast %91 : vector<1x64xf32> to vector<256x64xf32>
    %93 = arith.addf %90, %92 : vector<256x64xf32>
    %cst_49 = arith.constant 0.000000e+00 : f32
    %94 = vector.broadcast %cst_49 : f32 to vector<256x64xf32>
    %95 = arith.maximumf %93, %94 : vector<256x64xf32>
    %96 = arith.truncf %95 : vector<256x64xf32> to vector<256x64xbf16>
    %c0_50 = arith.constant 0 : index
    %c0_51 = arith.constant 0 : index
    %97 = vector.load %arg16[%c0_50, %c0_51] : memref<64x96xbf16, #tpu.memory_space<vmem>>, vector<64x96xbf16>
    %cst_52 = arith.constant dense<0.000000e+00> : vector<256x96xf32>
    %98 = tpu.matmul %96, %97, %cst_52 {dimension_numbers = #tpu.dot_dimension_numbers<[1], [0], [0], [1], [0, 0, 1, 1], [], []>} : vector<256x64xbf16>, vector<64x96xbf16>, vector<256x96xf32> -> vector<256x96xf32>
    %c0_53 = arith.constant 0 : index
    %c0_54 = arith.constant 0 : index
    %99 = vector.load %arg17[%c0_53, %c0_54] : memref<1x96xf32, #tpu.memory_space<vmem>>, vector<1x96xf32>
    %100 = vector.broadcast %99 : vector<1x96xf32> to vector<256x96xf32>
    %101 = arith.addf %98, %100 : vector<256x96xf32>
    %cst_55 = arith.constant 0.000000e+00 : f32
    %102 = vector.broadcast %cst_55 : f32 to vector<256x96xf32>
    %103 = arith.maximumf %101, %102 : vector<256x96xf32>
    %c0_56 = arith.constant 0 : index
    %c0_57 = arith.constant 0 : index
    %104 = vector.load %arg25[%c0_56, %c0_57] : memref<512x128xf32, #tpu.memory_space<vmem>>, vector<256x96xf32>
    tpu.vector_store %arg25[%c0_56, %c0_57], %103 {strides = array<i32>} : memref<512x128xf32, #tpu.memory_space<vmem>>, vector<256x96xf32>,
    %c0_58 = arith.constant 0 : index
    %c0_59 = arith.constant 0 : index
    %105 = tpu.strided_load %arg25[%c0_58, %c0_59] {strides = array<i32: 2, 1>} : memref<512x128xf32, #tpu.memory_space<vmem>>, vector<128x96xf32>
    %c1_60 = arith.constant 1 : index
    %c0_61 = arith.constant 0 : index
    %106 = tpu.strided_load %arg25[%c1_60, %c0_61] {strides = array<i32: 2, 1>} : memref<512x128xf32, #tpu.memory_space<vmem>>, vector<128x96xf32>
    %107 = arith.maximumf %105, %106 : vector<128x96xf32>
    %c1_i32_62 = arith.constant 1 : i32
    %108 = tpu.dynamic_rotate %107 by %c1_i32_62 dim 0 : vector<128x96xf32>, i32 -> vector<128x96xf32>
    %c127_i32 = arith.constant 127 : i32
    %109 = tpu.dynamic_rotate %107 by %c127_i32 dim 0 : vector<128x96xf32>, i32 -> vector<128x96xf32>
    %110 = tpu.iota {dimensions = array<i32: 0>} : vector<128x1xi32>
    %c15_i32 = arith.constant 15 : i32
    %111 = vector.broadcast %c15_i32 : i32 to vector<128x1xi32>
    %112 = arith.andi %110, %111 : vector<128x1xi32>
    %c0_i32_63 = arith.constant 0 : i32
    %113 = vector.broadcast %c0_i32_63 : i32 to vector<128x1xi32>
    %114 = arith.cmpi eq, %112, %113 : vector<128x1xi32>
    %cst_64 = arith.constant 0.000000e+00 : f32
    %115 = vector.shape_cast %114 : vector<128x1xi1> to vector<128x1xi1>
    %116 = vector.broadcast %115 : vector<128x1xi1> to vector<128x96xi1>
    %117 = vector.broadcast %cst_64 : f32 to vector<128x96xf32>
    %118 = arith.select %116, %117, %108 : vector<128x96xi1>, vector<128x96xf32>
    %c15_i32_65 = arith.constant 15 : i32
    %119 = vector.broadcast %c15_i32_65 : i32 to vector<128x1xi32>
    %120 = arith.cmpi eq, %112, %119 : vector<128x1xi32>
    %cst_66 = arith.constant 0.000000e+00 : f32
    %121 = vector.shape_cast %120 : vector<128x1xi1> to vector<128x1xi1>
    %122 = vector.broadcast %121 : vector<128x1xi1> to vector<128x96xi1>
    %123 = vector.broadcast %cst_66 : f32 to vector<128x96xf32>
    %124 = arith.select %122, %123, %109 : vector<128x96xi1>, vector<128x96xf32>
    %c0_67 = arith.constant 0 : index
    %c0_68 = arith.constant 0 : index
    %125 = vector.load %arg18[%c0_67, %c0_68] : memref<1x96xf32, #tpu.memory_space<vmem>>, vector<1x96xf32>
    %126 = vector.broadcast %125 : vector<1x96xf32> to vector<128x96xf32>
    %127 = arith.mulf %118, %126 : vector<128x96xf32>
    %c0_69 = arith.constant 0 : index
    %c0_70 = arith.constant 0 : index
    %128 = vector.load %arg19[%c0_69, %c0_70] : memref<1x96xf32, #tpu.memory_space<vmem>>, vector<1x96xf32>
    %129 = vector.broadcast %128 : vector<1x96xf32> to vector<128x96xf32>
    %130 = arith.mulf %107, %129 : vector<128x96xf32>
    %131 = arith.addf %127, %130 : vector<128x96xf32>
    %c0_71 = arith.constant 0 : index
    %c0_72 = arith.constant 0 : index
    %132 = vector.load %arg20[%c0_71, %c0_72] : memref<1x96xf32, #tpu.memory_space<vmem>>, vector<1x96xf32>
    %133 = vector.broadcast %132 : vector<1x96xf32> to vector<128x96xf32>
    %134 = arith.mulf %124, %133 : vector<128x96xf32>
    %135 = arith.addf %131, %134 : vector<128x96xf32>
    %c0_73 = arith.constant 0 : index
    %c0_74 = arith.constant 0 : index
    %136 = vector.load %arg21[%c0_73, %c0_74] : memref<1x96xf32, #tpu.memory_space<vmem>>, vector<1x96xf32>
    %137 = vector.broadcast %136 : vector<1x96xf32> to vector<128x96xf32>
    %138 = arith.addf %135, %137 : vector<128x96xf32>
    %cst_75 = arith.constant 0.000000e+00 : f32
    %139 = vector.broadcast %cst_75 : f32 to vector<128x96xf32>
    %140 = arith.maximumf %138, %139 : vector<128x96xf32>
    %141 = arith.truncf %140 : vector<128x96xf32> to vector<128x96xbf16>
    %c0_76 = arith.constant 0 : index
    %c0_77 = arith.constant 0 : index
    %142 = vector.load %arg22[%c0_76, %c0_77] : memref<96x128xbf16, #tpu.memory_space<vmem>>, vector<96x128xbf16>
    %cst_78 = arith.constant dense<0.000000e+00> : vector<128x128xf32>
    %143 = tpu.matmul %141, %142, %cst_78 {dimension_numbers = #tpu.dot_dimension_numbers<[1], [0], [0], [1], [0, 0, 1, 1], [], []>} : vector<128x96xbf16>, vector<96x128xbf16>, vector<128x128xf32> -> vector<128x128xf32>
    %c0_79 = arith.constant 0 : index
    %c0_80 = arith.constant 0 : index
    %144 = vector.load %arg23[%c0_79, %c0_80] : memref<1x128xf32, #tpu.memory_space<vmem>>, vector<1x128xf32>
    %145 = vector.broadcast %144 : vector<1x128xf32> to vector<128x128xf32>
    %146 = arith.addf %143, %145 : vector<128x128xf32>
    %cst_81 = arith.constant 0.000000e+00 : f32
    %147 = vector.broadcast %cst_81 : f32 to vector<128x128xf32>
    %148 = arith.maximumf %146, %147 : vector<128x128xf32>
    %c0_82 = arith.constant 0 : index
    %c0_83 = arith.constant 0 : index
    %149 = vector.load %arg25[%c0_82, %c0_83] : memref<512x128xf32, #tpu.memory_space<vmem>>, vector<128x128xf32>
    tpu.vector_store %arg25[%c0_82, %c0_83], %148 {strides = array<i32>} : memref<512x128xf32, #tpu.memory_space<vmem>>, vector<128x128xf32>,
    %c0_84 = arith.constant 0 : index
    %c0_85 = arith.constant 0 : index
    %150 = tpu.strided_load %arg25[%c0_84, %c0_85] {strides = array<i32: 2, 1>} : memref<512x128xf32, #tpu.memory_space<vmem>>, vector<64x128xf32>
    %c1_86 = arith.constant 1 : index
    %c0_87 = arith.constant 0 : index
    %151 = tpu.strided_load %arg25[%c1_86, %c0_87] {strides = array<i32: 2, 1>} : memref<512x128xf32, #tpu.memory_space<vmem>>, vector<64x128xf32>
    %152 = arith.maximumf %150, %151 : vector<64x128xf32>
    %c0_88 = arith.constant 0 : index
    %c0_89 = arith.constant 0 : index
    %153 = vector.load %arg24[%c0_88, %c0_89] : memref<64x128xf32, #tpu.memory_space<vmem>>, vector<64x128xf32>
    tpu.vector_store %arg24[%c0_88, %c0_89], %152 {strides = array<i32>} : memref<64x128xf32, #tpu.memory_space<vmem>>, vector<64x128xf32>,
    return
  }
  func.func @transform_0(%arg0: i32) -> (i32, i32, i32) {
    %c0_i32 = arith.constant 0 : i32
    %c0_i32_0 = arith.constant 0 : i32
    %c0_i32_1 = arith.constant 0 : i32
    return %arg0, %c0_i32, %c0_i32_0 : i32, i32, i32
  }
  func.func @transform_1(%arg0: i32) -> (i32, i32) {
    %c0_i32 = arith.constant 0 : i32
    %c0_i32_0 = arith.constant 0 : i32
    %c0_i32_1 = arith.constant 0 : i32
    return %c0_i32, %c0_i32_0 : i32, i32
  }
  func.func @transform_2(%arg0: i32) -> (i32, i32) {
    %c0_i32 = arith.constant 0 : i32
    %c0_i32_0 = arith.constant 0 : i32
    %c0_i32_1 = arith.constant 0 : i32
    return %c0_i32, %c0_i32_0 : i32, i32
  }
  func.func @transform_3(%arg0: i32) -> (i32, i32) {
    %c0_i32 = arith.constant 0 : i32
    %c0_i32_0 = arith.constant 0 : i32
    %c0_i32_1 = arith.constant 0 : i32
    return %c0_i32, %c0_i32_0 : i32, i32
  }
  func.func @transform_4(%arg0: i32) -> (i32, i32) {
    %c0_i32 = arith.constant 0 : i32
    %c0_i32_0 = arith.constant 0 : i32
    %c0_i32_1 = arith.constant 0 : i32
    return %c0_i32, %c0_i32_0 : i32, i32
  }
  func.func @transform_5(%arg0: i32) -> (i32, i32) {
    %c0_i32 = arith.constant 0 : i32
    %c0_i32_0 = arith.constant 0 : i32
    %c0_i32_1 = arith.constant 0 : i32
    return %c0_i32, %c0_i32_0 : i32, i32
  }
  func.func @transform_6(%arg0: i32) -> (i32, i32) {
    %c0_i32 = arith.constant 0 : i32
    %c0_i32_0 = arith.constant 0 : i32
    %c0_i32_1 = arith.constant 0 : i32
    return %c0_i32, %c0_i32_0 : i32, i32
  }
  func.func @transform_7(%arg0: i32) -> (i32, i32) {
    %c0_i32 = arith.constant 0 : i32
    %c0_i32_0 = arith.constant 0 : i32
    %c0_i32_1 = arith.constant 0 : i32
    return %c0_i32, %c0_i32_0 : i32, i32
  }
  func.func @transform_8(%arg0: i32) -> (i32, i32) {
    %c0_i32 = arith.constant 0 : i32
    %c0_i32_0 = arith.constant 0 : i32
    %c0_i32_1 = arith.constant 0 : i32
    return %c0_i32, %c0_i32_0 : i32, i32
  }
  func.func @transform_9(%arg0: i32) -> (i32, i32) {
    %c0_i32 = arith.constant 0 : i32
    %c0_i32_0 = arith.constant 0 : i32
    %c0_i32_1 = arith.constant 0 : i32
    return %c0_i32, %c0_i32_0 : i32, i32
  }
  func.func @transform_10(%arg0: i32) -> (i32, i32) {
    %c0_i32 = arith.constant 0 : i32
    %c0_i32_0 = arith.constant 0 : i32
    %c0_i32_1 = arith.constant 0 : i32
    return %c0_i32, %c0_i32_0 : i32, i32
  }
  func.func @transform_11(%arg0: i32) -> (i32, i32) {
    %c0_i32 = arith.constant 0 : i32
    %c0_i32_0 = arith.constant 0 : i32
    %c0_i32_1 = arith.constant 0 : i32
    return %c0_i32, %c0_i32_0 : i32, i32
  }
  func.func @transform_12(%arg0: i32) -> (i32, i32) {
    %c0_i32 = arith.constant 0 : i32
    %c0_i32_0 = arith.constant 0 : i32
    %c0_i32_1 = arith.constant 0 : i32
    return %c0_i32, %c0_i32_0 : i32, i32
  }
  func.func @transform_13(%arg0: i32) -> (i32, i32) {
    %c0_i32 = arith.constant 0 : i32
    %c0_i32_0 = arith.constant 0 : i32
    %c0_i32_1 = arith.constant 0 : i32
    return %c0_i32, %c0_i32_0 : i32, i32
  }
  func.func @transform_14(%arg0: i32) -> (i32, i32) {
    %c0_i32 = arith.constant 0 : i32
    %c0_i32_0 = arith.constant 0 : i32
    %c0_i32_1 = arith.constant 0 : i32
    return %c0_i32, %c0_i32_0 : i32, i32
  }
  func.func @transform_15(%arg0: i32) -> (i32, i32) {
    %c0_i32 = arith.constant 0 : i32
    %c0_i32_0 = arith.constant 0 : i32
    %c0_i32_1 = arith.constant 0 : i32
    return %c0_i32, %c0_i32_0 : i32, i32
  }
  func.func @transform_16(%arg0: i32) -> (i32, i32) {
    %c0_i32 = arith.constant 0 : i32
    %c0_i32_0 = arith.constant 0 : i32
    %c0_i32_1 = arith.constant 0 : i32
    return %c0_i32, %c0_i32_0 : i32, i32
  }
  func.func @transform_17(%arg0: i32) -> (i32, i32) {
    %c0_i32 = arith.constant 0 : i32
    %c0_i32_0 = arith.constant 0 : i32
    %c0_i32_1 = arith.constant 0 : i32
    return %c0_i32, %c0_i32_0 : i32, i32
  }
  func.func @transform_18(%arg0: i32) -> (i32, i32) {
    %c0_i32 = arith.constant 0 : i32
    %c0_i32_0 = arith.constant 0 : i32
    %c0_i32_1 = arith.constant 0 : i32
    return %c0_i32, %c0_i32_0 : i32, i32
  }
  func.func @transform_19(%arg0: i32) -> (i32, i32) {
    %c0_i32 = arith.constant 0 : i32
    %c0_i32_0 = arith.constant 0 : i32
    %c0_i32_1 = arith.constant 0 : i32
    return %c0_i32, %c0_i32_0 : i32, i32
  }
  func.func @transform_20(%arg0: i32) -> (i32, i32) {
    %c0_i32 = arith.constant 0 : i32
    %c0_i32_0 = arith.constant 0 : i32
    %c0_i32_1 = arith.constant 0 : i32
    return %c0_i32, %c0_i32_0 : i32, i32
  }
  func.func @transform_21(%arg0: i32) -> (i32, i32) {
    %c0_i32 = arith.constant 0 : i32
    %c0_i32_0 = arith.constant 0 : i32
    %c0_i32_1 = arith.constant 0 : i32
    return %c0_i32, %c0_i32_0 : i32, i32
  }
  func.func @transform_22(%arg0: i32) -> (i32, i32) {
    %c0_i32 = arith.constant 0 : i32
    %c0_i32_0 = arith.constant 0 : i32
    %c0_i32_1 = arith.constant 0 : i32
    return %c0_i32, %c0_i32_0 : i32, i32
  }
  func.func @transform_23(%arg0: i32) -> (i32, i32) {
    %c0_i32 = arith.constant 0 : i32
    %c0_i32_0 = arith.constant 0 : i32
    return %arg0, %c0_i32 : i32, i32
  }
}

</mosaic_0001>

<llo_original>
// kernel: tpu_custom_call.1
$region0: #{tpu_custom_call.1}
  #allocation0 [shape = 'u32[]', space=smem, size = 0x4, offset = 0x4, fixed_abs, tag = 'smem constant byte address 0x4 - core index']
  #allocation1 [shape = 'u32[144,128]{1,0:T(1,128)}', space=vmem, size = 0x12000, scoped, tag = 'internal scratch']
  #allocation2 [shape = 'f32[512,128]{1,0:T(8,128)}', space=vmem, size = 0x40000, scoped, tag = 'scratch operand']
  %s0 = inlined_call_operand.vmem [shape: f32[16,64,24], index: 0, kind: input, shape index: {}]
  %s1 = inlined_call_operand.vmem [shape: bf16[24,8], index: 1, kind: input, shape index: {}]
  %s2 = inlined_call_operand.vmem [shape: f32[1,8], index: 2, kind: input, shape index: {}]
  %s3 = inlined_call_operand.vmem [shape: bf16[8,32], index: 3, kind: input, shape index: {}]
  %s4 = inlined_call_operand.vmem [shape: f32[1,32], index: 4, kind: input, shape index: {}]
  %s5 = inlined_call_operand.vmem [shape: f32[1,32], index: 5, kind: input, shape index: {}]
  %s6 = inlined_call_operand.vmem [shape: f32[1,32], index: 6, kind: input, shape index: {}]
  %s7 = inlined_call_operand.vmem [shape: f32[1,32], index: 7, kind: input, shape index: {}]
  %s8 = inlined_call_operand.vmem [shape: f32[1,32], index: 8, kind: input, shape index: {}]
  %s9 = inlined_call_operand.vmem [shape: bf16[32,64], index: 9, kind: input, shape index: {}]
  %s10 = inlined_call_operand.vmem [shape: f32[1,64], index: 10, kind: input, shape index: {}]
  %s11 = inlined_call_operand.vmem [shape: f32[1,64], index: 11, kind: input, shape index: {}]
  %s12 = inlined_call_operand.vmem [shape: f32[1,64], index: 12, kind: input, shape index: {}]
  %s13 = inlined_call_operand.vmem [shape: f32[1,64], index: 13, kind: input, shape index: {}]
  %s14 = inlined_call_operand.vmem [shape: f32[1,64], index: 14, kind: input, shape index: {}]
  %s15 = inlined_call_operand.vmem [shape: bf16[64,96], index: 15, kind: input, shape index: {}]
  %s16 = inlined_call_operand.vmem [shape: f32[1,96], index: 16, kind: input, shape index: {}]
  %s17 = inlined_call_operand.vmem [shape: f32[1,96], index: 17, kind: input, shape index: {}]
  %s18 = inlined_call_operand.vmem [shape: f32[1,96], index: 18, kind: input, shape index: {}]
  %s19 = inlined_call_operand.vmem [shape: f32[1,96], index: 19, kind: input, shape index: {}]
  %s20 = inlined_call_operand.vmem [shape: f32[1,96], index: 20, kind: input, shape index: {}]
  %s21 = inlined_call_operand.vmem [shape: bf16[96,128], index: 21, kind: input, shape index: {}]
  %s22 = inlined_call_operand.vmem [shape: f32[1,128], index: 22, kind: input, shape index: {}]
  %s23 = inlined_call_operand.hbm [shape: f32[128,128], index: 23, kind: output, shape index: {}]
  %s24 = sld [smem:[#allocation0]]
  $region125: #{tpu_custom_call.1} parent=0
    _
  %s26 = ssub.s32 1, %s24
  %s27 = scalar_select 0, %s26, %s24
  $region1: #{tpu_custom_call.1} parent=0
    #allocation3 [shape = 'u8[65536]{0}', space=vmem, size = 0x10000, scoped, tag = 'output window, operand 0']
    #allocation4 [shape = 's32[2]{0}', space=sflag, size = 0x8, scoped, tag = 'scoped memory for tpu_custom_call.1']
    %28 = vsyncpa [#allocation4], 0
    %s29 = scalar_lea.sflag [#allocation4], 1
    %30 = vsyncpa %s29, 0
    loop: start=0, step=1, limit=4
    $region2: #{tpu_custom_call.1} parent=1 // loop_pre_header
      _
    $region3: #{tpu_custom_call.1} parent=1 // loop_header
      %s32 = sphi 0, %s36
      %p33 = scmp.ge.s32.totalorder %s32, 4
      %s42 = sphi 0, %s44
      %s45 = sphi 0, %s42
      %s46 = sphi 0, %s45
      %s62 = sphi 0, %s46
      %s66 = sphi 0, %s66
      %s68 = sphi 0, %s66
      %s69 = sphi 0, %s68
      %s83 = sphi 0, %s69
      %s87 = sphi 0, %s87
      %s89 = sphi 0, %s87
      %s90 = sphi 0, %s89
      %s104 = sphi 0, %s90
      %s108 = sphi 0, %s108
      %s110 = sphi 0, %s108
      %s111 = sphi 0, %s110
      %s125 = sphi 0, %s111
      %s129 = sphi 0, %s129
      %s131 = sphi 0, %s129
      %s132 = sphi 0, %s131
      %s146 = sphi 0, %s132
      %s150 = sphi 0, %s150
      %s152 = sphi 0, %s150
      %s153 = sphi 0, %s152
      %s167 = sphi 0, %s153
      %s171 = sphi 0, %s171
      %s173 = sphi 0, %s171
      %s174 = sphi 0, %s173
      %s188 = sphi 0, %s174
      %s192 = sphi 0, %s192
      %s194 = sphi 0, %s192
      %s195 = sphi 0, %s194
      %s209 = sphi 0, %s195
      %s213 = sphi 0, %s213
      %s215 = sphi 0, %s213
      %s216 = sphi 0, %s215
      %s230 = sphi 0, %s216
      %s234 = sphi 0, %s234
      %s236 = sphi 0, %s234
      %s237 = sphi 0, %s236
      %s251 = sphi 0, %s237
      %s255 = sphi 0, %s255
      %s257 = sphi 0, %s255
      %s258 = sphi 0, %s257
      %s272 = sphi 0, %s258
      %s276 = sphi 0, %s276
      %s278 = sphi 0, %s276
      %s279 = sphi 0, %s278
      %s293 = sphi 0, %s279
      %s297 = sphi 0, %s297
      %s299 = sphi 0, %s297
      %s300 = sphi 0, %s299
      %s314 = sphi 0, %s300
      %s318 = sphi 0, %s318
      %s320 = sphi 0, %s318
      %s321 = sphi 0, %s320
      %s335 = sphi 0, %s321
      %s339 = sphi 0, %s339
      %s341 = sphi 0, %s339
      %s342 = sphi 0, %s341
      %s356 = sphi 0, %s342
      %s360 = sphi 0, %s360
      %s362 = sphi 0, %s360
      %s363 = sphi 0, %s362
      %s377 = sphi 0, %s363
      %s381 = sphi 0, %s381
      %s383 = sphi 0, %s381
      %s384 = sphi 0, %s383
      %s398 = sphi 0, %s384
      %s402 = sphi 0, %s402
      %s404 = sphi 0, %s402
      %s405 = sphi 0, %s404
      %s419 = sphi 0, %s405
      %s423 = sphi 0, %s423
      %s425 = sphi 0, %s423
      %s426 = sphi 0, %s425
      %s440 = sphi 0, %s426
      %s444 = sphi 0, %s444
      %s446 = sphi 0, %s444
      %s447 = sphi 0, %s446
      %s461 = sphi 0, %s447
      %s465 = sphi 0, %s465
      %s467 = sphi 0, %s465
      %s468 = sphi 0, %s467
      %s482 = sphi 0, %s468
      %s486 = sphi 0, %s486
      %s488 = sphi 0, %s486
      %s489 = sphi 0, %s488
      %s503 = sphi 0, %s489
      %s507 = sphi 0, %s507
      %s509 = sphi 0, %s507
      %s510 = sphi 0, %s509
      %s524 = sphi 0, %s510
      %s530 = sphi 0, %s532
      %s533 = sphi 0, %s530
      %s534 = sphi 0, %s533
      %s550 = sphi 0, %s534
    $region4: #{tpu_custom_call.1} parent=1 // loop_header_branch
      %35 = sbr.rel (%p33) target = $region8
    $region5: #{tpu_custom_call.1} parent=1 // loop_body
      %s37 = ssub.s32 %s32, 1
      %s38 = ssub.s32 %s32, 2
      %s39 = sadd.s32 %s32, 1
      %s40 = ssub.s32 %s32, %s39
      %p41 = scmp.eq.s32.totalorder %s40, 0
      %s43 = sadd.s32 %s42, 1
      %s44 = scalar_select %p41, %s42, %s43
      %p47 = pneg %p41
      %p48 = scmp.eq.s32.totalorder %s32, 1
      %p49 = por %p47, %p48
      %p50 = scmp.ne.s32.totalorder %s42, %s45
      %p51 = scmp.eq.s32.totalorder %s32, 0
      %p52 = por %p50, %p51
      %p53 = scmp.ne.s32.totalorder %s42, %s45
      %p54 = scmp.eq.s32.totalorder %s37, 1
      %p55 = por %p53, %p54
      %p56 = scmp.ne.s32.totalorder %s45, %s46
      %p57 = scmp.eq.s32.totalorder %s37, 0
      %p58 = por %p56, %p57
      %p59 = scmp.ne.s32.totalorder %s45, %s46
      %p60 = scmp.eq.s32.totalorder %s38, 1
      %p61 = por %p59, %p60
      %p63 = scmp.ne.s32.totalorder %s46, %s62
      %p64 = scmp.eq.s32.totalorder %s38, 0
      %p65 = por %p63, %p64
      %s67 = sadd.s32 %s66, 1
      %p70 = scmp.eq.s32.totalorder %s32, 1
      %p71 = scmp.ne.s32.totalorder %s66, %s68
      %p72 = scmp.eq.s32.totalorder %s32, 0
      %p73 = por %p71, %p72
      %p74 = scmp.ne.s32.totalorder %s66, %s68
      %p75 = scmp.eq.s32.totalorder %s37, 1
      %p76 = por %p74, %p75
      %p77 = scmp.ne.s32.totalorder %s68, %s69
      %p78 = scmp.eq.s32.totalorder %s37, 0
      %p79 = por %p77, %p78
      %p80 = scmp.ne.s32.totalorder %s68, %s69
      %p81 = scmp.eq.s32.totalorder %s38, 1
      %p82 = por %p80, %p81
      %p84 = scmp.ne.s32.totalorder %s69, %s83
      %p85 = scmp.eq.s32.totalorder %s38, 0
      %p86 = por %p84, %p85
      %s88 = sadd.s32 %s87, 1
      %p91 = scmp.eq.s32.totalorder %s32, 1
      %p92 = scmp.ne.s32.totalorder %s87, %s89
      %p93 = scmp.eq.s32.totalorder %s32, 0
      %p94 = por %p92, %p93
      %p95 = scmp.ne.s32.totalorder %s87, %s89
      %p96 = scmp.eq.s32.totalorder %s37, 1
      %p97 = por %p95, %p96
      %p98 = scmp.ne.s32.totalorder %s89, %s90
      %p99 = scmp.eq.s32.totalorder %s37, 0
      %p100 = por %p98, %p99
      %p101 = scmp.ne.s32.totalorder %s89, %s90
      %p102 = scmp.eq.s32.totalorder %s38, 1
      %p103 = por %p101, %p102
      %p105 = scmp.ne.s32.totalorder %s90, %s104
      %p106 = scmp.eq.s32.totalorder %s38, 0
      %p107 = por %p105, %p106
      %s109 = sadd.s32 %s108, 1
      %p112 = scmp.eq.s32.totalorder %s32, 1
      %p113 = scmp.ne.s32.totalorder %s108, %s110
      %p114 = scmp.eq.s32.totalorder %s32, 0
      %p115 = por %p113, %p114
      %p116 = scmp.ne.s32.totalorder %s108, %s110
      %p117 = scmp.eq.s32.totalorder %s37, 1
      %p118 = por %p116, %p117
      %p119 = scmp.ne.s32.totalorder %s110, %s111
      %p120 = scmp.eq.s32.totalorder %s37, 0
      %p121 = por %p119, %p120
      %p122 = scmp.ne.s32.totalorder %s110, %s111
      %p123 = scmp.eq.s32.totalorder %s38, 1
      %p124 = por %p122, %p123
      %p126 = scmp.ne.s32.totalorder %s111, %s125
      %p127 = scmp.eq.s32.totalorder %s38, 0
      %p128 = por %p126, %p127
      %s130 = sadd.s32 %s129, 1
      %p133 = scmp.eq.s32.totalorder %s32, 1
      %p134 = scmp.ne.s32.totalorder %s129, %s131
      %p135 = scmp.eq.s32.totalorder %s32, 0
      %p136 = por %p134, %p135
      %p137 = scmp.ne.s32.totalorder %s129, %s131
      %p138 = scmp.eq.s32.totalorder %s37, 1
      %p139 = por %p137, %p138
      %p140 = scmp.ne.s32.totalorder %s131, %s132
      %p141 = scmp.eq.s32.totalorder %s37, 0
      %p142 = por %p140, %p141
      %p143 = scmp.ne.s32.totalorder %s131, %s132
      %p144 = scmp.eq.s32.totalorder %s38, 1
      %p145 = por %p143, %p144
      %p147 = scmp.ne.s32.totalorder %s132, %s146
      %p148 = scmp.eq.s32.totalorder %s38, 0
      %p149 = por %p147, %p148
      %s151 = sadd.s32 %s150, 1
      %p154 = scmp.eq.s32.totalorder %s32, 1
      %p155 = scmp.ne.s32.totalorder %s150, %s152
      %p156 = scmp.eq.s32.totalorder %s32, 0
      %p157 = por %p155, %p156
      %p158 = scmp.ne.s32.totalorder %s150, %s152
      %p159 = scmp.eq.s32.totalorder %s37, 1
      %p160 = por %p158, %p159
      %p161 = scmp.ne.s32.totalorder %s152, %s153
      %p162 = scmp.eq.s32.totalorder %s37, 0
      %p163 = por %p161, %p162
      %p164 = scmp.ne.s32.totalorder %s152, %s153
      %p165 = scmp.eq.s32.totalorder %s38, 1
      %p166 = por %p164, %p165
      %p168 = scmp.ne.s32.totalorder %s153, %s167
      %p169 = scmp.eq.s32.totalorder %s38, 0
      %p170 = por %p168, %p169
      %s172 = sadd.s32 %s171, 1
      %p175 = scmp.eq.s32.totalorder %s32, 1
      %p176 = scmp.ne.s32.totalorder %s171, %s173
      %p177 = scmp.eq.s32.totalorder %s32, 0
      %p178 = por %p176, %p177
      %p179 = scmp.ne.s32.totalorder %s171, %s173
      %p180 = scmp.eq.s32.totalorder %s37, 1
      %p181 = por %p179, %p180
      %p182 = scmp.ne.s32.totalorder %s173, %s174
      %p183 = scmp.eq.s32.totalorder %s37, 0
      %p184 = por %p182, %p183
      %p185 = scmp.ne.s32.totalorder %s173, %s174
      %p186 = scmp.eq.s32.totalorder %s38, 1
      %p187 = por %p185, %p186
      %p189 = scmp.ne.s32.totalorder %s174, %s188
      %p190 = scmp.eq.s32.totalorder %s38, 0
      %p191 = por %p189, %p190
      %s193 = sadd.s32 %s192, 1
      %p196 = scmp.eq.s32.totalorder %s32, 1
      %p197 = scmp.ne.s32.totalorder %s192, %s194
      %p198 = scmp.eq.s32.totalorder %s32, 0
      %p199 = por %p197, %p198
      %p200 = scmp.ne.s32.totalorder %s192, %s194
      %p201 = scmp.eq.s32.totalorder %s37, 1
      %p202 = por %p200, %p201
      %p203 = scmp.ne.s32.totalorder %s194, %s195
      %p204 = scmp.eq.s32.totalorder %s37, 0
      %p205 = por %p203, %p204
      %p206 = scmp.ne.s32.totalorder %s194, %s195
      %p207 = scmp.eq.s32.totalorder %s38, 1
      %p208 = por %p206, %p207
      %p210 = scmp.ne.s32.totalorder %s195, %s209
      %p211 = scmp.eq.s32.totalorder %s38, 0
      %p212 = por %p210, %p211
      %s214 = sadd.s32 %s213, 1
      %p217 = scmp.eq.s32.totalorder %s32, 1
      %p218 = scmp.ne.s32.totalorder %s213, %s215
      %p219 = scmp.eq.s32.totalorder %s32, 0
      %p220 = por %p218, %p219
      %p221 = scmp.ne.s32.totalorder %s213, %s215
      %p222 = scmp.eq.s32.totalorder %s37, 1
      %p223 = por %p221, %p222
      %p224 = scmp.ne.s32.totalorder %s215, %s216
      %p225 = scmp.eq.s32.totalorder %s37, 0
      %p226 = por %p224, %p225
      %p227 = scmp.ne.s32.totalorder %s215, %s216
      %p228 = scmp.eq.s32.totalorder %s38, 1
      %p229 = por %p227, %p228
      %p231 = scmp.ne.s32.totalorder %s216, %s230
      %p232 = scmp.eq.s32.totalorder %s38, 0
      %p233 = por %p231, %p232
      %s235 = sadd.s32 %s234, 1
      %p238 = scmp.eq.s32.totalorder %s32, 1
      %p239 = scmp.ne.s32.totalorder %s234, %s236
      %p240 = scmp.eq.s32.totalorder %s32, 0
      %p241 = por %p239, %p240
      %p242 = scmp.ne.s32.totalorder %s234, %s236
      %p243 = scmp.eq.s32.totalorder %s37, 1
      %p244 = por %p242, %p243
      %p245 = scmp.ne.s32.totalorder %s236, %s237
      %p246 = scmp.eq.s32.totalorder %s37, 0
      %p247 = por %p245, %p246
      %p248 = scmp.ne.s32.totalorder %s236, %s237
      %p249 = scmp.eq.s32.totalorder %s38, 1
      %p250 = por %p248, %p249
      %p252 = scmp.ne.s32.totalorder %s237, %s251
      %p253 = scmp.eq.s32.totalorder %s38, 0
      %p254 = por %p252, %p253
      %s256 = sadd.s32 %s255, 1
      %p259 = scmp.eq.s32.totalorder %s32, 1
      %p260 = scmp.ne.s32.totalorder %s255, %s257
      %p261 = scmp.eq.s32.totalorder %s32, 0
      %p262 = por %p260, %p261
      %p263 = scmp.ne.s32.totalorder %s255, %s257
      %p264 = scmp.eq.s32.totalorder %s37, 1
      %p265 = por %p263, %p264
      %p266 = scmp.ne.s32.totalorder %s257, %s258
      %p267 = scmp.eq.s32.totalorder %s37, 0
      %p268 = por %p266, %p267
      %p269 = scmp.ne.s32.totalorder %s257, %s258
      %p270 = scmp.eq.s32.totalorder %s38, 1
      %p271 = por %p269, %p270
      %p273 = scmp.ne.s32.totalorder %s258, %s272
      %p274 = scmp.eq.s32.totalorder %s38, 0
      %p275 = por %p273, %p274
      %s277 = sadd.s32 %s276, 1
      %p280 = scmp.eq.s32.totalorder %s32, 1
      %p281 = scmp.ne.s32.totalorder %s276, %s278
      %p282 = scmp.eq.s32.totalorder %s32, 0
      %p283 = por %p281, %p282
      %p284 = scmp.ne.s32.totalorder %s276, %s278
      %p285 = scmp.eq.s32.totalorder %s37, 1
      %p286 = por %p284, %p285
      %p287 = scmp.ne.s32.totalorder %s278, %s279
      %p288 = scmp.eq.s32.totalorder %s37, 0
      %p289 = por %p287, %p288
      %p290 = scmp.ne.s32.totalorder %s278, %s279
      %p291 = scmp.eq.s32.totalorder %s38, 1
      %p292 = por %p290, %p291
      %p294 = scmp.ne.s32.totalorder %s279, %s293
      %p295 = scmp.eq.s32.totalorder %s38, 0
      %p296 = por %p294, %p295
      %s298 = sadd.s32 %s297, 1
      %p301 = scmp.eq.s32.totalorder %s32, 1
      %p302 = scmp.ne.s32.totalorder %s297, %s299
      %p303 = scmp.eq.s32.totalorder %s32, 0
      %p304 = por %p302, %p303
      %p305 = scmp.ne.s32.totalorder %s297, %s299
      %p306 = scmp.eq.s32.totalorder %s37, 1
      %p307 = por %p305, %p306
      %p308 = scmp.ne.s32.totalorder %s299, %s300
      %p309 = scmp.eq.s32.totalorder %s37, 0
      %p310 = por %p308, %p309
      %p311 = scmp.ne.s32.totalorder %s299, %s300
      %p312 = scmp.eq.s32.totalorder %s38, 1
      %p313 = por %p311, %p312
      %p315 = scmp.ne.s32.totalorder %s300, %s314
      %p316 = scmp.eq.s32.totalorder %s38, 0
      %p317 = por %p315, %p316
      %s319 = sadd.s32 %s318, 1
      %p322 = scmp.eq.s32.totalorder %s32, 1
      %p323 = scmp.ne.s32.totalorder %s318, %s320
      %p324 = scmp.eq.s32.totalorder %s32, 0
      %p325 = por %p323, %p324
      %p326 = scmp.ne.s32.totalorder %s318, %s320
      %p327 = scmp.eq.s32.totalorder %s37, 1
      %p328 = por %p326, %p327
      %p329 = scmp.ne.s32.totalorder %s320, %s321
      %p330 = scmp.eq.s32.totalorder %s37, 0
      %p331 = por %p329, %p330
      %p332 = scmp.ne.s32.totalorder %s320, %s321
      %p333 = scmp.eq.s32.totalorder %s38, 1
      %p334 = por %p332, %p333
      %p336 = scmp.ne.s32.totalorder %s321, %s335
      %p337 = scmp.eq.s32.totalorder %s38, 0
      %p338 = por %p336, %p337
      %s340 = sadd.s32 %s339, 1
      %p343 = scmp.eq.s32.totalorder %s32, 1
      %p344 = scmp.ne.s32.totalorder %s339, %s341
      %p345 = scmp.eq.s32.totalorder %s32, 0
      %p346 = por %p344, %p345
      %p347 = scmp.ne.s32.totalorder %s339, %s341
      %p348 = scmp.eq.s32.totalorder %s37, 1
      %p349 = por %p347, %p348
      %p350 = scmp.ne.s32.totalorder %s341, %s342
      %p351 = scmp.eq.s32.totalorder %s37, 0
      %p352 = por %p350, %p351
      %p353 = scmp.ne.s32.totalorder %s341, %s342
      %p354 = scmp.eq.s32.totalorder %s38, 1
      %p355 = por %p353, %p354
      %p357 = scmp.ne.s32.totalorder %s342, %s356
      %p358 = scmp.eq.s32.totalorder %s38, 0
      %p359 = por %p357, %p358
      %s361 = sadd.s32 %s360, 1
      %p364 = scmp.eq.s32.totalorder %s32, 1
      %p365 = scmp.ne.s32.totalorder %s360, %s362
      %p366 = scmp.eq.s32.totalorder %s32, 0
      %p367 = por %p365, %p366
      %p368 = scmp.ne.s32.totalorder %s360, %s362
      %p369 = scmp.eq.s32.totalorder %s37, 1
      %p370 = por %p368, %p369
      %p371 = scmp.ne.s32.totalorder %s362, %s363
      %p372 = scmp.eq.s32.totalorder %s37, 0
      %p373 = por %p371, %p372
      %p374 = scmp.ne.s32.totalorder %s362, %s363
      %p375 = scmp.eq.s32.totalorder %s38, 1
      %p376 = por %p374, %p375
      %p378 = scmp.ne.s32.totalorder %s363, %s377
      %p379 = scmp.eq.s32.totalorder %s38, 0
      %p380 = por %p378, %p379
      %s382 = sadd.s32 %s381, 1
      %p385 = scmp.eq.s32.totalorder %s32, 1
      %p386 = scmp.ne.s32.totalorder %s381, %s383
      %p387 = scmp.eq.s32.totalorder %s32, 0
      %p388 = por %p386, %p387
      %p389 = scmp.ne.s32.totalorder %s381, %s383
      %p390 = scmp.eq.s32.totalorder %s37, 1
      %p391 = por %p389, %p390
      %p392 = scmp.ne.s32.totalorder %s383, %s384
      %p393 = scmp.eq.s32.totalorder %s37, 0
      %p394 = por %p392, %p393
      %p395 = scmp.ne.s32.totalorder %s383, %s384
      %p396 = scmp.eq.s32.totalorder %s38, 1
      %p397 = por %p395, %p396
      %p399 = scmp.ne.s32.totalorder %s384, %s398
      %p400 = scmp.eq.s32.totalorder %s38, 0
      %p401 = por %p399, %p400
      %s403 = sadd.s32 %s402, 1
      %p406 = scmp.eq.s32.totalorder %s32, 1
      %p407 = scmp.ne.s32.totalorder %s402, %s404
      %p408 = scmp.eq.s32.totalorder %s32, 0
      %p409 = por %p407, %p408
      %p410 = scmp.ne.s32.totalorder %s402, %s404
      %p411 = scmp.eq.s32.totalorder %s37, 1
      %p412 = por %p410, %p411
      %p413 = scmp.ne.s32.totalorder %s404, %s405
      %p414 = scmp.eq.s32.totalorder %s37, 0
      %p415 = por %p413, %p414
      %p416 = scmp.ne.s32.totalorder %s404, %s405
      %p417 = scmp.eq.s32.totalorder %s38, 1
      %p418 = por %p416, %p417
      %p420 = scmp.ne.s32.totalorder %s405, %s419
      %p421 = scmp.eq.s32.totalorder %s38, 0
      %p422 = por %p420, %p421
      %s424 = sadd.s32 %s423, 1
      %p427 = scmp.eq.s32.totalorder %s32, 1
      %p428 = scmp.ne.s32.totalorder %s423, %s425
      %p429 = scmp.eq.s32.totalorder %s32, 0
      %p430 = por %p428, %p429
      %p431 = scmp.ne.s32.totalorder %s423, %s425
      %p432 = scmp.eq.s32.totalorder %s37, 1
      %p433 = por %p431, %p432
      %p434 = scmp.ne.s32.totalorder %s425, %s426
      %p435 = scmp.eq.s32.totalorder %s37, 0
      %p436 = por %p434, %p435
      %p437 = scmp.ne.s32.totalorder %s425, %s426
      %p438 = scmp.eq.s32.totalorder %s38, 1
      %p439 = por %p437, %p438
      %p441 = scmp.ne.s32.totalorder %s426, %s440
      %p442 = scmp.eq.s32.totalorder %s38, 0
      %p443 = por %p441, %p442
      %s445 = sadd.s32 %s444, 1
      %p448 = scmp.eq.s32.totalorder %s32, 1
      %p449 = scmp.ne.s32.totalorder %s444, %s446
      %p450 = scmp.eq.s32.totalorder %s32, 0
      %p451 = por %p449, %p450
      %p452 = scmp.ne.s32.totalorder %s444, %s446
      %p453 = scmp.eq.s32.totalorder %s37, 1
      %p454 = por %p452, %p453
      %p455 = scmp.ne.s32.totalorder %s446, %s447
      %p456 = scmp.eq.s32.totalorder %s37, 0
      %p457 = por %p455, %p456
      %p458 = scmp.ne.s32.totalorder %s446, %s447
      %p459 = scmp.eq.s32.totalorder %s38, 1
      %p460 = por %p458, %p459
      %p462 = scmp.ne.s32.totalorder %s447, %s461
      %p463 = scmp.eq.s32.totalorder %s38, 0
      %p464 = por %p462, %p463
      %s466 = sadd.s32 %s465, 1
      %p469 = scmp.eq.s32.totalorder %s32, 1
      %p470 = scmp.ne.s32.totalorder %s465, %s467
      %p471 = scmp.eq.s32.totalorder %s32, 0
      %p472 = por %p470, %p471
      %p473 = scmp.ne.s32.totalorder %s465, %s467
      %p474 = scmp.eq.s32.totalorder %s37, 1
      %p475 = por %p473, %p474
      %p476 = scmp.ne.s32.totalorder %s467, %s468
      %p477 = scmp.eq.s32.totalorder %s37, 0
      %p478 = por %p476, %p477
      %p479 = scmp.ne.s32.totalorder %s467, %s468
      %p480 = scmp.eq.s32.totalorder %s38, 1
      %p481 = por %p479, %p480
      %p483 = scmp.ne.s32.totalorder %s468, %s482
      %p484 = scmp.eq.s32.totalorder %s38, 0
      %p485 = por %p483, %p484
      %s487 = sadd.s32 %s486, 1
      %p490 = scmp.eq.s32.totalorder %s32, 1
      %p491 = scmp.ne.s32.totalorder %s486, %s488
      %p492 = scmp.eq.s32.totalorder %s32, 0
      %p493 = por %p491, %p492
      %p494 = scmp.ne.s32.totalorder %s486, %s488
      %p495 = scmp.eq.s32.totalorder %s37, 1
      %p496 = por %p494, %p495
      %p497 = scmp.ne.s32.totalorder %s488, %s489
      %p498 = scmp.eq.s32.totalorder %s37, 0
      %p499 = por %p497, %p498
      %p500 = scmp.ne.s32.totalorder %s488, %s489
      %p501 = scmp.eq.s32.totalorder %s38, 1
      %p502 = por %p500, %p501
      %p504 = scmp.ne.s32.totalorder %s489, %s503
      %p505 = scmp.eq.s32.totalorder %s38, 0
      %p506 = por %p504, %p505
      %s508 = sadd.s32 %s507, 1
      %p511 = scmp.eq.s32.totalorder %s32, 1
      %p512 = scmp.ne.s32.totalorder %s507, %s509
      %p513 = scmp.eq.s32.totalorder %s32, 0
      %p514 = por %p512, %p513
      %p515 = scmp.ne.s32.totalorder %s507, %s509
      %p516 = scmp.eq.s32.totalorder %s37, 1
      %p517 = por %p515, %p516
      %p518 = scmp.ne.s32.totalorder %s509, %s510
      %p519 = scmp.eq.s32.totalorder %s37, 0
      %p520 = por %p518, %p519
      %p521 = scmp.ne.s32.totalorder %s509, %s510
      %p522 = scmp.eq.s32.totalorder %s38, 1
      %p523 = por %p521, %p522
      %p525 = scmp.ne.s32.totalorder %s510, %s524
      %p526 = scmp.eq.s32.totalorder %s38, 0
      %p527 = por %p525, %p526
      %s528 = ssub.s32 %s32, %s39
      %p529 = scmp.eq.s32.totalorder %s528, 0
      %s531 = sadd.s32 %s530, 1
      %s532 = scalar_select %p529, %s530, %s531
      %p535 = pneg %p529
      %p536 = scmp.eq.s32.totalorder %s32, 1
      %p537 = por %p535, %p536
      %p538 = scmp.ne.s32.totalorder %s530, %s533
      %p539 = scmp.eq.s32.totalorder %s32, 0
      %p540 = por %p538, %p539
      %p541 = scmp.ne.s32.totalorder %s530, %s533
      %p542 = scmp.eq.s32.totalorder %s37, 1
      %p543 = por %p541, %p542
      %p544 = scmp.ne.s32.totalorder %s533, %s534
      %p545 = scmp.eq.s32.totalorder %s37, 0
      %p546 = por %p544, %p545
      %p547 = scmp.ne.s32.totalorder %s533, %s534
      %p548 = scmp.eq.s32.totalorder %s38, 1
      %p549 = por %p547, %p548
      %p551 = scmp.ne.s32.totalorder %s534, %s550
      %p552 = scmp.eq.s32.totalorder %s38, 0
      %p553 = por %p551, %p552
      %p554 = scmp.le.s32.totalorder 1, %s32
      %p555 = scmp.lt.s32.totalorder %s32, 3
      %p556 = pnand %p554, %p555
      %p557 = pneg %p556
      // Predicated region
      $region9: #{tpu_custom_call.1} parent=5 // pred_check
        _
      $region10: #{tpu_custom_call.1} parent=5 // pred_check_branch
        %559 = sbr.rel (%p556) target = $region12
      $region11: #{tpu_custom_call.1} parent=5 // pred_region
        %s560 = ssub.s32 %s32, 1
        // Predicated region
        $region13: #{tpu_custom_call.1} parent=11 // pred_check
          %p561 = pneg %p79
        $region14: #{tpu_custom_call.1} parent=11 // pred_check_branch
          %563 = sbr.rel (%p561) target = $region16
        $region15: #{tpu_custom_call.1} parent=11 // pred_region
          _
        $region16: #{tpu_custom_call.1} parent=11 // pred_fallthru
          _
        // Predicated region
        $region17: #{tpu_custom_call.1} parent=11 // pred_check
          %p564 = pneg %p100
        $region18: #{tpu_custom_call.1} parent=11 // pred_check_branch
          %566 = sbr.rel (%p564) target = $region20
        $region19: #{tpu_custom_call.1} parent=11 // pred_region
          _
        $region20: #{tpu_custom_call.1} parent=11 // pred_fallthru
          _
        // Predicated region
        $region21: #{tpu_custom_call.1} parent=11 // pred_check
          %p567 = pneg %p121
        $region22: #{tpu_custom_call.1} parent=11 // pred_check_branch
          %569 = sbr.rel (%p567) target = $region24
        $region23: #{tpu_custom_call.1} parent=11 // pred_region
          _
        $region24: #{tpu_custom_call.1} parent=11 // pred_fallthru
          _
        // Predicated region
        $region25: #{tpu_custom_call.1} parent=11 // pred_check
          %p570 = pneg %p142
        $region26: #{tpu_custom_call.1} parent=11 // pred_check_branch
          %572 = sbr.rel (%p570) target = $region28
        $region27: #{tpu_custom_call.1} parent=11 // pred_region
          _
        $region28: #{tpu_custom_call.1} parent=11 // pred_fallthru
          _
        // Predicated region
        $region29: #{tpu_custom_call.1} parent=11 // pred_check
          %p573 = pneg %p163
        $region30: #{tpu_custom_call.1} parent=11 // pred_check_branch
          %575 = sbr.rel (%p573) target = $region32
        $region31: #{tpu_custom_call.1} parent=11 // pred_region
          _
        $region32: #{tpu_custom_call.1} parent=11 // pred_fallthru
          _
        // Predicated region
        $region33: #{tpu_custom_call.1} parent=11 // pred_check
          %p576 = pneg %p184
        $region34: #{tpu_custom_call.1} parent=11 // pred_check_branch
          %578 = sbr.rel (%p576) target = $region36
        $region35: #{tpu_custom_call.1} parent=11 // pred_region
          _
        $region36: #{tpu_custom_call.1} parent=11 // pred_fallthru
          _
        // Predicated region
        $region37: #{tpu_custom_call.1} parent=11 // pred_check
          %p579 = pneg %p205
        $region38: #{tpu_custom_call.1} parent=11 // pred_check_branch
          %581 = sbr.rel (%p579) target = $region40
        $region39: #{tpu_custom_call.1} parent=11 // pred_region
          _
        $region40: #{tpu_custom_call.1} parent=11 // pred_fallthru
          _
        // Predicated region
        $region41: #{tpu_custom_call.1} parent=11 // pred_check
          %p582 = pneg %p226
        $region42: #{tpu_custom_call.1} parent=11 // pred_check_branch
          %584 = sbr.rel (%p582) target = $region44
        $region43: #{tpu_custom_call.1} parent=11 // pred_region
          _
        $region44: #{tpu_custom_call.1} parent=11 // pred_fallthru
          _
        // Predicated region
        $region45: #{tpu_custom_call.1} parent=11 // pred_check
          %p585 = pneg %p247
        $region46: #{tpu_custom_call.1} parent=11 // pred_check_branch
          %587 = sbr.rel (%p585) target = $region48
        $region47: #{tpu_custom_call.1} parent=11 // pred_region
          _
        $region48: #{tpu_custom_call.1} parent=11 // pred_fallthru
          _
        // Predicated region
        $region49: #{tpu_custom_call.1} parent=11 // pred_check
          %p588 = pneg %p268
        $region50: #{tpu_custom_call.1} parent=11 // pred_check_branch
          %590 = sbr.rel (%p588) target = $region52
        $region51: #{tpu_custom_call.1} parent=11 // pred_region
          _
        $region52: #{tpu_custom_call.1} parent=11 // pred_fallthru
          _
        // Predicated region
        $region53: #{tpu_custom_call.1} parent=11 // pred_check
          %p591 = pneg %p289
        $region54: #{tpu_custom_call.1} parent=11 // pred_check_branch
          %593 = sbr.rel (%p591) target = $region56
        $region55: #{tpu_custom_call.1} parent=11 // pred_region
          _
        $region56: #{tpu_custom_call.1} parent=11 // pred_fallthru
          _
        // Predicated region
        $region57: #{tpu_custom_call.1} parent=11 // pred_check
          %p594 = pneg %p310
        $region58: #{tpu_custom_call.1} parent=11 // pred_check_branch
          %596 = sbr.rel (%p594) target = $region60
        $region59: #{tpu_custom_call.1} parent=11 // pred_region
          _
        $region60: #{tpu_custom_call.1} parent=11 // pred_fallthru
          _
        // Predicated region
        $region61: #{tpu_custom_call.1} parent=11 // pred_check
          %p597 = pneg %p331
        $region62: #{tpu_custom_call.1} parent=11 // pred_check_branch
          %599 = sbr.rel (%p597) target = $region64
        $region63: #{tpu_custom_call.1} parent=11 // pred_region
          _
        $region64: #{tpu_custom_call.1} parent=11 // pred_fallthru
          _
        // Predicated region
        $region65: #{tpu_custom_call.1} parent=11 // pred_check
          %p600 = pneg %p352
        $region66: #{tpu_custom_call.1} parent=11 // pred_check_branch
          %602 = sbr.rel (%p600) target = $region68
        $region67: #{tpu_custom_call.1} parent=11 // pred_region
          _
        $region68: #{tpu_custom_call.1} parent=11 // pred_fallthru
          _
        // Predicated region
        $region69: #{tpu_custom_call.1} parent=11 // pred_check
          %p603 = pneg %p373
        $region70: #{tpu_custom_call.1} parent=11 // pred_check_branch
          %605 = sbr.rel (%p603) target = $region72
        $region71: #{tpu_custom_call.1} parent=11 // pred_region
          _
        $region72: #{tpu_custom_call.1} parent=11 // pred_fallthru
          _
        // Predicated region
        $region73: #{tpu_custom_call.1} parent=11 // pred_check
          %p606 = pneg %p394
        $region74: #{tpu_custom_call.1} parent=11 // pred_check_branch
          %608 = sbr.rel (%p606) target = $region76
        $region75: #{tpu_custom_call.1} parent=11 // pred_region
          _
        $region76: #{tpu_custom_call.1} parent=11 // pred_fallthru
          _
        // Predicated region
        $region77: #{tpu_custom_call.1} parent=11 // pred_check
          %p609 = pneg %p415
        $region78: #{tpu_custom_call.1} parent=11 // pred_check_branch
          %611 = sbr.rel (%p609) target = $region80
        $region79: #{tpu_custom_call.1} parent=11 // pred_region
          _
        $region80: #{tpu_custom_call.1} parent=11 // pred_fallthru
          _
        // Predicated region
        $region81: #{tpu_custom_call.1} parent=11 // pred_check
          %p612 = pneg %p436
        $region82: #{tpu_custom_call.1} parent=11 // pred_check_branch
          %614 = sbr.rel (%p612) target = $region84
        $region83: #{tpu_custom_call.1} parent=11 // pred_region
          _
        $region84: #{tpu_custom_call.1} parent=11 // pred_fallthru
          _
        // Predicated region
        $region85: #{tpu_custom_call.1} parent=11 // pred_check
          %p615 = pneg %p457
        $region86: #{tpu_custom_call.1} parent=11 // pred_check_branch
          %617 = sbr.rel (%p615) target = $region88
        $region87: #{tpu_custom_call.1} parent=11 // pred_region
          _
        $region88: #{tpu_custom_call.1} parent=11 // pred_fallthru
          _
        // Predicated region
        $region89: #{tpu_custom_call.1} parent=11 // pred_check
          %p618 = pneg %p478
        $region90: #{tpu_custom_call.1} parent=11 // pred_check_branch
          %620 = sbr.rel (%p618) target = $region92
        $region91: #{tpu_custom_call.1} parent=11 // pred_region
          _
        $region92: #{tpu_custom_call.1} parent=11 // pred_fallthru
          _
        // Predicated region
        $region93: #{tpu_custom_call.1} parent=11 // pred_check
          %p621 = pneg %p499
        $region94: #{tpu_custom_call.1} parent=11 // pred_check_branch
          %623 = sbr.rel (%p621) target = $region96
        $region95: #{tpu_custom_call.1} parent=11 // pred_region
          _
        $region96: #{tpu_custom_call.1} parent=11 // pred_fallthru
          _
        // Predicated region
        $region97: #{tpu_custom_call.1} parent=11 // pred_check
          %p624 = pneg %p520
        $region98: #{tpu_custom_call.1} parent=11 // pred_check_branch
          %626 = sbr.rel (%p624) target = $region100
        $region99: #{tpu_custom_call.1} parent=11 // pred_region
          _
        $region100: #{tpu_custom_call.1} parent=11 // pred_fallthru
          _
      $region12: #{tpu_custom_call.1} parent=5 // pred_fallthru
        _
      %p627 = scmp.lt.s32.totalorder %s32, 2
      // Predicated region
      $region101: #{tpu_custom_call.1} parent=5 // pred_check
        %p628 = pneg %p627
      $region102: #{tpu_custom_call.1} parent=5 // pred_check_branch
        %630 = sbr.rel (%p628) target = $region104
      $region103: #{tpu_custom_call.1} parent=5 // pred_region
        // Predicated region
        $region105: #{tpu_custom_call.1} parent=103 // pred_check
          %p631 = pneg %p52
        $region106: #{tpu_custom_call.1} parent=103 // pred_check_branch
          %633 = sbr.rel (%p631) target = $region108
        $region107: #{tpu_custom_call.1} parent=103 // pred_region
          %s634 = smul.u32 8, %s32
          %p635 = scmp.lt.s32.totalorder %s634, 15
          %s636 = scalar_select %p635, %s634, 15
          %s637 = smul.addr %s636, 8
          %s638 = smul.addr %s637, 8
          %s639 = scalar_lea.vmem %s0, %s638
          %s640 = smul.u32 8, %s32
        $region108: #{tpu_custom_call.1} parent=103 // pred_fallthru
          _
      $region104: #{tpu_custom_call.1} parent=5 // pred_fallthru
        _
      %p641 = scmp.le.s32.totalorder 1, %s32
      %p642 = scmp.lt.s32.totalorder %s32, 3
      %p643 = pnand %p641, %p642
      %p644 = pneg %p643
      // Predicated region
      $region109: #{tpu_custom_call.1} parent=5 // pred_check
        _
      $region110: #{tpu_custom_call.1} parent=5 // pred_check_branch
        %646 = sbr.rel (%p643) target = $region112
      $region111: #{tpu_custom_call.1} parent=5 // pred_region
        %s647 = ssub.s32 %s32, 1
        %s648 = smul.u32 8, %s37
        %p649 = scmp.lt.s32.totalorder %s648, 15
        %s650 = scalar_select %p649, %s648, 15
        %s651 = smul.addr %s650, 8
        %s652 = smul.addr %s651, 8
        %s653 = scalar_lea.vmem %s0, %s652
        %p654 = pneg %p58
        %p655 = pneg %p55
        %p656 = pneg %p79
        %p657 = pneg %p76
        %p658 = pneg %p100
        %p659 = pneg %p97
        %p660 = pneg %p121
        %p661 = pneg %p118
        %p662 = pneg %p142
        %p663 = pneg %p139
        %p664 = pneg %p163
        %p665 = pneg %p160
        %p666 = pneg %p184
        %p667 = pneg %p181
        %p668 = pneg %p205
        %p669 = pneg %p202
        %p670 = pneg %p226
        %p671 = pneg %p223
        %p672 = pneg %p247
        %p673 = pneg %p244
        %p674 = pneg %p268
        %p675 = pneg %p265
        %p676 = pneg %p289
        %p677 = pneg %p286
        %p678 = pneg %p310
        %p679 = pneg %p307
        %p680 = pneg %p331
        %p681 = pneg %p328
        %p682 = pneg %p352
        %p683 = pneg %p349
        %p684 = pneg %p373
        %p685 = pneg %p370
        %p686 = pneg %p394
        %p687 = pneg %p391
        %p688 = pneg %p415
        %p689 = pneg %p412
        %p690 = pneg %p436
        %p691 = pneg %p433
        %p692 = pneg %p457
        %p693 = pneg %p454
        %p694 = pneg %p478
        %p695 = pneg %p475
        %p696 = pneg %p499
        %p697 = pneg %p496
        %p698 = pneg %p520
        %p699 = pneg %p517
        %p700 = pneg %p546
        %p701 = pneg %p543
        %s702 = sand.u32 %s533, 1
        %s703 = scalar_lea.sflag [#allocation4], %s702
        %s704 = sand.u32 %s533, 1
        %s705 = smul.addr %s704, 64
        %s706 = scalar_lea.vmem [#allocation3], %s705
        %s707 = smul.u32 8, %s37
        %p708 = scmp.lt.s32.totalorder %s707, 15
        %s709 = scalar_select %p708, %s707, 15
        %s710 = smul.addr %s709, 8
        %s711 = smul.addr %s710, 8
        %s712 = scalar_lea.vmem %s0, %s711
        %s713 = smul.u32 8, %s37
        %s714 = smul.u32 8, %s37
        %v716 = vld [vmem:[%s712] sm:$0xff]
        %v717 = vld [vmem:[%s712 + $0x8] sm:$0xff]
        %v718 = vld [vmem:[%s712 + $0x10] sm:$0xff]
        %v719 = vld [vmem:[%s712 + $0x18] sm:$0xff]
        %v720 = vld [vmem:[%s712 + $0x20] sm:$0xff]
        %v721 = vld [vmem:[%s712 + $0x28] sm:$0xff]
        %v722 = vld [vmem:[%s712 + $0x30] sm:$0xff]
        %v723 = vld [vmem:[%s712 + $0x38] sm:$0xff]
        %v724 = vld [vmem:[%s712 + $0x40] sm:$0xff]
        %v725 = vld [vmem:[%s712 + $0x48] sm:$0xff]
        %v726 = vld [vmem:[%s712 + $0x50] sm:$0xff]
        %v727 = vld [vmem:[%s712 + $0x58] sm:$0xff]
        %v728 = vld [vmem:[%s712 + $0x60] sm:$0xff]
        %v729 = vld [vmem:[%s712 + $0x68] sm:$0xff]
        %v730 = vld [vmem:[%s712 + $0x70] sm:$0xff]
        %v731 = vld [vmem:[%s712 + $0x78] sm:$0xff]
        %v732 = vld [vmem:[%s712 + $0x80] sm:$0xff]
        %v733 = vld [vmem:[%s712 + $0x88] sm:$0xff]
        %v734 = vld [vmem:[%s712 + $0x90] sm:$0xff]
        %v735 = vld [vmem:[%s712 + $0x98] sm:$0xff]
        %v736 = vld [vmem:[%s712 + $0xa0] sm:$0xff]
        %v737 = vld [vmem:[%s712 + $0xa8] sm:$0xff]
        %v738 = vld [vmem:[%s712 + $0xb0] sm:$0xff]
        %v739 = vld [vmem:[%s712 + $0xb8] sm:$0xff]
        %v740 = vld [vmem:[%s712 + $0xc0] sm:$0xff]
        %v741 = vld [vmem:[%s712 + $0xc8] sm:$0xff]
        %v742 = vld [vmem:[%s712 + $0xd0] sm:$0xff]
        %v743 = vld [vmem:[%s712 + $0xd8] sm:$0xff]
        %v744 = vld [vmem:[%s712 + $0xe0] sm:$0xff]
        %v745 = vld [vmem:[%s712 + $0xe8] sm:$0xff]
        %v746 = vld [vmem:[%s712 + $0xf0] sm:$0xff]
        %v747 = vld [vmem:[%s712 + $0xf8] sm:$0xff]
        %v748 = vld [vmem:[%s712 + $0x100] sm:$0xff]
        %v749 = vld [vmem:[%s712 + $0x108] sm:$0xff]
        %v750 = vld [vmem:[%s712 + $0x110] sm:$0xff]
        %v751 = vld [vmem:[%s712 + $0x118] sm:$0xff]
        %v752 = vld [vmem:[%s712 + $0x120] sm:$0xff]
        %v753 = vld [vmem:[%s712 + $0x128] sm:$0xff]
        %v754 = vld [vmem:[%s712 + $0x130] sm:$0xff]
        %v755 = vld [vmem:[%s712 + $0x138] sm:$0xff]
        %v756 = vld [vmem:[%s712 + $0x140] sm:$0xff]
        %v757 = vld [vmem:[%s712 + $0x148] sm:$0xff]
        %v758 = vld [vmem:[%s712 + $0x150] sm:$0xff]
        %v759 = vld [vmem:[%s712 + $0x158] sm:$0xff]
        %v760 = vld [vmem:[%s712 + $0x160] sm:$0xff]
        %v761 = vld [vmem:[%s712 + $0x168] sm:$0xff]
        %v762 = vld [vmem:[%s712 + $0x170] sm:$0xff]
        %v763 = vld [vmem:[%s712 + $0x178] sm:$0xff]
        %v764 = vld [vmem:[%s712 + $0x180] sm:$0xff]
        %v765 = vld [vmem:[%s712 + $0x188] sm:$0xff]
        %v766 = vld [vmem:[%s712 + $0x190] sm:$0xff]
        %v767 = vld [vmem:[%s712 + $0x198] sm:$0xff]
        %v768 = vld [vmem:[%s712 + $0x1a0] sm:$0xff]
        %v769 = vld [vmem:[%s712 + $0x1a8] sm:$0xff]
        %v770 = vld [vmem:[%s712 + $0x1b0] sm:$0xff]
        %v771 = vld [vmem:[%s712 + $0x1b8] sm:$0xff]
        %v772 = vld [vmem:[%s712 + $0x1c0] sm:$0xff]
        %v773 = vld [vmem:[%s712 + $0x1c8] sm:$0xff]
        %v774 = vld [vmem:[%s712 + $0x1d0] sm:$0xff]
        %v775 = vld [vmem:[%s712 + $0x1d8] sm:$0xff]
        %v776 = vld [vmem:[%s712 + $0x1e0] sm:$0xff]
        %v777 = vld [vmem:[%s712 + $0x1e8] sm:$0xff]
        %v778 = vld [vmem:[%s712 + $0x1f0] sm:$0xff]
        %v779 = vld [vmem:[%s712 + $0x1f8] sm:$0xff]
        %v780 = vpack.c.bf16 %v717, %v716
        %v781 = vpack.c.bf16 %v719, %v718
        %v782 = vpack.c.bf16 %v721, %v720
        %v783 = vpack.c.bf16 %v723, %v722
        %v784 = vpack.c.bf16 %v725, %v724
        %v785 = vpack.c.bf16 %v727, %v726
        %v786 = vpack.c.bf16 %v729, %v728
        %v787 = vpack.c.bf16 %v731, %v730
        %v788 = vpack.c.bf16 %v733, %v732
        %v789 = vpack.c.bf16 %v735, %v734
        %v790 = vpack.c.bf16 %v737, %v736
        %v791 = vpack.c.bf16 %v739, %v738
        %v792 = vpack.c.bf16 %v741, %v740
        %v793 = vpack.c.bf16 %v743, %v742
        %v794 = vpack.c.bf16 %v745, %v744
        %v795 = vpack.c.bf16 %v747, %v746
        %v796 = vpack.c.bf16 %v749, %v748
        %v797 = vpack.c.bf16 %v751, %v750
        %v798 = vpack.c.bf16 %v753, %v752
        %v799 = vpack.c.bf16 %v755, %v754
        %v800 = vpack.c.bf16 %v757, %v756
        %v801 = vpack.c.bf16 %v759, %v758
        %v802 = vpack.c.bf16 %v761, %v760
        %v803 = vpack.c.bf16 %v763, %v762
        %v804 = vpack.c.bf16 %v765, %v764
        %v805 = vpack.c.bf16 %v767, %v766
        %v806 = vpack.c.bf16 %v769, %v768
        %v807 = vpack.c.bf16 %v771, %v770
        %v808 = vpack.c.bf16 %v773, %v772
        %v809 = vpack.c.bf16 %v775, %v774
        %v810 = vpack.c.bf16 %v777, %v776
        %v811 = vpack.c.bf16 %v779, %v778
        %v812 = vld [vmem:[%s1] sm:$0xf]
        %v813 = vld [vmem:[%s1 + $0x4] sm:$0xf]
        %v814 = vld [vmem:[%s1 + $0x8] sm:$0xf]
        %v815 = vld [vmem:[%s2] sm:$0x1]
        %v817 = vlaneseq
        %v818 = vshrl.u32 %v817, 7
        %v819 = vsub.s32 0, %v818
        %v820 = vrot.slane %v815, %v819
        %v825 = vunpack.c.l.b16 %v812
        %v826 = vunpack.c.l.b16 %v813
        %v827 = vunpack.c.l.b16 %v814
        %v828 = vpack.c.b16 %v826, %v825
        %v829 = vpack.c.b16 %v827, %v827
        %vm831 = vcmask 195584
        %v833 = vsel %vm831, %v780, 0
        %v836 = vsel %vm831, %v781, 0
        %v839 = vsel %vm831, %v782, 0
        %v842 = vsel %vm831, %v783, 0
        %v845 = vsel %vm831, %v784, 0
        %v848 = vsel %vm831, %v785, 0
        %v851 = vsel %vm831, %v786, 0
        %v854 = vsel %vm831, %v787, 0
        %v857 = vsel %vm831, %v788, 0
        %v860 = vsel %vm831, %v789, 0
        %v863 = vsel %vm831, %v790, 0
        %v866 = vsel %vm831, %v791, 0
        %v869 = vsel %vm831, %v792, 0
        %v872 = vsel %vm831, %v793, 0
        %v875 = vsel %vm831, %v794, 0
        %v878 = vsel %vm831, %v795, 0
        %v881 = vsel %vm831, %v796, 0
        %v884 = vsel %vm831, %v797, 0
        %v887 = vsel %vm831, %v798, 0
        %v890 = vsel %vm831, %v799, 0
        %v893 = vsel %vm831, %v800, 0
        %v896 = vsel %vm831, %v801, 0
        %v899 = vsel %vm831, %v802, 0
        %v902 = vsel %vm831, %v803, 0
        %v905 = vsel %vm831, %v804, 0
        %v908 = vsel %vm831, %v805, 0
        %v911 = vsel %vm831, %v806, 0
        %v914 = vsel %vm831, %v807, 0
        %v917 = vsel %vm831, %v808, 0
        %v920 = vsel %vm831, %v809, 0
        %v923 = vsel %vm831, %v810, 0
        %v926 = vsel %vm831, %v811, 0
        %vm928 = vcmask 1043456
        %v930 = vsel %vm928, %v829, 0
        %932 = vmatprep.subr.bf16.mxu0 0
        %933 = vmatpush1.bf16.msra.mxu0 %v828
        %934 = vmatprep.subr.bf16.mxu0 0
        %935 = vmatpush1.bf16.msra.mxu0 %v930
        %936 = vmatprep.subr.bf16.mxu0 0
        %937 = vmatpush1.bf16.msra.mxu0 0
        %938 = vmatprep.subr.bf16.mxu0 0
        %939 = vmatpush1.bf16.msra.mxu0 0
        %940 = vmatprep.subr.bf16.mxu0 0
        %941 = vmatpush1.bf16.msra.mxu0 0
        %942 = vmatprep.subr.bf16.mxu0 0
        %943 = vmatpush1.bf16.msra.mxu0 0
        %944 = vmatprep.subr.bf16.mxu0 0
        %945 = vmatpush1.bf16.msra.mxu0 0
        %946 = vmatprep.subr.bf16.mxu0 0
        %947 = vmatpush1.bf16.msra.mxu0 0
        %948 = vmatprep.subr.bf16.mxu0 0
        %949 = vmatpush1.bf16.msra.mxu0 0
        %950 = vmatprep.subr.bf16.mxu0 0
        %951 = vmatpush1.bf16.msra.mxu0 0
        %952 = vmatprep.subr.bf16.mxu0 0
        %953 = vmatpush1.bf16.msra.mxu0 0
        %954 = vmatprep.subr.bf16.mxu0 0
        %955 = vmatpush1.bf16.msra.mxu0 0
        %956 = vmatprep.subr.bf16.mxu0 0
        %957 = vmatpush1.bf16.msra.mxu0 0
        %958 = vmatprep.subr.bf16.mxu0 0
        %959 = vmatpush1.bf16.msra.mxu0 0
        %960 = vmatprep.subr.bf16.mxu0 0
        %961 = vmatpush1.bf16.msra.mxu0 0
        %962 = vmatprep.subr.bf16.mxu0 0
        %963 = vmatpush1.bf16.msra.mxu0 0
        %964 = vmatprep.mubr.bf16.mxu0 0
        %965 = vmatmul.mubr.bf16.gmra.mrb[0].mxu0 %v833
        %v966 = vpop.f32.mrb[0].mxu0
        %v967 = vadd.f32 %v820, %v966
        %v968 = vpop.f32.mrb[0].mxu0
        %v969 = vpop.f32.mrb[0].mxu0
        %v970 = vadd.f32 %v820, %v969
        %v971 = vpop.f32.mrb[0].mxu0
        %972 = vmatprep.mubr.bf16.mxu0 0
        %973 = vmatmul.mubr.bf16.gmra.mrb[0].mxu0 %v836
        %v974 = vpop.f32.mrb[0].mxu0
        %v975 = vadd.f32 %v820, %v974
        %v976 = vpop.f32.mrb[0].mxu0
        %v977 = vpop.f32.mrb[0].mxu0
        %v978 = vadd.f32 %v820, %v977
        %v979 = vpop.f32.mrb[0].mxu0
        %980 = vmatprep.mubr.bf16.mxu0 0
        %981 = vmatmul.mubr.bf16.gmra.mrb[0].mxu0 %v839
        %v982 = vpop.f32.mrb[0].mxu0
        %v983 = vadd.f32 %v820, %v982
        %v984 = vpop.f32.mrb[0].mxu0
        %v985 = vpop.f32.mrb[0].mxu0
        %v986 = vadd.f32 %v820, %v985
        %v987 = vpop.f32.mrb[0].mxu0
        %988 = vmatprep.mubr.bf16.mxu0 0
        %989 = vmatmul.mubr.bf16.gmra.mrb[0].mxu0 %v842
        %v990 = vpop.f32.mrb[0].mxu0
        %v991 = vadd.f32 %v820, %v990
        %v992 = vpop.f32.mrb[0].mxu0
        %v993 = vpop.f32.mrb[0].mxu0
        %v994 = vadd.f32 %v820, %v993
        %v995 = vpop.f32.mrb[0].mxu0
        %996 = vmatprep.mubr.bf16.mxu0 0
        %997 = vmatmul.mubr.bf16.gmra.mrb[0].mxu0 %v845
        %v998 = vpop.f32.mrb[0].mxu0
        %v999 = vadd.f32 %v820, %v998
        %v1000 = vpop.f32.mrb[0].mxu0
        %v1001 = vpop.f32.mrb[0].mxu0
        %v1002 = vadd.f32 %v820, %v1001
        %v1003 = vpop.f32.mrb[0].mxu0
        %1004 = vmatprep.mubr.bf16.mxu0 0
        %1005 = vmatmul.mubr.bf16.gmra.mrb[0].mxu0 %v848
        %v1006 = vpop.f32.mrb[0].mxu0
        %v1007 = vadd.f32 %v820, %v1006
        %v1008 = vpop.f32.mrb[0].mxu0
        %v1009 = vpop.f32.mrb[0].mxu0
        %v1010 = vadd.f32 %v820, %v1009
        %v1011 = vpop.f32.mrb[0].mxu0
        %1012 = vmatprep.mubr.bf16.mxu0 0
        %1013 = vmatmul.mubr.bf16.gmra.mrb[0].mxu0 %v851
        %v1014 = vpop.f32.mrb[0].mxu0
        %v1015 = vadd.f32 %v820, %v1014
        %v1016 = vpop.f32.mrb[0].mxu0
        %v1017 = vpop.f32.mrb[0].mxu0
        %v1018 = vadd.f32 %v820, %v1017
        %v1019 = vpop.f32.mrb[0].mxu0
        %1020 = vmatprep.mubr.bf16.mxu0 0
        %1021 = vmatmul.mubr.bf16.gmra.mrb[0].mxu0 %v854
        %v1022 = vpop.f32.mrb[0].mxu0
        %v1023 = vadd.f32 %v820, %v1022
        %v1024 = vpop.f32.mrb[0].mxu0
        %v1025 = vpop.f32.mrb[0].mxu0
        %v1026 = vadd.f32 %v820, %v1025
        %v1027 = vpop.f32.mrb[0].mxu0
        %1028 = vmatprep.mubr.bf16.mxu0 0
        %1029 = vmatmul.mubr.bf16.gmra.mrb[0].mxu0 %v857
        %v1030 = vpop.f32.mrb[0].mxu0
        %v1031 = vadd.f32 %v820, %v1030
        %v1032 = vpop.f32.mrb[0].mxu0
        %v1033 = vpop.f32.mrb[0].mxu0
        %v1034 = vadd.f32 %v820, %v1033
        %v1035 = vpop.f32.mrb[0].mxu0
        %1036 = vmatprep.mubr.bf16.mxu0 0
        %1037 = vmatmul.mubr.bf16.gmra.mrb[0].mxu0 %v860
        %v1038 = vpop.f32.mrb[0].mxu0
        %v1039 = vadd.f32 %v820, %v1038
        %v1040 = vpop.f32.mrb[0].mxu0
        %v1041 = vpop.f32.mrb[0].mxu0
        %v1042 = vadd.f32 %v820, %v1041
        %v1043 = vpop.f32.mrb[0].mxu0
        %1044 = vmatprep.mubr.bf16.mxu0 0
        %1045 = vmatmul.mubr.bf16.gmra.mrb[0].mxu0 %v863
        %v1046 = vpop.f32.mrb[0].mxu0
        %v1047 = vadd.f32 %v820, %v1046
        %v1048 = vpop.f32.mrb[0].mxu0
        %v1049 = vpop.f32.mrb[0].mxu0
        %v1050 = vadd.f32 %v820, %v1049
        %v1051 = vpop.f32.mrb[0].mxu0
        %1052 = vmatprep.mubr.bf16.mxu0 0
        %1053 = vmatmul.mubr.bf16.gmra.mrb[0].mxu0 %v866
        %v1054 = vpop.f32.mrb[0].mxu0
        %v1055 = vadd.f32 %v820, %v1054
        %v1056 = vpop.f32.mrb[0].mxu0
        %v1057 = vpop.f32.mrb[0].mxu0
        %v1058 = vadd.f32 %v820, %v1057
        %v1059 = vpop.f32.mrb[0].mxu0
        %1060 = vmatprep.mubr.bf16.mxu0 0
        %1061 = vmatmul.mubr.bf16.gmra.mrb[0].mxu0 %v869
        %v1062 = vpop.f32.mrb[0].mxu0
        %v1063 = vadd.f32 %v820, %v1062
        %v1064 = vpop.f32.mrb[0].mxu0
        %v1065 = vpop.f32.mrb[0].mxu0
        %v1066 = vadd.f32 %v820, %v1065
        %v1067 = vpop.f32.mrb[0].mxu0
        %1068 = vmatprep.mubr.bf16.mxu0 0
        %1069 = vmatmul.mubr.bf16.gmra.mrb[0].mxu0 %v872
        %v1070 = vpop.f32.mrb[0].mxu0
        %v1071 = vadd.f32 %v820, %v1070
        %v1072 = vpop.f32.mrb[0].mxu0
        %v1073 = vpop.f32.mrb[0].mxu0
        %v1074 = vadd.f32 %v820, %v1073
        %v1075 = vpop.f32.mrb[0].mxu0
        %1076 = vmatprep.mubr.bf16.mxu0 0
        %1077 = vmatmul.mubr.bf16.gmra.mrb[0].mxu0 %v875
        %v1078 = vpop.f32.mrb[0].mxu0
        %v1079 = vadd.f32 %v820, %v1078
        %v1080 = vpop.f32.mrb[0].mxu0
        %v1081 = vpop.f32.mrb[0].mxu0
        %v1082 = vadd.f32 %v820, %v1081
        %v1083 = vpop.f32.mrb[0].mxu0
        %1084 = vmatprep.mubr.bf16.mxu0 0
        %1085 = vmatmul.mubr.bf16.gmra.mrb[0].mxu0 %v878
        %v1086 = vpop.f32.mrb[0].mxu0
        %v1087 = vadd.f32 %v820, %v1086
        %v1088 = vpop.f32.mrb[0].mxu0
        %v1089 = vpop.f32.mrb[0].mxu0
        %v1090 = vadd.f32 %v820, %v1089
        %v1091 = vpop.f32.mrb[0].mxu0
        %1092 = vmatprep.mubr.bf16.mxu0 0
        %1093 = vmatmul.mubr.bf16.gmra.mrb[0].mxu0 %v881
        %v1094 = vpop.f32.mrb[0].mxu0
        %v1095 = vadd.f32 %v820, %v1094
        %v1096 = vpop.f32.mrb[0].mxu0
        %v1097 = vpop.f32.mrb[0].mxu0
        %v1098 = vadd.f32 %v820, %v1097
        %v1099 = vpop.f32.mrb[0].mxu0
        %1100 = vmatprep.mubr.bf16.mxu0 0
        %1101 = vmatmul.mubr.bf16.gmra.mrb[0].mxu0 %v884
        %v1102 = vpop.f32.mrb[0].mxu0
        %v1103 = vadd.f32 %v820, %v1102
        %v1104 = vpop.f32.mrb[0].mxu0
        %v1105 = vpop.f32.mrb[0].mxu0
        %v1106 = vadd.f32 %v820, %v1105
        %v1107 = vpop.f32.mrb[0].mxu0
        %1108 = vmatprep.mubr.bf16.mxu0 0
        %1109 = vmatmul.mubr.bf16.gmra.mrb[0].mxu0 %v887
        %v1110 = vpop.f32.mrb[0].mxu0
        %v1111 = vadd.f32 %v820, %v1110
        %v1112 = vpop.f32.mrb[0].mxu0
        %v1113 = vpop.f32.mrb[0].mxu0
        %v1114 = vadd.f32 %v820, %v1113
        %v1115 = vpop.f32.mrb[0].mxu0
        %1116 = vmatprep.mubr.bf16.mxu0 0
        %1117 = vmatmul.mubr.bf16.gmra.mrb[0].mxu0 %v890
        %v1118 = vpop.f32.mrb[0].mxu0
        %v1119 = vadd.f32 %v820, %v1118
        %v1120 = vpop.f32.mrb[0].mxu0
        %v1121 = vpop.f32.mrb[0].mxu0
        %v1122 = vadd.f32 %v820, %v1121
        %v1123 = vpop.f32.mrb[0].mxu0
        %1124 = vmatprep.mubr.bf16.mxu0 0
        %1125 = vmatmul.mubr.bf16.gmra.mrb[0].mxu0 %v893
        %v1126 = vpop.f32.mrb[0].mxu0
        %v1127 = vadd.f32 %v820, %v1126
        %v1128 = vpop.f32.mrb[0].mxu0
        %v1129 = vpop.f32.mrb[0].mxu0
        %v1130 = vadd.f32 %v820, %v1129
        %v1131 = vpop.f32.mrb[0].mxu0
        %1132 = vmatprep.mubr.bf16.mxu0 0
        %1133 = vmatmul.mubr.bf16.gmra.mrb[0].mxu0 %v896
        %v1134 = vpop.f32.mrb[0].mxu0
        %v1135 = vadd.f32 %v820, %v1134
        %v1136 = vpop.f32.mrb[0].mxu0
        %v1137 = vpop.f32.mrb[0].mxu0
        %v1138 = vadd.f32 %v820, %v1137
        %v1139 = vpop.f32.mrb[0].mxu0
        %1140 = vmatprep.mubr.bf16.mxu0 0
        %1141 = vmatmul.mubr.bf16.gmra.mrb[0].mxu0 %v899
        %v1142 = vpop.f32.mrb[0].mxu0
        %v1143 = vadd.f32 %v820, %v1142
        %v1144 = vpop.f32.mrb[0].mxu0
        %v1145 = vpop.f32.mrb[0].mxu0
        %v1146 = vadd.f32 %v820, %v1145
        %v1147 = vpop.f32.mrb[0].mxu0
        %1148 = vmatprep.mubr.bf16.mxu0 0
        %1149 = vmatmul.mubr.bf16.gmra.mrb[0].mxu0 %v902
        %v1150 = vpop.f32.mrb[0].mxu0
        %v1151 = vadd.f32 %v820, %v1150
        %v1152 = vpop.f32.mrb[0].mxu0
        %v1153 = vpop.f32.mrb[0].mxu0
        %v1154 = vadd.f32 %v820, %v1153
        %v1155 = vpop.f32.mrb[0].mxu0
        %1156 = vmatprep.mubr.bf16.mxu0 0
        %1157 = vmatmul.mubr.bf16.gmra.mrb[0].mxu0 %v905
        %v1158 = vpop.f32.mrb[0].mxu0
        %v1159 = vadd.f32 %v820, %v1158
        %v1160 = vpop.f32.mrb[0].mxu0
        %v1161 = vpop.f32.mrb[0].mxu0
        %v1162 = vadd.f32 %v820, %v1161
        %v1163 = vpop.f32.mrb[0].mxu0
        %1164 = vmatprep.mubr.bf16.mxu0 0
        %1165 = vmatmul.mubr.bf16.gmra.mrb[0].mxu0 %v908
        %v1166 = vpop.f32.mrb[0].mxu0
        %v1167 = vadd.f32 %v820, %v1166
        %v1168 = vpop.f32.mrb[0].mxu0
        %v1169 = vpop.f32.mrb[0].mxu0
        %v1170 = vadd.f32 %v820, %v1169
        %v1171 = vpop.f32.mrb[0].mxu0
        %1172 = vmatprep.mubr.bf16.mxu0 0
        %1173 = vmatmul.mubr.bf16.gmra.mrb[0].mxu0 %v911
        %v1174 = vpop.f32.mrb[0].mxu0
        %v1175 = vadd.f32 %v820, %v1174
        %v1176 = vpop.f32.mrb[0].mxu0
        %v1177 = vpop.f32.mrb[0].mxu0
        %v1178 = vadd.f32 %v820, %v1177
        %v1179 = vpop.f32.mrb[0].mxu0
        %1180 = vmatprep.mubr.bf16.mxu0 0
        %1181 = vmatmul.mubr.bf16.gmra.mrb[0].mxu0 %v914
        %v1182 = vpop.f32.mrb[0].mxu0
        %v1183 = vadd.f32 %v820, %v1182
        %v1184 = vpop.f32.mrb[0].mxu0
        %v1185 = vpop.f32.mrb[0].mxu0
        %v1186 = vadd.f32 %v820, %v1185
        %v1187 = vpop.f32.mrb[0].mxu0
        %1188 = vmatprep.mubr.bf16.mxu0 0
        %1189 = vmatmul.mubr.bf16.gmra.mrb[0].mxu0 %v917
        %v1190 = vpop.f32.mrb[0].mxu0
        %v1191 = vadd.f32 %v820, %v1190
        %v1192 = vpop.f32.mrb[0].mxu0
        %v1193 = vpop.f32.mrb[0].mxu0
        %v1194 = vadd.f32 %v820, %v1193
        %v1195 = vpop.f32.mrb[0].mxu0
        %1196 = vmatprep.mubr.bf16.mxu0 0
        %1197 = vmatmul.mubr.bf16.gmra.mrb[0].mxu0 %v920
        %v1198 = vpop.f32.mrb[0].mxu0
        %v1199 = vadd.f32 %v820, %v1198
        %v1200 = vpop.f32.mrb[0].mxu0
        %v1201 = vpop.f32.mrb[0].mxu0
        %v1202 = vadd.f32 %v820, %v1201
        %v1203 = vpop.f32.mrb[0].mxu0
        %1204 = vmatprep.mubr.bf16.mxu0 0
        %1205 = vmatmul.mubr.bf16.gmra.mrb[0].mxu0 %v923
        %v1206 = vpop.f32.mrb[0].mxu0
        %v1207 = vadd.f32 %v820, %v1206
        %v1208 = vpop.f32.mrb[0].mxu0
        %v1209 = vpop.f32.mrb[0].mxu0
        %v1210 = vadd.f32 %v820, %v1209
        %v1211 = vpop.f32.mrb[0].mxu0
        %1212 = vmatprep.mubr.bf16.mxu0 0
        %1213 = vmatmul.mubr.bf16.gmra.mrb[0].mxu0 %v926
        %v1214 = vpop.f32.mrb[0].mxu0
        %v1215 = vadd.f32 %v820, %v1214
        %v1216 = vpop.f32.mrb[0].mxu0
        %v1217 = vpop.f32.mrb[0].mxu0
        %v1218 = vadd.f32 %v820, %v1217
        %v1219 = vpop.f32.mrb[0].mxu0
        %1220 = vdwg.mxu0
        %v1221 = vmax.f32 %v967, 0.0
        %v1222 = vmax.f32 %v970, 0.0
        %v1223 = vmax.f32 %v975, 0.0
        %v1224 = vmax.f32 %v978, 0.0
        %v1225 = vmax.f32 %v983, 0.0
        %v1226 = vmax.f32 %v986, 0.0
        %v1227 = vmax.f32 %v991, 0.0
        %v1228 = vmax.f32 %v994, 0.0
        %v1229 = vmax.f32 %v999, 0.0
        %v1230 = vmax.f32 %v1002, 0.0
        %v1231 = vmax.f32 %v1007, 0.0
        %v1232 = vmax.f32 %v1010, 0.0
        %v1233 = vmax.f32 %v1015, 0.0
        %v1234 = vmax.f32 %v1018, 0.0
        %v1235 = vmax.f32 %v1023, 0.0
        %v1236 = vmax.f32 %v1026, 0.0
        %v1237 = vmax.f32 %v1031, 0.0
        %v1238 = vmax.f32 %v1034, 0.0
        %v1239 = vmax.f32 %v1039, 0.0
        %v1240 = vmax.f32 %v1042, 0.0
        %v1241 = vmax.f32 %v1047, 0.0
        %v1242 = vmax.f32 %v1050, 0.0
        %v1243 = vmax.f32 %v1055, 0.0
        %v1244 = vmax.f32 %v1058, 0.0
        %v1245 = vmax.f32 %v1063, 0.0
        %v1246 = vmax.f32 %v1066, 0.0
        %v1247 = vmax.f32 %v1071, 0.0
        %v1248 = vmax.f32 %v1074, 0.0
        %v1249 = vmax.f32 %v1079, 0.0
        %v1250 = vmax.f32 %v1082, 0.0
        %v1251 = vmax.f32 %v1087, 0.0
        %v1252 = vmax.f32 %v1090, 0.0
        %v1253 = vmax.f32 %v1095, 0.0
        %v1254 = vmax.f32 %v1098, 0.0
        %v1255 = vmax.f32 %v1103, 0.0
        %v1256 = vmax.f32 %v1106, 0.0
        %v1257 = vmax.f32 %v1111, 0.0
        %v1258 = vmax.f32 %v1114, 0.0
        %v1259 = vmax.f32 %v1119, 0.0
        %v1260 = vmax.f32 %v1122, 0.0
        %v1261 = vmax.f32 %v1127, 0.0
        %v1262 = vmax.f32 %v1130, 0.0
        %v1263 = vmax.f32 %v1135, 0.0
        %v1264 = vmax.f32 %v1138, 0.0
        %v1265 = vmax.f32 %v1143, 0.0
        %v1266 = vmax.f32 %v1146, 0.0
        %v1267 = vmax.f32 %v1151, 0.0
        %v1268 = vmax.f32 %v1154, 0.0
        %v1269 = vmax.f32 %v1159, 0.0
        %v1270 = vmax.f32 %v1162, 0.0
        %v1271 = vmax.f32 %v1167, 0.0
        %v1272 = vmax.f32 %v1170, 0.0
        %v1273 = vmax.f32 %v1175, 0.0
        %v1274 = vmax.f32 %v1178, 0.0
        %v1275 = vmax.f32 %v1183, 0.0
        %v1276 = vmax.f32 %v1186, 0.0
        %v1277 = vmax.f32 %v1191, 0.0
        %v1278 = vmax.f32 %v1194, 0.0
        %v1279 = vmax.f32 %v1199, 0.0
        %v1280 = vmax.f32 %v1202, 0.0
        %v1281 = vmax.f32 %v1207, 0.0
        %v1282 = vmax.f32 %v1210, 0.0
        %v1283 = vmax.f32 %v1215, 0.0
        %v1284 = vmax.f32 %v1218, 0.0
        %v1285 = vpack.c.bf16 %v1222, %v1221
        %v1286 = vpack.c.bf16 %v1224, %v1223
        %v1287 = vpack.c.bf16 %v1226, %v1225
        %v1288 = vpack.c.bf16 %v1228, %v1227
        %v1289 = vpack.c.bf16 %v1230, %v1229
        %v1290 = vpack.c.bf16 %v1232, %v1231
        %v1291 = vpack.c.bf16 %v1234, %v1233
        %v1292 = vpack.c.bf16 %v1236, %v1235
        %v1293 = vpack.c.bf16 %v1238, %v1237
        %v1294 = vpack.c.bf16 %v1240, %v1239
        %v1295 = vpack.c.bf16 %v1242, %v1241
        %v1296 = vpack.c.bf16 %v1244, %v1243
        %v1297 = vpack.c.bf16 %v1246, %v1245
        %v1298 = vpack.c.bf16 %v1248, %v1247
        %v1299 = vpack.c.bf16 %v1250, %v1249
        %v1300 = vpack.c.bf16 %v1252, %v1251
        %v1301 = vpack.c.bf16 %v1254, %v1253
        %v1302 = vpack.c.bf16 %v1256, %v1255
        %v1303 = vpack.c.bf16 %v1258, %v1257
        %v1304 = vpack.c.bf16 %v1260, %v1259
        %v1305 = vpack.c.bf16 %v1262, %v1261
        %v1306 = vpack.c.bf16 %v1264, %v1263
        %v1307 = vpack.c.bf16 %v1266, %v1265
        %v1308 = vpack.c.bf16 %v1268, %v1267
        %v1309 = vpack.c.bf16 %v1270, %v1269
        %v1310 = vpack.c.bf16 %v1272, %v1271
        %v1311 = vpack.c.bf16 %v1274, %v1273
        %v1312 = vpack.c.bf16 %v1276, %v1275
        %v1313 = vpack.c.bf16 %v1278, %v1277
        %v1314 = vpack.c.bf16 %v1280, %v1279
        %v1315 = vpack.c.bf16 %v1282, %v1281
        %v1316 = vpack.c.bf16 %v1284, %v1283
        %v1317 = vld [vmem:[%s3] sm:$0xf]
        %v1318 = vld [vmem:[%s4] sm:$0x1]
        %v1320 = vlaneseq
        %v1321 = vshrl.u32 %v1320, 7
        %v1322 = vsub.s32 0, %v1321
        %v1323 = vrot.slane %v1318, %v1322
        %vm1325 = vcmask 64512
        %v1327 = vsel %vm1325, %v1285, 0
        %v1330 = vsel %vm1325, %v1286, 0
        %v1333 = vsel %vm1325, %v1287, 0
        %v1336 = vsel %vm1325, %v1288, 0
        %v1339 = vsel %vm1325, %v1289, 0
        %v1342 = vsel %vm1325, %v1290, 0
        %v1345 = vsel %vm1325, %v1291, 0
        %v1348 = vsel %vm1325, %v1292, 0
        %v1351 = vsel %vm1325, %v1293, 0
        %v1354 = vsel %vm1325, %v1294, 0
        %v1357 = vsel %vm1325, %v1295, 0
        %v1360 = vsel %vm1325, %v1296, 0
        %v1363 = vsel %vm1325, %v1297, 0
        %v1366 = vsel %vm1325, %v1298, 0
        %v1369 = vsel %vm1325, %v1299, 0
        %v1372 = vsel %vm1325, %v1300, 0
        %v1375 = vsel %vm1325, %v1301, 0
        %v1378 = vsel %vm1325, %v1302, 0
        %v1381 = vsel %vm1325, %v1303, 0
        %v1384 = vsel %vm1325, %v1304, 0
        %v1387 = vsel %vm1325, %v1305, 0
        %v1390 = vsel %vm1325, %v1306, 0
        %v1393 = vsel %vm1325, %v1307, 0
        %v1396 = vsel %vm1325, %v1308, 0
        %v1399 = vsel %vm1325, %v1309, 0
        %v1402 = vsel %vm1325, %v1310, 0
        %v1405 = vsel %vm1325, %v1311, 0
        %v1408 = vsel %vm1325, %v1312, 0
        %v1411 = vsel %vm1325, %v1313, 0
        %v1414 = vsel %vm1325, %v1314, 0
        %v1417 = vsel %vm1325, %v1315, 0
        %v1420 = vsel %vm1325, %v1316, 0
        %v1423 = vsel %vm928, %v1317, 0
        %1425 = vmatprep.subr.bf16.mxu0 0
        %1426 = vmatpush1.bf16.msra.mxu0 %v1423
        %1427 = vmatprep.subr.bf16.mxu0 0
        %1428 = vmatpush1.bf16.msra.mxu0 0
        %1429 = vmatprep.subr.bf16.mxu0 0
        %1430 = vmatpush1.bf16.msra.mxu0 0
        %1431 = vmatprep.subr.bf16.mxu0 0
        %1432 = vmatpush1.bf16.msra.mxu0 0
        %1433 = vmatprep.subr.bf16.mxu0 0
        %1434 = vmatpush1.bf16.msra.mxu0 0
        %1435 = vmatprep.subr.bf16.mxu0 0
        %1436 = vmatpush1.bf16.msra.mxu0 0
        %1437 = vmatprep.subr.bf16.mxu0 0
        %1438 = vmatpush1.bf16.msra.mxu0 0
        %1439 = vmatprep.subr.bf16.mxu0 0
        %1440 = vmatpush1.bf16.msra.mxu0 0
        %1441 = vmatprep.subr.bf16.mxu0 0
        %1442 = vmatpush1.bf16.msra.mxu0 0
        %1443 = vmatprep.subr.bf16.mxu0 0
        %1444 = vmatpush1.bf16.msra.mxu0 0
        %1445 = vmatprep.subr.bf16.mxu0 0
        %1446 = vmatpush1.bf16.msra.mxu0 0
        %1447 = vmatprep.subr.bf16.mxu0 0
        %1448 = vmatpush1.bf16.msra.mxu0 0
        %1449 = vmatprep.subr.bf16.mxu0 0
        %1450 = vmatpush1.bf16.msra.mxu0 0
        %1451 = vmatprep.subr.bf16.mxu0 0
        %1452 = vmatpush1.bf16.msra.mxu0 0
        %1453 = vmatprep.subr.bf16.mxu0 0
        %1454 = vmatpush1.bf16.msra.mxu0 0
        %1455 = vmatprep.subr.bf16.mxu0 0
        %1456 = vmatpush1.bf16.msra.mxu0 0
        %1457 = vmatprep.mubr.bf16.mxu0 0
        %1458 = vmatmul.mubr.bf16.gmra.mrb[0].mxu0 %v1327
        %v1459 = vpop.f32.mrb[0].mxu0
        %v1460 = vadd.f32 %v1323, %v1459
        %v1461 = vpop.f32.mrb[0].mxu0
        %v1462 = vpop.f32.mrb[0].mxu0
        %v1463 = vadd.f32 %v1323, %v1462
        %v1464 = vpop.f32.mrb[0].mxu0
        %1465 = vmatprep.mubr.bf16.mxu0 0
        %1466 = vmatmul.mubr.bf16.gmra.mrb[0].mxu0 %v1330
        %v1467 = vpop.f32.mrb[0].mxu0
        %v1468 = vadd.f32 %v1323, %v1467
        %v1469 = vpop.f32.mrb[0].mxu0
        %v1470 = vpop.f32.mrb[0].mxu0
        %v1471 = vadd.f32 %v1323, %v1470
        %v1472 = vpop.f32.mrb[0].mxu0
        %1473 = vmatprep.mubr.bf16.mxu0 0
        %1474 = vmatmul.mubr.bf16.gmra.mrb[0].mxu0 %v1333
        %v1475 = vpop.f32.mrb[0].mxu0
        %v1476 = vadd.f32 %v1323, %v1475
        %v1477 = vpop.f32.mrb[0].mxu0
        %v1478 = vpop.f32.mrb[0].mxu0
        %v1479 = vadd.f32 %v1323, %v1478
        %v1480 = vpop.f32.mrb[0].mxu0
        %1481 = vmatprep.mubr.bf16.mxu0 0
        %1482 = vmatmul.mubr.bf16.gmra.mrb[0].mxu0 %v1336
        %v1483 = vpop.f32.mrb[0].mxu0
        %v1484 = vadd.f32 %v1323, %v1483
        %v1485 = vpop.f32.mrb[0].mxu0
        %v1486 = vpop.f32.mrb[0].mxu0
        %v1487 = vadd.f32 %v1323, %v1486
        %v1488 = vpop.f32.mrb[0].mxu0
        %1489 = vmatprep.mubr.bf16.mxu0 0
        %1490 = vmatmul.mubr.bf16.gmra.mrb[0].mxu0 %v1339
        %v1491 = vpop.f32.mrb[0].mxu0
        %v1492 = vadd.f32 %v1323, %v1491
        %v1493 = vpop.f32.mrb[0].mxu0
        %v1494 = vpop.f32.mrb[0].mxu0
        %v1495 = vadd.f32 %v1323, %v1494
        %v1496 = vpop.f32.mrb[0].mxu0
        %1497 = vmatprep.mubr.bf16.mxu0 0
        %1498 = vmatmul.mubr.bf16.gmra.mrb[0].mxu0 %v1342
        %v1499 = vpop.f32.mrb[0].mxu0
        %v1500 = vadd.f32 %v1323, %v1499
        %v1501 = vpop.f32.mrb[0].mxu0
        %v1502 = vpop.f32.mrb[0].mxu0
        %v1503 = vadd.f32 %v1323, %v1502
        %v1504 = vpop.f32.mrb[0].mxu0
        %1505 = vmatprep.mubr.bf16.mxu0 0
        %1506 = vmatmul.mubr.bf16.gmra.mrb[0].mxu0 %v1345
        %v1507 = vpop.f32.mrb[0].mxu0
        %v1508 = vadd.f32 %v1323, %v1507
        %v1509 = vpop.f32.mrb[0].mxu0
        %v1510 = vpop.f32.mrb[0].mxu0
        %v1511 = vadd.f32 %v1323, %v1510
        %v1512 = vpop.f32.mrb[0].mxu0
        %1513 = vmatprep.mubr.bf16.mxu0 0
        %1514 = vmatmul.mubr.bf16.gmra.mrb[0].mxu0 %v1348
        %v1515 = vpop.f32.mrb[0].mxu0
        %v1516 = vadd.f32 %v1323, %v1515
        %v1517 = vpop.f32.mrb[0].mxu0
        %v1518 = vpop.f32.mrb[0].mxu0
        %v1519 = vadd.f32 %v1323, %v1518
        %v1520 = vpop.f32.mrb[0].mxu0
        %1521 = vmatprep.mubr.bf16.mxu0 0
        %1522 = vmatmul.mubr.bf16.gmra.mrb[0].mxu0 %v1351
        %v1523 = vpop.f32.mrb[0].mxu0
        %v1524 = vadd.f32 %v1323, %v1523
        %v1525 = vpop.f32.mrb[0].mxu0
        %v1526 = vpop.f32.mrb[0].mxu0
        %v1527 = vadd.f32 %v1323, %v1526
        %v1528 = vpop.f32.mrb[0].mxu0
        %1529 = vmatprep.mubr.bf16.mxu0 0
        %1530 = vmatmul.mubr.bf16.gmra.mrb[0].mxu0 %v1354
        %v1531 = vpop.f32.mrb[0].mxu0
        %v1532 = vadd.f32 %v1323, %v1531
        %v1533 = vpop.f32.mrb[0].mxu0
        %v1534 = vpop.f32.mrb[0].mxu0
        %v1535 = vadd.f32 %v1323, %v1534
        %v1536 = vpop.f32.mrb[0].mxu0
        %1537 = vmatprep.mubr.bf16.mxu0 0
        %1538 = vmatmul.mubr.bf16.gmra.mrb[0].mxu0 %v1357
        %v1539 = vpop.f32.mrb[0].mxu0
        %v1540 = vadd.f32 %v1323, %v1539
        %v1541 = vpop.f32.mrb[0].mxu0
        %v1542 = vpop.f32.mrb[0].mxu0
        %v1543 = vadd.f32 %v1323, %v1542
        %v1544 = vpop.f32.mrb[0].mxu0
        %1545 = vmatprep.mubr.bf16.mxu0 0
        %1546 = vmatmul.mubr.bf16.gmra.mrb[0].mxu0 %v1360
        %v1547 = vpop.f32.mrb[0].mxu0
        %v1548 = vadd.f32 %v1323, %v1547
        %v1549 = vpop.f32.mrb[0].mxu0
        %v1550 = vpop.f32.mrb[0].mxu0
        %v1551 = vadd.f32 %v1323, %v1550
        %v1552 = vpop.f32.mrb[0].mxu0
        %1553 = vmatprep.mubr.bf16.mxu0 0
        %1554 = vmatmul.mubr.bf16.gmra.mrb[0].mxu0 %v1363
        %v1555 = vpop.f32.mrb[0].mxu0
        %v1556 = vadd.f32 %v1323, %v1555
        %v1557 = vpop.f32.mrb[0].mxu0
        %v1558 = vpop.f32.mrb[0].mxu0
        %v1559 = vadd.f32 %v1323, %v1558
        %v1560 = vpop.f32.mrb[0].mxu0
        %1561 = vmatprep.mubr.bf16.mxu0 0
        %1562 = vmatmul.mubr.bf16.gmra.mrb[0].mxu0 %v1366
        %v1563 = vpop.f32.mrb[0].mxu0
        %v1564 = vadd.f32 %v1323, %v1563
        %v1565 = vpop.f32.mrb[0].mxu0
        %v1566 = vpop.f32.mrb[0].mxu0
        %v1567 = vadd.f32 %v1323, %v1566
        %v1568 = vpop.f32.mrb[0].mxu0
        %1569 = vmatprep.mubr.bf16.mxu0 0
        %1570 = vmatmul.mubr.bf16.gmra.mrb[0].mxu0 %v1369
        %v1571 = vpop.f32.mrb[0].mxu0
        %v1572 = vadd.f32 %v1323, %v1571
        %v1573 = vpop.f32.mrb[0].mxu0
        %v1574 = vpop.f32.mrb[0].mxu0
        %v1575 = vadd.f32 %v1323, %v1574
        %v1576 = vpop.f32.mrb[0].mxu0
        %1577 = vmatprep.mubr.bf16.mxu0 0
        %1578 = vmatmul.mubr.bf16.gmra.mrb[0].mxu0 %v1372
        %v1579 = vpop.f32.mrb[0].mxu0
        %v1580 = vadd.f32 %v1323, %v1579
        %v1581 = vpop.f32.mrb[0].mxu0
        %v1582 = vpop.f32.mrb[0].mxu0
        %v1583 = vadd.f32 %v1323, %v1582
        %v1584 = vpop.f32.mrb[0].mxu0
        %1585 = vmatprep.mubr.bf16.mxu0 0
        %1586 = vmatmul.mubr.bf16.gmra.mrb[0].mxu0 %v1375
        %v1587 = vpop.f32.mrb[0].mxu0
        %v1588 = vadd.f32 %v1323, %v1587
        %v1589 = vpop.f32.mrb[0].mxu0
        %v1590 = vpop.f32.mrb[0].mxu0
        %v1591 = vadd.f32 %v1323, %v1590
        %v1592 = vpop.f32.mrb[0].mxu0
        %1593 = vmatprep.mubr.bf16.mxu0 0
        %1594 = vmatmul.mubr.bf16.gmra.mrb[0].mxu0 %v1378
        %v1595 = vpop.f32.mrb[0].mxu0
        %v1596 = vadd.f32 %v1323, %v1595
        %v1597 = vpop.f32.mrb[0].mxu0
        %v1598 = vpop.f32.mrb[0].mxu0
        %v1599 = vadd.f32 %v1323, %v1598
        %v1600 = vpop.f32.mrb[0].mxu0
        %1601 = vmatprep.mubr.bf16.mxu0 0
        %1602 = vmatmul.mubr.bf16.gmra.mrb[0].mxu0 %v1381
        %v1603 = vpop.f32.mrb[0].mxu0
        %v1604 = vadd.f32 %v1323, %v1603
        %v1605 = vpop.f32.mrb[0].mxu0
        %v1606 = vpop.f32.mrb[0].mxu0
        %v1607 = vadd.f32 %v1323, %v1606
        %v1608 = vpop.f32.mrb[0].mxu0
        %1609 = vmatprep.mubr.bf16.mxu0 0
        %1610 = vmatmul.mubr.bf16.gmra.mrb[0].mxu0 %v1384
        %v1611 = vpop.f32.mrb[0].mxu0
        %v1612 = vadd.f32 %v1323, %v1611
        %v1613 = vpop.f32.mrb[0].mxu0
        %v1614 = vpop.f32.mrb[0].mxu0
        %v1615 = vadd.f32 %v1323, %v1614
        %v1616 = vpop.f32.mrb[0].mxu0
        %1617 = vmatprep.mubr.bf16.mxu0 0
        %1618 = vmatmul.mubr.bf16.gmra.mrb[0].mxu0 %v1387
        %v1619 = vpop.f32.mrb[0].mxu0
        %v1620 = vadd.f32 %v1323, %v1619
        %v1621 = vpop.f32.mrb[0].mxu0
        %v1622 = vpop.f32.mrb[0].mxu0
        %v1623 = vadd.f32 %v1323, %v1622
        %v1624 = vpop.f32.mrb[0].mxu0
        %1625 = vmatprep.mubr.bf16.mxu0 0
        %1626 = vmatmul.mubr.bf16.gmra.mrb[0].mxu0 %v1390
        %v1627 = vpop.f32.mrb[0].mxu0
        %v1628 = vadd.f32 %v1323, %v1627
        %v1629 = vpop.f32.mrb[0].mxu0
        %v1630 = vpop.f32.mrb[0].mxu0
        %v1631 = vadd.f32 %v1323, %v1630
        %v1632 = vpop.f32.mrb[0].mxu0
        %1633 = vmatprep.mubr.bf16.mxu0 0
        %1634 = vmatmul.mubr.bf16.gmra.mrb[0].mxu0 %v1393
        %v1635 = vpop.f32.mrb[0].mxu0
        %v1636 = vadd.f32 %v1323, %v1635
        %v1637 = vpop.f32.mrb[0].mxu0
        %v1638 = vpop.f32.mrb[0].mxu0
        %v1639 = vadd.f32 %v1323, %v1638
        %v1640 = vpop.f32.mrb[0].mxu0
        %1641 = vmatprep.mubr.bf16.mxu0 0
        %1642 = vmatmul.mubr.bf16.gmra.mrb[0].mxu0 %v1396
        %v1643 = vpop.f32.mrb[0].mxu0
        %v1644 = vadd.f32 %v1323, %v1643
        %v1645 = vpop.f32.mrb[0].mxu0
        %v1646 = vpop.f32.mrb[0].mxu0
        %v1647 = vadd.f32 %v1323, %v1646
        %v1648 = vpop.f32.mrb[0].mxu0
        %1649 = vmatprep.mubr.bf16.mxu0 0
        %1650 = vmatmul.mubr.bf16.gmra.mrb[0].mxu0 %v1399
        %v1651 = vpop.f32.mrb[0].mxu0
        %v1652 = vadd.f32 %v1323, %v1651
        %v1653 = vpop.f32.mrb[0].mxu0
        %v1654 = vpop.f32.mrb[0].mxu0
        %v1655 = vadd.f32 %v1323, %v1654
        %v1656 = vpop.f32.mrb[0].mxu0
        %1657 = vmatprep.mubr.bf16.mxu0 0
        %1658 = vmatmul.mubr.bf16.gmra.mrb[0].mxu0 %v1402
        %v1659 = vpop.f32.mrb[0].mxu0
        %v1660 = vadd.f32 %v1323, %v1659
        %v1661 = vpop.f32.mrb[0].mxu0
        %v1662 = vpop.f32.mrb[0].mxu0
        %v1663 = vadd.f32 %v1323, %v1662
        %v1664 = vpop.f32.mrb[0].mxu0
        %1665 = vmatprep.mubr.bf16.mxu0 0
        %1666 = vmatmul.mubr.bf16.gmra.mrb[0].mxu0 %v1405
        %v1667 = vpop.f32.mrb[0].mxu0
        %v1668 = vadd.f32 %v1323, %v1667
        %v1669 = vpop.f32.mrb[0].mxu0
        %v1670 = vpop.f32.mrb[0].mxu0
        %v1671 = vadd.f32 %v1323, %v1670
        %v1672 = vpop.f32.mrb[0].mxu0
        %1673 = vmatprep.mubr.bf16.mxu0 0
        %1674 = vmatmul.mubr.bf16.gmra.mrb[0].mxu0 %v1408
        %v1675 = vpop.f32.mrb[0].mxu0
        %v1676 = vadd.f32 %v1323, %v1675
        %v1677 = vpop.f32.mrb[0].mxu0
        %v1678 = vpop.f32.mrb[0].mxu0
        %v1679 = vadd.f32 %v1323, %v1678
        %v1680 = vpop.f32.mrb[0].mxu0
        %1681 = vmatprep.mubr.bf16.mxu0 0
        %1682 = vmatmul.mubr.bf16.gmra.mrb[0].mxu0 %v1411
        %v1683 = vpop.f32.mrb[0].mxu0
        %v1684 = vadd.f32 %v1323, %v1683
        %v1685 = vpop.f32.mrb[0].mxu0
        %v1686 = vpop.f32.mrb[0].mxu0
        %v1687 = vadd.f32 %v1323, %v1686
        %v1688 = vpop.f32.mrb[0].mxu0
        %1689 = vmatprep.mubr.bf16.mxu0 0
        %1690 = vmatmul.mubr.bf16.gmra.mrb[0].mxu0 %v1414
        %v1691 = vpop.f32.mrb[0].mxu0
        %v1692 = vadd.f32 %v1323, %v1691
        %v1693 = vpop.f32.mrb[0].mxu0
        %v1694 = vpop.f32.mrb[0].mxu0
        %v1695 = vadd.f32 %v1323, %v1694
        %v1696 = vpop.f32.mrb[0].mxu0
        %1697 = vmatprep.mubr.bf16.mxu0 0
        %1698 = vmatmul.mubr.bf16.gmra.mrb[0].mxu0 %v1417
        %v1699 = vpop.f32.mrb[0].mxu0
        %v1700 = vadd.f32 %v1323, %v1699
        %v1701 = vpop.f32.mrb[0].mxu0
        %v1702 = vpop.f32.mrb[0].mxu0
        %v1703 = vadd.f32 %v1323, %v1702
        %v1704 = vpop.f32.mrb[0].mxu0
        %1705 = vmatprep.mubr.bf16.mxu0 0
        %1706 = vmatmul.mubr.bf16.gmra.mrb[0].mxu0 %v1420
        %v1707 = vpop.f32.mrb[0].mxu0
        %v1708 = vadd.f32 %v1323, %v1707
        %v1709 = vpop.f32.mrb[0].mxu0
        %v1710 = vpop.f32.mrb[0].mxu0
        %v1711 = vadd.f32 %v1323, %v1710
        %v1712 = vpop.f32.mrb[0].mxu0
        %1713 = vdwg.mxu0
        %v1714 = vmax.f32 %v1460, 0.0
        %v1715 = vmax.f32 %v1463, 0.0
        %v1716 = vmax.f32 %v1468, 0.0
        %v1717 = vmax.f32 %v1471, 0.0
        %v1718 = vmax.f32 %v1476, 0.0
        %v1719 = vmax.f32 %v1479, 0.0
        %v1720 = vmax.f32 %v1484, 0.0
        %v1721 = vmax.f32 %v1487, 0.0
        %v1722 = vmax.f32 %v1492, 0.0
        %v1723 = vmax.f32 %v1495, 0.0
        %v1724 = vmax.f32 %v1500, 0.0
        %v1725 = vmax.f32 %v1503, 0.0
        %v1726 = vmax.f32 %v1508, 0.0
        %v1727 = vmax.f32 %v1511, 0.0
        %v1728 = vmax.f32 %v1516, 0.0
        %v1729 = vmax.f32 %v1519, 0.0
        %v1730 = vmax.f32 %v1524, 0.0
        %v1731 = vmax.f32 %v1527, 0.0
        %v1732 = vmax.f32 %v1532, 0.0
        %v1733 = vmax.f32 %v1535, 0.0
        %v1734 = vmax.f32 %v1540, 0.0
        %v1735 = vmax.f32 %v1543, 0.0
        %v1736 = vmax.f32 %v1548, 0.0
        %v1737 = vmax.f32 %v1551, 0.0
        %v1738 = vmax.f32 %v1556, 0.0
        %v1739 = vmax.f32 %v1559, 0.0
        %v1740 = vmax.f32 %v1564, 0.0
        %v1741 = vmax.f32 %v1567, 0.0
        %v1742 = vmax.f32 %v1572, 0.0
        %v1743 = vmax.f32 %v1575, 0.0
        %v1744 = vmax.f32 %v1580, 0.0
        %v1745 = vmax.f32 %v1583, 0.0
        %v1746 = vmax.f32 %v1588, 0.0
        %v1747 = vmax.f32 %v1591, 0.0
        %v1748 = vmax.f32 %v1596, 0.0
        %v1749 = vmax.f32 %v1599, 0.0
        %v1750 = vmax.f32 %v1604, 0.0
        %v1751 = vmax.f32 %v1607, 0.0
        %v1752 = vmax.f32 %v1612, 0.0
        %v1753 = vmax.f32 %v1615, 0.0
        %v1754 = vmax.f32 %v1620, 0.0
        %v1755 = vmax.f32 %v1623, 0.0
        %v1756 = vmax.f32 %v1628, 0.0
        %v1757 = vmax.f32 %v1631, 0.0
        %v1758 = vmax.f32 %v1636, 0.0
        %v1759 = vmax.f32 %v1639, 0.0
        %v1760 = vmax.f32 %v1644, 0.0
        %v1761 = vmax.f32 %v1647, 0.0
        %v1762 = vmax.f32 %v1652, 0.0
        %v1763 = vmax.f32 %v1655, 0.0
        %v1764 = vmax.f32 %v1660, 0.0
        %v1765 = vmax.f32 %v1663, 0.0
        %v1766 = vmax.f32 %v1668, 0.0
        %v1767 = vmax.f32 %v1671, 0.0
        %v1768 = vmax.f32 %v1676, 0.0
        %v1769 = vmax.f32 %v1679, 0.0
        %v1770 = vmax.f32 %v1684, 0.0
        %v1771 = vmax.f32 %v1687, 0.0
        %v1772 = vmax.f32 %v1692, 0.0
        %v1773 = vmax.f32 %v1695, 0.0
        %v1774 = vmax.f32 %v1700, 0.0
        %v1775 = vmax.f32 %v1703, 0.0
        %v1776 = vmax.f32 %v1708, 0.0
        %v1777 = vmax.f32 %v1711, 0.0
        %v1778 = vrot.slane %v1714, 7
        %v1779 = vrot.slane %v1715, 7
        %v1780 = vrot.slane %v1716, 7
        %v1781 = vrot.slane %v1717, 7
        %v1782 = vrot.slane %v1718, 7
        %v1783 = vrot.slane %v1719, 7
        %v1784 = vrot.slane %v1720, 7
        %v1785 = vrot.slane %v1721, 7
        %v1786 = vrot.slane %v1722, 7
        %v1787 = vrot.slane %v1723, 7
        %v1788 = vrot.slane %v1724, 7
        %v1789 = vrot.slane %v1725, 7
        %v1790 = vrot.slane %v1726, 7
        %v1791 = vrot.slane %v1727, 7
        %v1792 = vrot.slane %v1728, 7
        %v1793 = vrot.slane %v1729, 7
        %v1794 = vrot.slane %v1730, 7
        %v1795 = vrot.slane %v1731, 7
        %v1796 = vrot.slane %v1732, 7
        %v1797 = vrot.slane %v1733, 7
        %v1798 = vrot.slane %v1734, 7
        %v1799 = vrot.slane %v1735, 7
        %v1800 = vrot.slane %v1736, 7
        %v1801 = vrot.slane %v1737, 7
        %v1802 = vrot.slane %v1738, 7
        %v1803 = vrot.slane %v1739, 7
        %v1804 = vrot.slane %v1740, 7
        %v1805 = vrot.slane %v1741, 7
        %v1806 = vrot.slane %v1742, 7
        %v1807 = vrot.slane %v1743, 7
        %v1808 = vrot.slane %v1744, 7
        %v1809 = vrot.slane %v1745, 7
        %v1810 = vrot.slane %v1746, 7
        %v1811 = vrot.slane %v1747, 7
        %v1812 = vrot.slane %v1748, 7
        %v1813 = vrot.slane %v1749, 7
        %v1814 = vrot.slane %v1750, 7
        %v1815 = vrot.slane %v1751, 7
        %v1816 = vrot.slane %v1752, 7
        %v1817 = vrot.slane %v1753, 7
        %v1818 = vrot.slane %v1754, 7
        %v1819 = vrot.slane %v1755, 7
        %v1820 = vrot.slane %v1756, 7
        %v1821 = vrot.slane %v1757, 7
        %v1822 = vrot.slane %v1758, 7
        %v1823 = vrot.slane %v1759, 7
        %v1824 = vrot.slane %v1760, 7
        %v1825 = vrot.slane %v1761, 7
        %v1826 = vrot.slane %v1762, 7
        %v1827 = vrot.slane %v1763, 7
        %v1828 = vrot.slane %v1764, 7
        %v1829 = vrot.slane %v1765, 7
        %v1830 = vrot.slane %v1766, 7
        %v1831 = vrot.slane %v1767, 7
        %v1832 = vrot.slane %v1768, 7
        %v1833 = vrot.slane %v1769, 7
        %v1834 = vrot.slane %v1770, 7
        %v1835 = vrot.slane %v1771, 7
        %v1836 = vrot.slane %v1772, 7
        %v1837 = vrot.slane %v1773, 7
        %v1838 = vrot.slane %v1774, 7
        %v1839 = vrot.slane %v1775, 7
        %v1840 = vrot.slane %v1776, 7
        %v1841 = vrot.slane %v1777, 7
        %v1842 = vlaneseq
        %v1843 = vshrl.u32 %v1842, 7
        %vm1844 = vcmp.lt.s32.totalorder %v1843, 1
        %v1845 = vsel %vm1844, %v1840, %v1841
        %v1846 = vsel %vm1844, %v1839, %v1840
        %v1847 = vsel %vm1844, %v1838, %v1839
        %v1848 = vsel %vm1844, %v1837, %v1838
        %v1849 = vsel %vm1844, %v1836, %v1837
        %v1850 = vsel %vm1844, %v1835, %v1836
        %v1851 = vsel %vm1844, %v1834, %v1835
        %v1852 = vsel %vm1844, %v1833, %v1834
        %v1853 = vsel %vm1844, %v1832, %v1833
        %v1854 = vsel %vm1844, %v1831, %v1832
        %v1855 = vsel %vm1844, %v1830, %v1831
        %v1856 = vsel %vm1844, %v1829, %v1830
        %v1857 = vsel %vm1844, %v1828, %v1829
        %v1858 = vsel %vm1844, %v1827, %v1828
        %v1859 = vsel %vm1844, %v1826, %v1827
        %v1860 = vsel %vm1844, %v1825, %v1826
        %v1861 = vsel %vm1844, %v1824, %v1825
        %v1862 = vsel %vm1844, %v1823, %v1824
        %v1863 = vsel %vm1844, %v1822, %v1823
        %v1864 = vsel %vm1844, %v1821, %v1822
        %v1865 = vsel %vm1844, %v1820, %v1821
        %v1866 = vsel %vm1844, %v1819, %v1820
        %v1867 = vsel %vm1844, %v1818, %v1819
        %v1868 = vsel %vm1844, %v1817, %v1818
        %v1869 = vsel %vm1844, %v1816, %v1817
        %v1870 = vsel %vm1844, %v1815, %v1816
        %v1871 = vsel %vm1844, %v1814, %v1815
        %v1872 = vsel %vm1844, %v1813, %v1814
        %v1873 = vsel %vm1844, %v1812, %v1813
        %v1874 = vsel %vm1844, %v1811, %v1812
        %v1875 = vsel %vm1844, %v1810, %v1811
        %v1876 = vsel %vm1844, %v1809, %v1810
        %v1877 = vsel %vm1844, %v1808, %v1809
        %v1878 = vsel %vm1844, %v1807, %v1808
        %v1879 = vsel %vm1844, %v1806, %v1807
        %v1880 = vsel %vm1844, %v1805, %v1806
        %v1881 = vsel %vm1844, %v1804, %v1805
        %v1882 = vsel %vm1844, %v1803, %v1804
        %v1883 = vsel %vm1844, %v1802, %v1803
        %v1884 = vsel %vm1844, %v1801, %v1802
        %v1885 = vsel %vm1844, %v1800, %v1801
        %v1886 = vsel %vm1844, %v1799, %v1800
        %v1887 = vsel %vm1844, %v1798, %v1799
        %v1888 = vsel %vm1844, %v1797, %v1798
        %v1889 = vsel %vm1844, %v1796, %v1797
        %v1890 = vsel %vm1844, %v1795, %v1796
        %v1891 = vsel %vm1844, %v1794, %v1795
        %v1892 = vsel %vm1844, %v1793, %v1794
        %v1893 = vsel %vm1844, %v1792, %v1793
        %v1894 = vsel %vm1844, %v1791, %v1792
        %v1895 = vsel %vm1844, %v1790, %v1791
        %v1896 = vsel %vm1844, %v1789, %v1790
        %v1897 = vsel %vm1844, %v1788, %v1789
        %v1898 = vsel %vm1844, %v1787, %v1788
        %v1899 = vsel %vm1844, %v1786, %v1787
        %v1900 = vsel %vm1844, %v1785, %v1786
        %v1901 = vsel %vm1844, %v1784, %v1785
        %v1902 = vsel %vm1844, %v1783, %v1784
        %v1903 = vsel %vm1844, %v1782, %v1783
        %v1904 = vsel %vm1844, %v1781, %v1782
        %v1905 = vsel %vm1844, %v1780, %v1781
        %v1906 = vsel %vm1844, %v1779, %v1780
        %v1907 = vsel %vm1844, %v1778, %v1779
        %v1908 = vsel %vm1844, %v1841, %v1778
        %v1909 = vrot.slane %v1714, 1
        %v1910 = vrot.slane %v1715, 1
        %v1911 = vrot.slane %v1716, 1
        %v1912 = vrot.slane %v1717, 1
        %v1913 = vrot.slane %v1718, 1
        %v1914 = vrot.slane %v1719, 1
        %v1915 = vrot.slane %v1720, 1
        %v1916 = vrot.slane %v1721, 1
        %v1917 = vrot.slane %v1722, 1
        %v1918 = vrot.slane %v1723, 1
        %v1919 = vrot.slane %v1724, 1
        %v1920 = vrot.slane %v1725, 1
        %v1921 = vrot.slane %v1726, 1
        %v1922 = vrot.slane %v1727, 1
        %v1923 = vrot.slane %v1728, 1
        %v1924 = vrot.slane %v1729, 1
        %v1925 = vrot.slane %v1730, 1
        %v1926 = vrot.slane %v1731, 1
        %v1927 = vrot.slane %v1732, 1
        %v1928 = vrot.slane %v1733, 1
        %v1929 = vrot.slane %v1734, 1
        %v1930 = vrot.slane %v1735, 1
        %v1931 = vrot.slane %v1736, 1
        %v1932 = vrot.slane %v1737, 1
        %v1933 = vrot.slane %v1738, 1
        %v1934 = vrot.slane %v1739, 1
        %v1935 = vrot.slane %v1740, 1
        %v1936 = vrot.slane %v1741, 1
        %v1937 = vrot.slane %v1742, 1
        %v1938 = vrot.slane %v1743, 1
        %v1939 = vrot.slane %v1744, 1
        %v1940 = vrot.slane %v1745, 1
        %v1941 = vrot.slane %v1746, 1
        %v1942 = vrot.slane %v1747, 1
        %v1943 = vrot.slane %v1748, 1
        %v1944 = vrot.slane %v1749, 1
        %v1945 = vrot.slane %v1750, 1
        %v1946 = vrot.slane %v1751, 1
        %v1947 = vrot.slane %v1752, 1
        %v1948 = vrot.slane %v1753, 1
        %v1949 = vrot.slane %v1754, 1
        %v1950 = vrot.slane %v1755, 1
        %v1951 = vrot.slane %v1756, 1
        %v1952 = vrot.slane %v1757, 1
        %v1953 = vrot.slane %v1758, 1
        %v1954 = vrot.slane %v1759, 1
        %v1955 = vrot.slane %v1760, 1
        %v1956 = vrot.slane %v1761, 1
        %v1957 = vrot.slane %v1762, 1
        %v1958 = vrot.slane %v1763, 1
        %v1959 = vrot.slane %v1764, 1
        %v1960 = vrot.slane %v1765, 1
        %v1961 = vrot.slane %v1766, 1
        %v1962 = vrot.slane %v1767, 1
        %v1963 = vrot.slane %v1768, 1
        %v1964 = vrot.slane %v1769, 1
        %v1965 = vrot.slane %v1770, 1
        %v1966 = vrot.slane %v1771, 1
        %v1967 = vrot.slane %v1772, 1
        %v1968 = vrot.slane %v1773, 1
        %v1969 = vrot.slane %v1774, 1
        %v1970 = vrot.slane %v1775, 1
        %v1971 = vrot.slane %v1776, 1
        %v1972 = vrot.slane %v1777, 1
        %vm1973 = vcmp.lt.s32.totalorder %v1843, 7
        %v1974 = vsel %vm1973, %v1971, %v1972
        %v1975 = vsel %vm1973, %v1970, %v1971
        %v1976 = vsel %vm1973, %v1969, %v1970
        %v1977 = vsel %vm1973, %v1968, %v1969
        %v1978 = vsel %vm1973, %v1967, %v1968
        %v1979 = vsel %vm1973, %v1966, %v1967
        %v1980 = vsel %vm1973, %v1965, %v1966
        %v1981 = vsel %vm1973, %v1964, %v1965
        %v1982 = vsel %vm1973, %v1963, %v1964
        %v1983 = vsel %vm1973, %v1962, %v1963
        %v1984 = vsel %vm1973, %v1961, %v1962
        %v1985 = vsel %vm1973, %v1960, %v1961
        %v1986 = vsel %vm1973, %v1959, %v1960
        %v1987 = vsel %vm1973, %v1958, %v1959
        %v1988 = vsel %vm1973, %v1957, %v1958
        %v1989 = vsel %vm1973, %v1956, %v1957
        %v1990 = vsel %vm1973, %v1955, %v1956
        %v1991 = vsel %vm1973, %v1954, %v1955
        %v1992 = vsel %vm1973, %v1953, %v1954
        %v1993 = vsel %vm1973, %v1952, %v1953
        %v1994 = vsel %vm1973, %v1951, %v1952
        %v1995 = vsel %vm1973, %v1950, %v1951
        %v1996 = vsel %vm1973, %v1949, %v1950
        %v1997 = vsel %vm1973, %v1948, %v1949
        %v1998 = vsel %vm1973, %v1947, %v1948
        %v1999 = vsel %vm1973, %v1946, %v1947
        %v2000 = vsel %vm1973, %v1945, %v1946
        %v2001 = vsel %vm1973, %v1944, %v1945
        %v2002 = vsel %vm1973, %v1943, %v1944
        %v2003 = vsel %vm1973, %v1942, %v1943
        %v2004 = vsel %vm1973, %v1941, %v1942
        %v2005 = vsel %vm1973, %v1940, %v1941
        %v2006 = vsel %vm1973, %v1939, %v1940
        %v2007 = vsel %vm1973, %v1938, %v1939
        %v2008 = vsel %vm1973, %v1937, %v1938
        %v2009 = vsel %vm1973, %v1936, %v1937
        %v2010 = vsel %vm1973, %v1935, %v1936
        %v2011 = vsel %vm1973, %v1934, %v1935
        %v2012 = vsel %vm1973, %v1933, %v1934
        %v2013 = vsel %vm1973, %v1932, %v1933
        %v2014 = vsel %vm1973, %v1931, %v1932
        %v2015 = vsel %vm1973, %v1930, %v1931
        %v2016 = vsel %vm1973, %v1929, %v1930
        %v2017 = vsel %vm1973, %v1928, %v1929
        %v2018 = vsel %vm1973, %v1927, %v1928
        %v2019 = vsel %vm1973, %v1926, %v1927
        %v2020 = vsel %vm1973, %v1925, %v1926
        %v2021 = vsel %vm1973, %v1924, %v1925
        %v2022 = vsel %vm1973, %v1923, %v1924
        %v2023 = vsel %vm1973, %v1922, %v1923
        %v2024 = vsel %vm1973, %v1921, %v1922
        %v2025 = vsel %vm1973, %v1920, %v1921
        %v2026 = vsel %vm1973, %v1919, %v1920
        %v2027 = vsel %vm1973, %v1918, %v1919
        %v2028 = vsel %vm1973, %v1917, %v1918
        %v2029 = vsel %vm1973, %v1916, %v1917
        %v2030 = vsel %vm1973, %v1915, %v1916
        %v2031 = vsel %vm1973, %v1914, %v1915
        %v2032 = vsel %vm1973, %v1913, %v1914
        %v2033 = vsel %vm1973, %v1912, %v1913
        %v2034 = vsel %vm1973, %v1911, %v1912
        %v2035 = vsel %vm1973, %v1910, %v1911
        %v2036 = vsel %vm1973, %v1909, %v1910
        %v2037 = vsel %vm1973, %v1972, %v1909
        %v2038 = vadd.s32 %v1843, 8
        %v2039 = vadd.s32 %v1843, 16
        %v2040 = vadd.s32 %v1843, 24
        %v2041 = vadd.s32 %v1843, 32
        %v2042 = vadd.s32 %v1843, 40
        %v2043 = vadd.s32 %v1843, 48
        %v2044 = vadd.s32 %v1843, 56
        %v2045 = vadd.s32 %v1843, 64
        %v2046 = vadd.s32 %v1843, 72
        %v2047 = vadd.s32 %v1843, 80
        %v2048 = vadd.s32 %v1843, 88
        %v2049 = vadd.s32 %v1843, 96
        %v2050 = vadd.s32 %v1843, 104
        %v2051 = vadd.s32 %v1843, 112
        %v2052 = vadd.s32 %v1843, 120
        %v2053 = vadd.s32 %v1843, 128
        %v2054 = vadd.s32 %v1843, 136
        %v2055 = vadd.s32 %v1843, 144
        %v2056 = vadd.s32 %v1843, 152
        %v2057 = vadd.s32 %v1843, 160
        %v2058 = vadd.s32 %v1843, 168
        %v2059 = vadd.s32 %v1843, 176
        %v2060 = vadd.s32 %v1843, 184
        %v2061 = vadd.s32 %v1843, 192
        %v2062 = vadd.s32 %v1843, 200
        %v2063 = vadd.s32 %v1843, 208
        %v2064 = vadd.s32 %v1843, 216
        %v2065 = vadd.s32 %v1843, 224
        %v2066 = vadd.s32 %v1843, 232
        %v2067 = vadd.s32 %v1843, 240
        %v2068 = vadd.s32 %v1843, 248
        %v2069 = vadd.s32 %v1843, 256
        %v2070 = vadd.s32 %v1843, 264
        %v2071 = vadd.s32 %v1843, 272
        %v2072 = vadd.s32 %v1843, 280
        %v2073 = vadd.s32 %v1843, 288
        %v2074 = vadd.s32 %v1843, 296
        %v2075 = vadd.s32 %v1843, 304
        %v2076 = vadd.s32 %v1843, 312
        %v2077 = vadd.s32 %v1843, 320
        %v2078 = vadd.s32 %v1843, 328
        %v2079 = vadd.s32 %v1843, 336
        %v2080 = vadd.s32 %v1843, 344
        %v2081 = vadd.s32 %v1843, 352
        %v2082 = vadd.s32 %v1843, 360
        %v2083 = vadd.s32 %v1843, 368
        %v2084 = vadd.s32 %v1843, 376
        %v2085 = vadd.s32 %v1843, 384
        %v2086 = vadd.s32 %v1843, 392
        %v2087 = vadd.s32 %v1843, 400
        %v2088 = vadd.s32 %v1843, 408
        %v2089 = vadd.s32 %v1843, 416
        %v2090 = vadd.s32 %v1843, 424
        %v2091 = vadd.s32 %v1843, 432
        %v2092 = vadd.s32 %v1843, 440
        %v2093 = vadd.s32 %v1843, 448
        %v2094 = vadd.s32 %v1843, 456
        %v2095 = vadd.s32 %v1843, 464
        %v2096 = vadd.s32 %v1843, 472
        %v2097 = vadd.s32 %v1843, 480
        %v2098 = vadd.s32 %v1843, 488
        %v2099 = vadd.s32 %v1843, 496
        %v2100 = vadd.s32 %v1843, 504
        %v2101 = vand.u32 %v1843, 63
        %v2102 = vand.u32 %v2038, 63
        %v2103 = vand.u32 %v2039, 63
        %v2104 = vand.u32 %v2040, 63
        %v2105 = vand.u32 %v2041, 63
        %v2106 = vand.u32 %v2042, 63
        %v2107 = vand.u32 %v2043, 63
        %v2108 = vand.u32 %v2044, 63
        %v2109 = vand.u32 %v2045, 63
        %v2110 = vand.u32 %v2046, 63
        %v2111 = vand.u32 %v2047, 63
        %v2112 = vand.u32 %v2048, 63
        %v2113 = vand.u32 %v2049, 63
        %v2114 = vand.u32 %v2050, 63
        %v2115 = vand.u32 %v2051, 63
        %v2116 = vand.u32 %v2052, 63
        %v2117 = vand.u32 %v2053, 63
        %v2118 = vand.u32 %v2054, 63
        %v2119 = vand.u32 %v2055, 63
        %v2120 = vand.u32 %v2056, 63
        %v2121 = vand.u32 %v2057, 63
        %v2122 = vand.u32 %v2058, 63
        %v2123 = vand.u32 %v2059, 63
        %v2124 = vand.u32 %v2060, 63
        %v2125 = vand.u32 %v2061, 63
        %v2126 = vand.u32 %v2062, 63
        %v2127 = vand.u32 %v2063, 63
        %v2128 = vand.u32 %v2064, 63
        %v2129 = vand.u32 %v2065, 63
        %v2130 = vand.u32 %v2066, 63
        %v2131 = vand.u32 %v2067, 63
        %v2132 = vand.u32 %v2068, 63
        %v2133 = vand.u32 %v2069, 63
        %v2134 = vand.u32 %v2070, 63
        %v2135 = vand.u32 %v2071, 63
        %v2136 = vand.u32 %v2072, 63
        %v2137 = vand.u32 %v2073, 63
        %v2138 = vand.u32 %v2074, 63
        %v2139 = vand.u32 %v2075, 63
        %v2140 = vand.u32 %v2076, 63
        %v2141 = vand.u32 %v2077, 63
        %v2142 = vand.u32 %v2078, 63
        %v2143 = vand.u32 %v2079, 63
        %v2144 = vand.u32 %v2080, 63
        %v2145 = vand.u32 %v2081, 63
        %v2146 = vand.u32 %v2082, 63
        %v2147 = vand.u32 %v2083, 63
        %v2148 = vand.u32 %v2084, 63
        %v2149 = vand.u32 %v2085, 63
        %v2150 = vand.u32 %v2086, 63
        %v2151 = vand.u32 %v2087, 63
        %v2152 = vand.u32 %v2088, 63
        %v2153 = vand.u32 %v2089, 63
        %v2154 = vand.u32 %v2090, 63
        %v2155 = vand.u32 %v2091, 63
        %v2156 = vand.u32 %v2092, 63
        %v2157 = vand.u32 %v2093, 63
        %v2158 = vand.u32 %v2094, 63
        %v2159 = vand.u32 %v2095, 63
        %v2160 = vand.u32 %v2096, 63
        %v2161 = vand.u32 %v2097, 63
        %v2162 = vand.u32 %v2098, 63
        %v2163 = vand.u32 %v2099, 63
        %v2164 = vand.u32 %v2100, 63
        %vm2165 = vcmp.eq.s32.totalorder %v2101, 0
        %vm2166 = vcmp.eq.s32.totalorder %v2102, 0
        %vm2167 = vcmp.eq.s32.totalorder %v2103, 0
        %vm2168 = vcmp.eq.s32.totalorder %v2104, 0
        %vm2169 = vcmp.eq.s32.totalorder %v2105, 0
        %vm2170 = vcmp.eq.s32.totalorder %v2106, 0
        %vm2171 = vcmp.eq.s32.totalorder %v2107, 0
        %vm2172 = vcmp.eq.s32.totalorder %v2108, 0
        %vm2173 = vcmp.eq.s32.totalorder %v2109, 0
        %vm2174 = vcmp.eq.s32.totalorder %v2110, 0
        %vm2175 = vcmp.eq.s32.totalorder %v2111, 0
        %vm2176 = vcmp.eq.s32.totalorder %v2112, 0
        %vm2177 = vcmp.eq.s32.totalorder %v2113, 0
        %vm2178 = vcmp.eq.s32.totalorder %v2114, 0
        %vm2179 = vcmp.eq.s32.totalorder %v2115, 0
        %vm2180 = vcmp.eq.s32.totalorder %v2116, 0
        %vm2181 = vcmp.eq.s32.totalorder %v2117, 0
        %vm2182 = vcmp.eq.s32.totalorder %v2118, 0
        %vm2183 = vcmp.eq.s32.totalorder %v2119, 0
        %vm2184 = vcmp.eq.s32.totalorder %v2120, 0
        %vm2185 = vcmp.eq.s32.totalorder %v2121, 0
        %vm2186 = vcmp.eq.s32.totalorder %v2122, 0
        %vm2187 = vcmp.eq.s32.totalorder %v2123, 0
        %vm2188 = vcmp.eq.s32.totalorder %v2124, 0
        %vm2189 = vcmp.eq.s32.totalorder %v2125, 0
        %vm2190 = vcmp.eq.s32.totalorder %v2126, 0
        %vm2191 = vcmp.eq.s32.totalorder %v2127, 0
        %vm2192 = vcmp.eq.s32.totalorder %v2128, 0
        %vm2193 = vcmp.eq.s32.totalorder %v2129, 0
        %vm2194 = vcmp.eq.s32.totalorder %v2130, 0
        %vm2195 = vcmp.eq.s32.totalorder %v2131, 0
        %vm2196 = vcmp.eq.s32.totalorder %v2132, 0
        %vm2197 = vcmp.eq.s32.totalorder %v2133, 0
        %vm2198 = vcmp.eq.s32.totalorder %v2134, 0
        %vm2199 = vcmp.eq.s32.totalorder %v2135, 0
        %vm2200 = vcmp.eq.s32.totalorder %v2136, 0
        %vm2201 = vcmp.eq.s32.totalorder %v2137, 0
        %vm2202 = vcmp.eq.s32.totalorder %v2138, 0
        %vm2203 = vcmp.eq.s32.totalorder %v2139, 0
        %vm2204 = vcmp.eq.s32.totalorder %v2140, 0
        %vm2205 = vcmp.eq.s32.totalorder %v2141, 0
        %vm2206 = vcmp.eq.s32.totalorder %v2142, 0
        %vm2207 = vcmp.eq.s32.totalorder %v2143, 0
        %vm2208 = vcmp.eq.s32.totalorder %v2144, 0
        %vm2209 = vcmp.eq.s32.totalorder %v2145, 0
        %vm2210 = vcmp.eq.s32.totalorder %v2146, 0
        %vm2211 = vcmp.eq.s32.totalorder %v2147, 0
        %vm2212 = vcmp.eq.s32.totalorder %v2148, 0
        %vm2213 = vcmp.eq.s32.totalorder %v2149, 0
        %vm2214 = vcmp.eq.s32.totalorder %v2150, 0
        %vm2215 = vcmp.eq.s32.totalorder %v2151, 0
        %vm2216 = vcmp.eq.s32.totalorder %v2152, 0
        %vm2217 = vcmp.eq.s32.totalorder %v2153, 0
        %vm2218 = vcmp.eq.s32.totalorder %v2154, 0
        %vm2219 = vcmp.eq.s32.totalorder %v2155, 0
        %vm2220 = vcmp.eq.s32.totalorder %v2156, 0
        %vm2221 = vcmp.eq.s32.totalorder %v2157, 0
        %vm2222 = vcmp.eq.s32.totalorder %v2158, 0
        %vm2223 = vcmp.eq.s32.totalorder %v2159, 0
        %vm2224 = vcmp.eq.s32.totalorder %v2160, 0
        %vm2225 = vcmp.eq.s32.totalorder %v2161, 0
        %vm2226 = vcmp.eq.s32.totalorder %v2162, 0
        %vm2227 = vcmp.eq.s32.totalorder %v2163, 0
        %vm2228 = vcmp.eq.s32.totalorder %v2164, 0
        %v2229 = vsel %vm2165, 1, 0
        %v2230 = vsel %vm2166, 1, 0
        %v2231 = vsel %vm2167, 1, 0
        %v2232 = vsel %vm2168, 1, 0
        %v2233 = vsel %vm2169, 1, 0
        %v2234 = vsel %vm2170, 1, 0
        %v2235 = vsel %vm2171, 1, 0
        %v2236 = vsel %vm2172, 1, 0
        %v2237 = vsel %vm2173, 1, 0
        %v2238 = vsel %vm2174, 1, 0
        %v2239 = vsel %vm2175, 1, 0
        %v2240 = vsel %vm2176, 1, 0
        %v2241 = vsel %vm2177, 1, 0
        %v2242 = vsel %vm2178, 1, 0
        %v2243 = vsel %vm2179, 1, 0
        %v2244 = vsel %vm2180, 1, 0
        %v2245 = vsel %vm2181, 1, 0
        %v2246 = vsel %vm2182, 1, 0
        %v2247 = vsel %vm2183, 1, 0
        %v2248 = vsel %vm2184, 1, 0
        %v2249 = vsel %vm2185, 1, 0
        %v2250 = vsel %vm2186, 1, 0
        %v2251 = vsel %vm2187, 1, 0
        %v2252 = vsel %vm2188, 1, 0
        %v2253 = vsel %vm2189, 1, 0
        %v2254 = vsel %vm2190, 1, 0
        %v2255 = vsel %vm2191, 1, 0
        %v2256 = vsel %vm2192, 1, 0
        %v2257 = vsel %vm2193, 1, 0
        %v2258 = vsel %vm2194, 1, 0
        %v2259 = vsel %vm2195, 1, 0
        %v2260 = vsel %vm2196, 1, 0
        %v2261 = vsel %vm2197, 1, 0
        %v2262 = vsel %vm2198, 1, 0
        %v2263 = vsel %vm2199, 1, 0
        %v2264 = vsel %vm2200, 1, 0
        %v2265 = vsel %vm2201, 1, 0
        %v2266 = vsel %vm2202, 1, 0
        %v2267 = vsel %vm2203, 1, 0
        %v2268 = vsel %vm2204, 1, 0
        %v2269 = vsel %vm2205, 1, 0
        %v2270 = vsel %vm2206, 1, 0
        %v2271 = vsel %vm2207, 1, 0
        %v2272 = vsel %vm2208, 1, 0
        %v2273 = vsel %vm2209, 1, 0
        %v2274 = vsel %vm2210, 1, 0
        %v2275 = vsel %vm2211, 1, 0
        %v2276 = vsel %vm2212, 1, 0
        %v2277 = vsel %vm2213, 1, 0
        %v2278 = vsel %vm2214, 1, 0
        %v2279 = vsel %vm2215, 1, 0
        %v2280 = vsel %vm2216, 1, 0
        %v2281 = vsel %vm2217, 1, 0
        %v2282 = vsel %vm2218, 1, 0
        %v2283 = vsel %vm2219, 1, 0
        %v2284 = vsel %vm2220, 1, 0
        %v2285 = vsel %vm2221, 1, 0
        %v2286 = vsel %vm2222, 1, 0
        %v2287 = vsel %vm2223, 1, 0
        %v2288 = vsel %vm2224, 1, 0
        %v2289 = vsel %vm2225, 1, 0
        %v2290 = vsel %vm2226, 1, 0
        %v2291 = vsel %vm2227, 1, 0
        %v2292 = vsel %vm2228, 1, 0
        %vm2293 = vcmp.eq.s32.totalorder %v2229, 1
        %vm2294 = vcmp.eq.s32.totalorder %v2230, 1
        %vm2295 = vcmp.eq.s32.totalorder %v2231, 1
        %vm2296 = vcmp.eq.s32.totalorder %v2232, 1
        %vm2297 = vcmp.eq.s32.totalorder %v2233, 1
        %vm2298 = vcmp.eq.s32.totalorder %v2234, 1
        %vm2299 = vcmp.eq.s32.totalorder %v2235, 1
        %vm2300 = vcmp.eq.s32.totalorder %v2236, 1
        %vm2301 = vcmp.eq.s32.totalorder %v2237, 1
        %vm2302 = vcmp.eq.s32.totalorder %v2238, 1
        %vm2303 = vcmp.eq.s32.totalorder %v2239, 1
        %vm2304 = vcmp.eq.s32.totalorder %v2240, 1
        %vm2305 = vcmp.eq.s32.totalorder %v2241, 1
        %vm2306 = vcmp.eq.s32.totalorder %v2242, 1
        %vm2307 = vcmp.eq.s32.totalorder %v2243, 1
        %vm2308 = vcmp.eq.s32.totalorder %v2244, 1
        %vm2309 = vcmp.eq.s32.totalorder %v2245, 1
        %vm2310 = vcmp.eq.s32.totalorder %v2246, 1
        %vm2311 = vcmp.eq.s32.totalorder %v2247, 1
        %vm2312 = vcmp.eq.s32.totalorder %v2248, 1
        %vm2313 = vcmp.eq.s32.totalorder %v2249, 1
        %vm2314 = vcmp.eq.s32.totalorder %v2250, 1
        %vm2315 = vcmp.eq.s32.totalorder %v2251, 1
        %vm2316 = vcmp.eq.s32.totalorder %v2252, 1
        %vm2317 = vcmp.eq.s32.totalorder %v2253, 1
        %vm2318 = vcmp.eq.s32.totalorder %v2254, 1
        %vm2319 = vcmp.eq.s32.totalorder %v2255, 1
        %vm2320 = vcmp.eq.s32.totalorder %v2256, 1
        %vm2321 = vcmp.eq.s32.totalorder %v2257, 1
        %vm2322 = vcmp.eq.s32.totalorder %v2258, 1
        %vm2323 = vcmp.eq.s32.totalorder %v2259, 1
        %vm2324 = vcmp.eq.s32.totalorder %v2260, 1
        %vm2325 = vcmp.eq.s32.totalorder %v2261, 1
        %vm2326 = vcmp.eq.s32.totalorder %v2262, 1
        %vm2327 = vcmp.eq.s32.totalorder %v2263, 1
        %vm2328 = vcmp.eq.s32.totalorder %v2264, 1
        %vm2329 = vcmp.eq.s32.totalorder %v2265, 1
        %vm2330 = vcmp.eq.s32.totalorder %v2266, 1
        %vm2331 = vcmp.eq.s32.totalorder %v2267, 1
        %vm2332 = vcmp.eq.s32.totalorder %v2268, 1
        %vm2333 = vcmp.eq.s32.totalorder %v2269, 1
        %vm2334 = vcmp.eq.s32.totalorder %v2270, 1
        %vm2335 = vcmp.eq.s32.totalorder %v2271, 1
        %vm2336 = vcmp.eq.s32.totalorder %v2272, 1
        %vm2337 = vcmp.eq.s32.totalorder %v2273, 1
        %vm2338 = vcmp.eq.s32.totalorder %v2274, 1
        %vm2339 = vcmp.eq.s32.totalorder %v2275, 1
        %vm2340 = vcmp.eq.s32.totalorder %v2276, 1
        %vm2341 = vcmp.eq.s32.totalorder %v2277, 1
        %vm2342 = vcmp.eq.s32.totalorder %v2278, 1
        %vm2343 = vcmp.eq.s32.totalorder %v2279, 1
        %vm2344 = vcmp.eq.s32.totalorder %v2280, 1
        %vm2345 = vcmp.eq.s32.totalorder %v2281, 1
        %vm2346 = vcmp.eq.s32.totalorder %v2282, 1
        %vm2347 = vcmp.eq.s32.totalorder %v2283, 1
        %vm2348 = vcmp.eq.s32.totalorder %v2284, 1
        %vm2349 = vcmp.eq.s32.totalorder %v2285, 1
        %vm2350 = vcmp.eq.s32.totalorder %v2286, 1
        %vm2351 = vcmp.eq.s32.totalorder %v2287, 1
        %vm2352 = vcmp.eq.s32.totalorder %v2288, 1
        %vm2353 = vcmp.eq.s32.totalorder %v2289, 1
        %vm2354 = vcmp.eq.s32.totalorder %v2290, 1
        %vm2355 = vcmp.eq.s32.totalorder %v2291, 1
        %vm2356 = vcmp.eq.s32.totalorder %v2292, 1
        %v2357 = vsel %vm2293, 0.0, %v1908
        %v2358 = vsel %vm2294, 0.0, %v1907
        %v2359 = vsel %vm2295, 0.0, %v1906
        %v2360 = vsel %vm2296, 0.0, %v1905
        %v2361 = vsel %vm2297, 0.0, %v1904
        %v2362 = vsel %vm2298, 0.0, %v1903
        %v2363 = vsel %vm2299, 0.0, %v1902
        %v2364 = vsel %vm2300, 0.0, %v1901
        %v2365 = vsel %vm2301, 0.0, %v1900
        %v2366 = vsel %vm2302, 0.0, %v1899
        %v2367 = vsel %vm2303, 0.0, %v1898
        %v2368 = vsel %vm2304, 0.0, %v1897
        %v2369 = vsel %vm2305, 0.0, %v1896
        %v2370 = vsel %vm2306, 0.0, %v1895
        %v2371 = vsel %vm2307, 0.0, %v1894
        %v2372 = vsel %vm2308, 0.0, %v1893
        %v2373 = vsel %vm2309, 0.0, %v1892
        %v2374 = vsel %vm2310, 0.0, %v1891
        %v2375 = vsel %vm2311, 0.0, %v1890
        %v2376 = vsel %vm2312, 0.0, %v1889
        %v2377 = vsel %vm2313, 0.0, %v1888
        %v2378 = vsel %vm2314, 0.0, %v1887
        %v2379 = vsel %vm2315, 0.0, %v1886
        %v2380 = vsel %vm2316, 0.0, %v1885
        %v2381 = vsel %vm2317, 0.0, %v1884
        %v2382 = vsel %vm2318, 0.0, %v1883
        %v2383 = vsel %vm2319, 0.0, %v1882
        %v2384 = vsel %vm2320, 0.0, %v1881
        %v2385 = vsel %vm2321, 0.0, %v1880
        %v2386 = vsel %vm2322, 0.0, %v1879
        %v2387 = vsel %vm2323, 0.0, %v1878
        %v2388 = vsel %vm2324, 0.0, %v1877
        %v2389 = vsel %vm2325, 0.0, %v1876
        %v2390 = vsel %vm2326, 0.0, %v1875
        %v2391 = vsel %vm2327, 0.0, %v1874
        %v2392 = vsel %vm2328, 0.0, %v1873
        %v2393 = vsel %vm2329, 0.0, %v1872
        %v2394 = vsel %vm2330, 0.0, %v1871
        %v2395 = vsel %vm2331, 0.0, %v1870
        %v2396 = vsel %vm2332, 0.0, %v1869
        %v2397 = vsel %vm2333, 0.0, %v1868
        %v2398 = vsel %vm2334, 0.0, %v1867
        %v2399 = vsel %vm2335, 0.0, %v1866
        %v2400 = vsel %vm2336, 0.0, %v1865
        %v2401 = vsel %vm2337, 0.0, %v1864
        %v2402 = vsel %vm2338, 0.0, %v1863
        %v2403 = vsel %vm2339, 0.0, %v1862
        %v2404 = vsel %vm2340, 0.0, %v1861
        %v2405 = vsel %vm2341, 0.0, %v1860
        %v2406 = vsel %vm2342, 0.0, %v1859
        %v2407 = vsel %vm2343, 0.0, %v1858
        %v2408 = vsel %vm2344, 0.0, %v1857
        %v2409 = vsel %vm2345, 0.0, %v1856
        %v2410 = vsel %vm2346, 0.0, %v1855
        %v2411 = vsel %vm2347, 0.0, %v1854
        %v2412 = vsel %vm2348, 0.0, %v1853
        %v2413 = vsel %vm2349, 0.0, %v1852
        %v2414 = vsel %vm2350, 0.0, %v1851
        %v2415 = vsel %vm2351, 0.0, %v1850
        %v2416 = vsel %vm2352, 0.0, %v1849
        %v2417 = vsel %vm2353, 0.0, %v1848
        %v2418 = vsel %vm2354, 0.0, %v1847
        %v2419 = vsel %vm2355, 0.0, %v1846
        %v2420 = vsel %vm2356, 0.0, %v1845
        %vm2421 = vcmp.eq.s32.totalorder %v2101, 63
        %vm2422 = vcmp.eq.s32.totalorder %v2102, 63
        %vm2423 = vcmp.eq.s32.totalorder %v2103, 63
        %vm2424 = vcmp.eq.s32.totalorder %v2104, 63
        %vm2425 = vcmp.eq.s32.totalorder %v2105, 63
        %vm2426 = vcmp.eq.s32.totalorder %v2106, 63
        %vm2427 = vcmp.eq.s32.totalorder %v2107, 63
        %vm2428 = vcmp.eq.s32.totalorder %v2108, 63
        %vm2429 = vcmp.eq.s32.totalorder %v2109, 63
        %vm2430 = vcmp.eq.s32.totalorder %v2110, 63
        %vm2431 = vcmp.eq.s32.totalorder %v2111, 63
        %vm2432 = vcmp.eq.s32.totalorder %v2112, 63
        %vm2433 = vcmp.eq.s32.totalorder %v2113, 63
        %vm2434 = vcmp.eq.s32.totalorder %v2114, 63
        %vm2435 = vcmp.eq.s32.totalorder %v2115, 63
        %vm2436 = vcmp.eq.s32.totalorder %v2116, 63
        %vm2437 = vcmp.eq.s32.totalorder %v2117, 63
        %vm2438 = vcmp.eq.s32.totalorder %v2118, 63
        %vm2439 = vcmp.eq.s32.totalorder %v2119, 63
        %vm2440 = vcmp.eq.s32.totalorder %v2120, 63
        %vm2441 = vcmp.eq.s32.totalorder %v2121, 63
        %vm2442 = vcmp.eq.s32.totalorder %v2122, 63
        %vm2443 = vcmp.eq.s32.totalorder %v2123, 63
        %vm2444 = vcmp.eq.s32.totalorder %v2124, 63
        %vm2445 = vcmp.eq.s32.totalorder %v2125, 63
        %vm2446 = vcmp.eq.s32.totalorder %v2126, 63
        %vm2447 = vcmp.eq.s32.totalorder %v2127, 63
        %vm2448 = vcmp.eq.s32.totalorder %v2128, 63
        %vm2449 = vcmp.eq.s32.totalorder %v2129, 63
        %vm2450 = vcmp.eq.s32.totalorder %v2130, 63
        %vm2451 = vcmp.eq.s32.totalorder %v2131, 63
        %vm2452 = vcmp.eq.s32.totalorder %v2132, 63
        %vm2453 = vcmp.eq.s32.totalorder %v2133, 63
        %vm2454 = vcmp.eq.s32.totalorder %v2134, 63
        %vm2455 = vcmp.eq.s32.totalorder %v2135, 63
        %vm2456 = vcmp.eq.s32.totalorder %v2136, 63
        %vm2457 = vcmp.eq.s32.totalorder %v2137, 63
        %vm2458 = vcmp.eq.s32.totalorder %v2138, 63
        %vm2459 = vcmp.eq.s32.totalorder %v2139, 63
        %vm2460 = vcmp.eq.s32.totalorder %v2140, 63
        %vm2461 = vcmp.eq.s32.totalorder %v2141, 63
        %vm2462 = vcmp.eq.s32.totalorder %v2142, 63
        %vm2463 = vcmp.eq.s32.totalorder %v2143, 63
        %vm2464 = vcmp.eq.s32.totalorder %v2144, 63
        %vm2465 = vcmp.eq.s32.totalorder %v2145, 63
        %vm2466 = vcmp.eq.s32.totalorder %v2146, 63
        %vm2467 = vcmp.eq.s32.totalorder %v2147, 63
        %vm2468 = vcmp.eq.s32.totalorder %v2148, 63
        %vm2469 = vcmp.eq.s32.totalorder %v2149, 63
        %vm2470 = vcmp.eq.s32.totalorder %v2150, 63
        %vm2471 = vcmp.eq.s32.totalorder %v2151, 63
        %vm2472 = vcmp.eq.s32.totalorder %v2152, 63
        %vm2473 = vcmp.eq.s32.totalorder %v2153, 63
        %vm2474 = vcmp.eq.s32.totalorder %v2154, 63
        %vm2475 = vcmp.eq.s32.totalorder %v2155, 63
        %vm2476 = vcmp.eq.s32.totalorder %v2156, 63
        %vm2477 = vcmp.eq.s32.totalorder %v2157, 63
        %vm2478 = vcmp.eq.s32.totalorder %v2158, 63
        %vm2479 = vcmp.eq.s32.totalorder %v2159, 63
        %vm2480 = vcmp.eq.s32.totalorder %v2160, 63
        %vm2481 = vcmp.eq.s32.totalorder %v2161, 63
        %vm2482 = vcmp.eq.s32.totalorder %v2162, 63
        %vm2483 = vcmp.eq.s32.totalorder %v2163, 63
        %vm2484 = vcmp.eq.s32.totalorder %v2164, 63
        %v2485 = vsel %vm2421, 1, 0
        %v2486 = vsel %vm2422, 1, 0
        %v2487 = vsel %vm2423, 1, 0
        %v2488 = vsel %vm2424, 1, 0
        %v2489 = vsel %vm2425, 1, 0
        %v2490 = vsel %vm2426, 1, 0
        %v2491 = vsel %vm2427, 1, 0
        %v2492 = vsel %vm2428, 1, 0
        %v2493 = vsel %vm2429, 1, 0
        %v2494 = vsel %vm2430, 1, 0
        %v2495 = vsel %vm2431, 1, 0
        %v2496 = vsel %vm2432, 1, 0
        %v2497 = vsel %vm2433, 1, 0
        %v2498 = vsel %vm2434, 1, 0
        %v2499 = vsel %vm2435, 1, 0
        %v2500 = vsel %vm2436, 1, 0
        %v2501 = vsel %vm2437, 1, 0
        %v2502 = vsel %vm2438, 1, 0
        %v2503 = vsel %vm2439, 1, 0
        %v2504 = vsel %vm2440, 1, 0
        %v2505 = vsel %vm2441, 1, 0
        %v2506 = vsel %vm2442, 1, 0
        %v2507 = vsel %vm2443, 1, 0
        %v2508 = vsel %vm2444, 1, 0
        %v2509 = vsel %vm2445, 1, 0
        %v2510 = vsel %vm2446, 1, 0
        %v2511 = vsel %vm2447, 1, 0
        %v2512 = vsel %vm2448, 1, 0
        %v2513 = vsel %vm2449, 1, 0
        %v2514 = vsel %vm2450, 1, 0
        %v2515 = vsel %vm2451, 1, 0
        %v2516 = vsel %vm2452, 1, 0
        %v2517 = vsel %vm2453, 1, 0
        %v2518 = vsel %vm2454, 1, 0
        %v2519 = vsel %vm2455, 1, 0
        %v2520 = vsel %vm2456, 1, 0
        %v2521 = vsel %vm2457, 1, 0
        %v2522 = vsel %vm2458, 1, 0
        %v2523 = vsel %vm2459, 1, 0
        %v2524 = vsel %vm2460, 1, 0
        %v2525 = vsel %vm2461, 1, 0
        %v2526 = vsel %vm2462, 1, 0
        %v2527 = vsel %vm2463, 1, 0
        %v2528 = vsel %vm2464, 1, 0
        %v2529 = vsel %vm2465, 1, 0
        %v2530 = vsel %vm2466, 1, 0
        %v2531 = vsel %vm2467, 1, 0
        %v2532 = vsel %vm2468, 1, 0
        %v2533 = vsel %vm2469, 1, 0
        %v2534 = vsel %vm2470, 1, 0
        %v2535 = vsel %vm2471, 1, 0
        %v2536 = vsel %vm2472, 1, 0
        %v2537 = vsel %vm2473, 1, 0
        %v2538 = vsel %vm2474, 1, 0
        %v2539 = vsel %vm2475, 1, 0
        %v2540 = vsel %vm2476, 1, 0
        %v2541 = vsel %vm2477, 1, 0
        %v2542 = vsel %vm2478, 1, 0
        %v2543 = vsel %vm2479, 1, 0
        %v2544 = vsel %vm2480, 1, 0
        %v2545 = vsel %vm2481, 1, 0
        %v2546 = vsel %vm2482, 1, 0
        %v2547 = vsel %vm2483, 1, 0
        %v2548 = vsel %vm2484, 1, 0
        %vm2549 = vcmp.eq.s32.totalorder %v2485, 1
        %vm2550 = vcmp.eq.s32.totalorder %v2486, 1
        %vm2551 = vcmp.eq.s32.totalorder %v2487, 1
        %vm2552 = vcmp.eq.s32.totalorder %v2488, 1
        %vm2553 = vcmp.eq.s32.totalorder %v2489, 1
        %vm2554 = vcmp.eq.s32.totalorder %v2490, 1
        %vm2555 = vcmp.eq.s32.totalorder %v2491, 1
        %vm2556 = vcmp.eq.s32.totalorder %v2492, 1
        %vm2557 = vcmp.eq.s32.totalorder %v2493, 1
        %vm2558 = vcmp.eq.s32.totalorder %v2494, 1
        %vm2559 = vcmp.eq.s32.totalorder %v2495, 1
        %vm2560 = vcmp.eq.s32.totalorder %v2496, 1
        %vm2561 = vcmp.eq.s32.totalorder %v2497, 1
        %vm2562 = vcmp.eq.s32.totalorder %v2498, 1
        %vm2563 = vcmp.eq.s32.totalorder %v2499, 1
        %vm2564 = vcmp.eq.s32.totalorder %v2500, 1
        %vm2565 = vcmp.eq.s32.totalorder %v2501, 1
        %vm2566 = vcmp.eq.s32.totalorder %v2502, 1
        %vm2567 = vcmp.eq.s32.totalorder %v2503, 1
        %vm2568 = vcmp.eq.s32.totalorder %v2504, 1
        %vm2569 = vcmp.eq.s32.totalorder %v2505, 1
        %vm2570 = vcmp.eq.s32.totalorder %v2506, 1
        %vm2571 = vcmp.eq.s32.totalorder %v2507, 1
        %vm2572 = vcmp.eq.s32.totalorder %v2508, 1
        %vm2573 = vcmp.eq.s32.totalorder %v2509, 1
        %vm2574 = vcmp.eq.s32.totalorder %v2510, 1
        %vm2575 = vcmp.eq.s32.totalorder %v2511, 1
        %vm2576 = vcmp.eq.s32.totalorder %v2512, 1
        %vm2577 = vcmp.eq.s32.totalorder %v2513, 1
        %vm2578 = vcmp.eq.s32.totalorder %v2514, 1
        %vm2579 = vcmp.eq.s32.totalorder %v2515, 1
        %vm2580 = vcmp.eq.s32.totalorder %v2516, 1
        %vm2581 = vcmp.eq.s32.totalorder %v2517, 1
        %vm2582 = vcmp.eq.s32.totalorder %v2518, 1
        %vm2583 = vcmp.eq.s32.totalorder %v2519, 1
        %vm2584 = vcmp.eq.s32.totalorder %v2520, 1
        %vm2585 = vcmp.eq.s32.totalorder %v2521, 1
        %vm2586 = vcmp.eq.s32.totalorder %v2522, 1
        %vm2587 = vcmp.eq.s32.totalorder %v2523, 1
        %vm2588 = vcmp.eq.s32.totalorder %v2524, 1
        %vm2589 = vcmp.eq.s32.totalorder %v2525, 1
        %vm2590 = vcmp.eq.s32.totalorder %v2526, 1
        %vm2591 = vcmp.eq.s32.totalorder %v2527, 1
        %vm2592 = vcmp.eq.s32.totalorder %v2528, 1
        %vm2593 = vcmp.eq.s32.totalorder %v2529, 1
        %vm2594 = vcmp.eq.s32.totalorder %v2530, 1
        %vm2595 = vcmp.eq.s32.totalorder %v2531, 1
        %vm2596 = vcmp.eq.s32.totalorder %v2532, 1
        %vm2597 = vcmp.eq.s32.totalorder %v2533, 1
        %vm2598 = vcmp.eq.s32.totalorder %v2534, 1
        %vm2599 = vcmp.eq.s32.totalorder %v2535, 1
        %vm2600 = vcmp.eq.s32.totalorder %v2536, 1
        %vm2601 = vcmp.eq.s32.totalorder %v2537, 1
        %vm2602 = vcmp.eq.s32.totalorder %v2538, 1
        %vm2603 = vcmp.eq.s32.totalorder %v2539, 1
        %vm2604 = vcmp.eq.s32.totalorder %v2540, 1
        %vm2605 = vcmp.eq.s32.totalorder %v2541, 1
        %vm2606 = vcmp.eq.s32.totalorder %v2542, 1
        %vm2607 = vcmp.eq.s32.totalorder %v2543, 1
        %vm2608 = vcmp.eq.s32.totalorder %v2544, 1
        %vm2609 = vcmp.eq.s32.totalorder %v2545, 1
        %vm2610 = vcmp.eq.s32.totalorder %v2546, 1
        %vm2611 = vcmp.eq.s32.totalorder %v2547, 1
        %vm2612 = vcmp.eq.s32.totalorder %v2548, 1
        %v2613 = vsel %vm2549, 0.0, %v2036
        %v2614 = vsel %vm2550, 0.0, %v2035
        %v2615 = vsel %vm2551, 0.0, %v2034
        %v2616 = vsel %vm2552, 0.0, %v2033
        %v2617 = vsel %vm2553, 0.0, %v2032
        %v2618 = vsel %vm2554, 0.0, %v2031
        %v2619 = vsel %vm2555, 0.0, %v2030
        %v2620 = vsel %vm2556, 0.0, %v2029
        %v2621 = vsel %vm2557, 0.0, %v2028
        %v2622 = vsel %vm2558, 0.0, %v2027
        %v2623 = vsel %vm2559, 0.0, %v2026
        %v2624 = vsel %vm2560, 0.0, %v2025
        %v2625 = vsel %vm2561, 0.0, %v2024
        %v2626 = vsel %vm2562, 0.0, %v2023
        %v2627 = vsel %vm2563, 0.0, %v2022
        %v2628 = vsel %vm2564, 0.0, %v2021
        %v2629 = vsel %vm2565, 0.0, %v2020
        %v2630 = vsel %vm2566, 0.0, %v2019
        %v2631 = vsel %vm2567, 0.0, %v2018
        %v2632 = vsel %vm2568, 0.0, %v2017
        %v2633 = vsel %vm2569, 0.0, %v2016
        %v2634 = vsel %vm2570, 0.0, %v2015
        %v2635 = vsel %vm2571, 0.0, %v2014
        %v2636 = vsel %vm2572, 0.0, %v2013
        %v2637 = vsel %vm2573, 0.0, %v2012
        %v2638 = vsel %vm2574, 0.0, %v2011
        %v2639 = vsel %vm2575, 0.0, %v2010
        %v2640 = vsel %vm2576, 0.0, %v2009
        %v2641 = vsel %vm2577, 0.0, %v2008
        %v2642 = vsel %vm2578, 0.0, %v2007
        %v2643 = vsel %vm2579, 0.0, %v2006
        %v2644 = vsel %vm2580, 0.0, %v2005
        %v2645 = vsel %vm2581, 0.0, %v2004
        %v2646 = vsel %vm2582, 0.0, %v2003
        %v2647 = vsel %vm2583, 0.0, %v2002
        %v2648 = vsel %vm2584, 0.0, %v2001
        %v2649 = vsel %vm2585, 0.0, %v2000
        %v2650 = vsel %vm2586, 0.0, %v1999
        %v2651 = vsel %vm2587, 0.0, %v1998
        %v2652 = vsel %vm2588, 0.0, %v1997
        %v2653 = vsel %vm2589, 0.0, %v1996
        %v2654 = vsel %vm2590, 0.0, %v1995
        %v2655 = vsel %vm2591, 0.0, %v1994
        %v2656 = vsel %vm2592, 0.0, %v1993
        %v2657 = vsel %vm2593, 0.0, %v1992
        %v2658 = vsel %vm2594, 0.0, %v1991
        %v2659 = vsel %vm2595, 0.0, %v1990
        %v2660 = vsel %vm2596, 0.0, %v1989
        %v2661 = vsel %vm2597, 0.0, %v1988
        %v2662 = vsel %vm2598, 0.0, %v1987
        %v2663 = vsel %vm2599, 0.0, %v1986
        %v2664 = vsel %vm2600, 0.0, %v1985
        %v2665 = vsel %vm2601, 0.0, %v1984
        %v2666 = vsel %vm2602, 0.0, %v1983
        %v2667 = vsel %vm2603, 0.0, %v1982
        %v2668 = vsel %vm2604, 0.0, %v1981
        %v2669 = vsel %vm2605, 0.0, %v1980
        %v2670 = vsel %vm2606, 0.0, %v1979
        %v2671 = vsel %vm2607, 0.0, %v1978
        %v2672 = vsel %vm2608, 0.0, %v1977
        %v2673 = vsel %vm2609, 0.0, %v1976
        %v2674 = vsel %vm2610, 0.0, %v1975
        %v2675 = vsel %vm2611, 0.0, %v1974
        %v2676 = vsel %vm2612, 0.0, %v2037
        %v2677 = vld [vmem:[%s5] sm:$0x1]
        %v2679 = vlaneseq
        %v2680 = vshrl.u32 %v2679, 7
        %v2681 = vsub.s32 0, %v2680
        %v2682 = vrot.slane %v2677, %v2681
        %v2684 = vmul.f32 %v2357, %v2682
        %v2685 = vmul.f32 %v2358, %v2682
        %v2686 = vmul.f32 %v2359, %v2682
        %v2687 = vmul.f32 %v2360, %v2682
        %v2688 = vmul.f32 %v2361, %v2682
        %v2689 = vmul.f32 %v2362, %v2682
        %v2690 = vmul.f32 %v2363, %v2682
        %v2691 = vmul.f32 %v2364, %v2682
        %v2692 = vmul.f32 %v2365, %v2682
        %v2693 = vmul.f32 %v2366, %v2682
        %v2694 = vmul.f32 %v2367, %v2682
        %v2695 = vmul.f32 %v2368, %v2682
        %v2696 = vmul.f32 %v2369, %v2682
        %v2697 = vmul.f32 %v2370, %v2682
        %v2698 = vmul.f32 %v2371, %v2682
        %v2699 = vmul.f32 %v2372, %v2682
        %v2700 = vmul.f32 %v2373, %v2682
        %v2701 = vmul.f32 %v2374, %v2682
        %v2702 = vmul.f32 %v2375, %v2682
        %v2703 = vmul.f32 %v2376, %v2682
        %v2704 = vmul.f32 %v2377, %v2682
        %v2705 = vmul.f32 %v2378, %v2682
        %v2706 = vmul.f32 %v2379, %v2682
        %v2707 = vmul.f32 %v2380, %v2682
        %v2708 = vmul.f32 %v2381, %v2682
        %v2709 = vmul.f32 %v2382, %v2682
        %v2710 = vmul.f32 %v2383, %v2682
        %v2711 = vmul.f32 %v2384, %v2682
        %v2712 = vmul.f32 %v2385, %v2682
        %v2713 = vmul.f32 %v2386, %v2682
        %v2714 = vmul.f32 %v2387, %v2682
        %v2715 = vmul.f32 %v2388, %v2682
        %v2716 = vmul.f32 %v2389, %v2682
        %v2717 = vmul.f32 %v2390, %v2682
        %v2718 = vmul.f32 %v2391, %v2682
        %v2719 = vmul.f32 %v2392, %v2682
        %v2720 = vmul.f32 %v2393, %v2682
        %v2721 = vmul.f32 %v2394, %v2682
        %v2722 = vmul.f32 %v2395, %v2682
        %v2723 = vmul.f32 %v2396, %v2682
        %v2724 = vmul.f32 %v2397, %v2682
        %v2725 = vmul.f32 %v2398, %v2682
        %v2726 = vmul.f32 %v2399, %v2682
        %v2727 = vmul.f32 %v2400, %v2682
        %v2728 = vmul.f32 %v2401, %v2682
        %v2729 = vmul.f32 %v2402, %v2682
        %v2730 = vmul.f32 %v2403, %v2682
        %v2731 = vmul.f32 %v2404, %v2682
        %v2732 = vmul.f32 %v2405, %v2682
        %v2733 = vmul.f32 %v2406, %v2682
        %v2734 = vmul.f32 %v2407, %v2682
        %v2735 = vmul.f32 %v2408, %v2682
        %v2736 = vmul.f32 %v2409, %v2682
        %v2737 = vmul.f32 %v2410, %v2682
        %v2738 = vmul.f32 %v2411, %v2682
        %v2739 = vmul.f32 %v2412, %v2682
        %v2740 = vmul.f32 %v2413, %v2682
        %v2741 = vmul.f32 %v2414, %v2682
        %v2742 = vmul.f32 %v2415, %v2682
        %v2743 = vmul.f32 %v2416, %v2682
        %v2744 = vmul.f32 %v2417, %v2682
        %v2745 = vmul.f32 %v2418, %v2682
        %v2746 = vmul.f32 %v2419, %v2682
        %v2747 = vmul.f32 %v2420, %v2682
        %v2748 = vld [vmem:[%s6] sm:$0x1]
        %v2750 = vlaneseq
        %v2751 = vshrl.u32 %v2750, 7
        %v2752 = vsub.s32 0, %v2751
        %v2753 = vrot.slane %v2748, %v2752
        %v2755 = vmul.f32 %v1714, %v2753
        %v2756 = vmul.f32 %v1715, %v2753
        %v2757 = vmul.f32 %v1716, %v2753
        %v2758 = vmul.f32 %v1717, %v2753
        %v2759 = vmul.f32 %v1718, %v2753
        %v2760 = vmul.f32 %v1719, %v2753
        %v2761 = vmul.f32 %v1720, %v2753
        %v2762 = vmul.f32 %v1721, %v2753
        %v2763 = vmul.f32 %v1722, %v2753
        %v2764 = vmul.f32 %v1723, %v2753
        %v2765 = vmul.f32 %v1724, %v2753
        %v2766 = vmul.f32 %v1725, %v2753
        %v2767 = vmul.f32 %v1726, %v2753
        %v2768 = vmul.f32 %v1727, %v2753
        %v2769 = vmul.f32 %v1728, %v2753
        %v2770 = vmul.f32 %v1729, %v2753
        %v2771 = vmul.f32 %v1730, %v2753
        %v2772 = vmul.f32 %v1731, %v2753
        %v2773 = vmul.f32 %v1732, %v2753
        %v2774 = vmul.f32 %v1733, %v2753
        %v2775 = vmul.f32 %v1734, %v2753
        %v2776 = vmul.f32 %v1735, %v2753
        %v2777 = vmul.f32 %v1736, %v2753
        %v2778 = vmul.f32 %v1737, %v2753
        %v2779 = vmul.f32 %v1738, %v2753
        %v2780 = vmul.f32 %v1739, %v2753
        %v2781 = vmul.f32 %v1740, %v2753
        %v2782 = vmul.f32 %v1741, %v2753
        %v2783 = vmul.f32 %v1742, %v2753
        %v2784 = vmul.f32 %v1743, %v2753
        %v2785 = vmul.f32 %v1744, %v2753
        %v2786 = vmul.f32 %v1745, %v2753
        %v2787 = vmul.f32 %v1746, %v2753
        %v2788 = vmul.f32 %v1747, %v2753
        %v2789 = vmul.f32 %v1748, %v2753
        %v2790 = vmul.f32 %v1749, %v2753
        %v2791 = vmul.f32 %v1750, %v2753
        %v2792 = vmul.f32 %v1751, %v2753
        %v2793 = vmul.f32 %v1752, %v2753
        %v2794 = vmul.f32 %v1753, %v2753
        %v2795 = vmul.f32 %v1754, %v2753
        %v2796 = vmul.f32 %v1755, %v2753
        %v2797 = vmul.f32 %v1756, %v2753
        %v2798 = vmul.f32 %v1757, %v2753
        %v2799 = vmul.f32 %v1758, %v2753
        %v2800 = vmul.f32 %v1759, %v2753
        %v2801 = vmul.f32 %v1760, %v2753
        %v2802 = vmul.f32 %v1761, %v2753
        %v2803 = vmul.f32 %v1762, %v2753
        %v2804 = vmul.f32 %v1763, %v2753
        %v2805 = vmul.f32 %v1764, %v2753
        %v2806 = vmul.f32 %v1765, %v2753
        %v2807 = vmul.f32 %v1766, %v2753
        %v2808 = vmul.f32 %v1767, %v2753
        %v2809 = vmul.f32 %v1768, %v2753
        %v2810 = vmul.f32 %v1769, %v2753
        %v2811 = vmul.f32 %v1770, %v2753
        %v2812 = vmul.f32 %v1771, %v2753
        %v2813 = vmul.f32 %v1772, %v2753
        %v2814 = vmul.f32 %v1773, %v2753
        %v2815 = vmul.f32 %v1774, %v2753
        %v2816 = vmul.f32 %v1775, %v2753
        %v2817 = vmul.f32 %v1776, %v2753
        %v2818 = vmul.f32 %v1777, %v2753
        %v2819 = vadd.f32 %v2684, %v2755
        %v2820 = vadd.f32 %v2685, %v2756
        %v2821 = vadd.f32 %v2686, %v2757
        %v2822 = vadd.f32 %v2687, %v2758
        %v2823 = vadd.f32 %v2688, %v2759
        %v2824 = vadd.f32 %v2689, %v2760
        %v2825 = vadd.f32 %v2690, %v2761
        %v2826 = vadd.f32 %v2691, %v2762
        %v2827 = vadd.f32 %v2692, %v2763
        %v2828 = vadd.f32 %v2693, %v2764
        %v2829 = vadd.f32 %v2694, %v2765
        %v2830 = vadd.f32 %v2695, %v2766
        %v2831 = vadd.f32 %v2696, %v2767
        %v2832 = vadd.f32 %v2697, %v2768
        %v2833 = vadd.f32 %v2698, %v2769
        %v2834 = vadd.f32 %v2699, %v2770
        %v2835 = vadd.f32 %v2700, %v2771
        %v2836 = vadd.f32 %v2701, %v2772
        %v2837 = vadd.f32 %v2702, %v2773
        %v2838 = vadd.f32 %v2703, %v2774
        %v2839 = vadd.f32 %v2704, %v2775
        %v2840 = vadd.f32 %v2705, %v2776
        %v2841 = vadd.f32 %v2706, %v2777
        %v2842 = vadd.f32 %v2707, %v2778
        %v2843 = vadd.f32 %v2708, %v2779
        %v2844 = vadd.f32 %v2709, %v2780
        %v2845 = vadd.f32 %v2710, %v2781
        %v2846 = vadd.f32 %v2711, %v2782
        %v2847 = vadd.f32 %v2712, %v2783
        %v2848 = vadd.f32 %v2713, %v2784
        %v2849 = vadd.f32 %v2714, %v2785
        %v2850 = vadd.f32 %v2715, %v2786
        %v2851 = vadd.f32 %v2716, %v2787
        %v2852 = vadd.f32 %v2717, %v2788
        %v2853 = vadd.f32 %v2718, %v2789
        %v2854 = vadd.f32 %v2719, %v2790
        %v2855 = vadd.f32 %v2720, %v2791
        %v2856 = vadd.f32 %v2721, %v2792
        %v2857 = vadd.f32 %v2722, %v2793
        %v2858 = vadd.f32 %v2723, %v2794
        %v2859 = vadd.f32 %v2724, %v2795
        %v2860 = vadd.f32 %v2725, %v2796
        %v2861 = vadd.f32 %v2726, %v2797
        %v2862 = vadd.f32 %v2727, %v2798
        %v2863 = vadd.f32 %v2728, %v2799
        %v2864 = vadd.f32 %v2729, %v2800
        %v2865 = vadd.f32 %v2730, %v2801
        %v2866 = vadd.f32 %v2731, %v2802
        %v2867 = vadd.f32 %v2732, %v2803
        %v2868 = vadd.f32 %v2733, %v2804
        %v2869 = vadd.f32 %v2734, %v2805
        %v2870 = vadd.f32 %v2735, %v2806
        %v2871 = vadd.f32 %v2736, %v2807
        %v2872 = vadd.f32 %v2737, %v2808
        %v2873 = vadd.f32 %v2738, %v2809
        %v2874 = vadd.f32 %v2739, %v2810
        %v2875 = vadd.f32 %v2740, %v2811
        %v2876 = vadd.f32 %v2741, %v2812
        %v2877 = vadd.f32 %v2742, %v2813
        %v2878 = vadd.f32 %v2743, %v2814
        %v2879 = vadd.f32 %v2744, %v2815
        %v2880 = vadd.f32 %v2745, %v2816
        %v2881 = vadd.f32 %v2746, %v2817
        %v2882 = vadd.f32 %v2747, %v2818
        %v2883 = vld [vmem:[%s7] sm:$0x1]
        %v2885 = vlaneseq
        %v2886 = vshrl.u32 %v2885, 7
        %v2887 = vsub.s32 0, %v2886
        %v2888 = vrot.slane %v2883, %v2887
        %v2890 = vmul.f32 %v2613, %v2888
        %v2891 = vmul.f32 %v2614, %v2888
        %v2892 = vmul.f32 %v2615, %v2888
        %v2893 = vmul.f32 %v2616, %v2888
        %v2894 = vmul.f32 %v2617, %v2888
        %v2895 = vmul.f32 %v2618, %v2888
        %v2896 = vmul.f32 %v2619, %v2888
        %v2897 = vmul.f32 %v2620, %v2888
        %v2898 = vmul.f32 %v2621, %v2888
        %v2899 = vmul.f32 %v2622, %v2888
        %v2900 = vmul.f32 %v2623, %v2888
        %v2901 = vmul.f32 %v2624, %v2888
        %v2902 = vmul.f32 %v2625, %v2888
        %v2903 = vmul.f32 %v2626, %v2888
        %v2904 = vmul.f32 %v2627, %v2888
        %v2905 = vmul.f32 %v2628, %v2888
        %v2906 = vmul.f32 %v2629, %v2888
        %v2907 = vmul.f32 %v2630, %v2888
        %v2908 = vmul.f32 %v2631, %v2888
        %v2909 = vmul.f32 %v2632, %v2888
        %v2910 = vmul.f32 %v2633, %v2888
        %v2911 = vmul.f32 %v2634, %v2888
        %v2912 = vmul.f32 %v2635, %v2888
        %v2913 = vmul.f32 %v2636, %v2888
        %v2914 = vmul.f32 %v2637, %v2888
        %v2915 = vmul.f32 %v2638, %v2888
        %v2916 = vmul.f32 %v2639, %v2888
        %v2917 = vmul.f32 %v2640, %v2888
        %v2918 = vmul.f32 %v2641, %v2888
        %v2919 = vmul.f32 %v2642, %v2888
        %v2920 = vmul.f32 %v2643, %v2888
        %v2921 = vmul.f32 %v2644, %v2888
        %v2922 = vmul.f32 %v2645, %v2888
        %v2923 = vmul.f32 %v2646, %v2888
        %v2924 = vmul.f32 %v2647, %v2888
        %v2925 = vmul.f32 %v2648, %v2888
        %v2926 = vmul.f32 %v2649, %v2888
        %v2927 = vmul.f32 %v2650, %v2888
        %v2928 = vmul.f32 %v2651, %v2888
        %v2929 = vmul.f32 %v2652, %v2888
        %v2930 = vmul.f32 %v2653, %v2888
        %v2931 = vmul.f32 %v2654, %v2888
        %v2932 = vmul.f32 %v2655, %v2888
        %v2933 = vmul.f32 %v2656, %v2888
        %v2934 = vmul.f32 %v2657, %v2888
        %v2935 = vmul.f32 %v2658, %v2888
        %v2936 = vmul.f32 %v2659, %v2888
        %v2937 = vmul.f32 %v2660, %v2888
        %v2938 = vmul.f32 %v2661, %v2888
        %v2939 = vmul.f32 %v2662, %v2888
        %v2940 = vmul.f32 %v2663, %v2888
        %v2941 = vmul.f32 %v2664, %v2888
        %v2942 = vmul.f32 %v2665, %v2888
        %v2943 = vmul.f32 %v2666, %v2888
        %v2944 = vmul.f32 %v2667, %v2888
        %v2945 = vmul.f32 %v2668, %v2888
        %v2946 = vmul.f32 %v2669, %v2888
        %v2947 = vmul.f32 %v2670, %v2888
        %v2948 = vmul.f32 %v2671, %v2888
        %v2949 = vmul.f32 %v2672, %v2888
        %v2950 = vmul.f32 %v2673, %v2888
        %v2951 = vmul.f32 %v2674, %v2888
        %v2952 = vmul.f32 %v2675, %v2888
        %v2953 = vmul.f32 %v2676, %v2888
        %v2954 = vadd.f32 %v2819, %v2890
        %v2955 = vadd.f32 %v2820, %v2891
        %v2956 = vadd.f32 %v2821, %v2892
        %v2957 = vadd.f32 %v2822, %v2893
        %v2958 = vadd.f32 %v2823, %v2894
        %v2959 = vadd.f32 %v2824, %v2895
        %v2960 = vadd.f32 %v2825, %v2896
        %v2961 = vadd.f32 %v2826, %v2897
        %v2962 = vadd.f32 %v2827, %v2898
        %v2963 = vadd.f32 %v2828, %v2899
        %v2964 = vadd.f32 %v2829, %v2900
        %v2965 = vadd.f32 %v2830, %v2901
        %v2966 = vadd.f32 %v2831, %v2902
        %v2967 = vadd.f32 %v2832, %v2903
        %v2968 = vadd.f32 %v2833, %v2904
        %v2969 = vadd.f32 %v2834, %v2905
        %v2970 = vadd.f32 %v2835, %v2906
        %v2971 = vadd.f32 %v2836, %v2907
        %v2972 = vadd.f32 %v2837, %v2908
        %v2973 = vadd.f32 %v2838, %v2909
        %v2974 = vadd.f32 %v2839, %v2910
        %v2975 = vadd.f32 %v2840, %v2911
        %v2976 = vadd.f32 %v2841, %v2912
        %v2977 = vadd.f32 %v2842, %v2913
        %v2978 = vadd.f32 %v2843, %v2914
        %v2979 = vadd.f32 %v2844, %v2915
        %v2980 = vadd.f32 %v2845, %v2916
        %v2981 = vadd.f32 %v2846, %v2917
        %v2982 = vadd.f32 %v2847, %v2918
        %v2983 = vadd.f32 %v2848, %v2919
        %v2984 = vadd.f32 %v2849, %v2920
        %v2985 = vadd.f32 %v2850, %v2921
        %v2986 = vadd.f32 %v2851, %v2922
        %v2987 = vadd.f32 %v2852, %v2923
        %v2988 = vadd.f32 %v2853, %v2924
        %v2989 = vadd.f32 %v2854, %v2925
        %v2990 = vadd.f32 %v2855, %v2926
        %v2991 = vadd.f32 %v2856, %v2927
        %v2992 = vadd.f32 %v2857, %v2928
        %v2993 = vadd.f32 %v2858, %v2929
        %v2994 = vadd.f32 %v2859, %v2930
        %v2995 = vadd.f32 %v2860, %v2931
        %v2996 = vadd.f32 %v2861, %v2932
        %v2997 = vadd.f32 %v2862, %v2933
        %v2998 = vadd.f32 %v2863, %v2934
        %v2999 = vadd.f32 %v2864, %v2935
        %v3000 = vadd.f32 %v2865, %v2936
        %v3001 = vadd.f32 %v2866, %v2937
        %v3002 = vadd.f32 %v2867, %v2938
        %v3003 = vadd.f32 %v2868, %v2939
        %v3004 = vadd.f32 %v2869, %v2940
        %v3005 = vadd.f32 %v2870, %v2941
        %v3006 = vadd.f32 %v2871, %v2942
        %v3007 = vadd.f32 %v2872, %v2943
        %v3008 = vadd.f32 %v2873, %v2944
        %v3009 = vadd.f32 %v2874, %v2945
        %v3010 = vadd.f32 %v2875, %v2946
        %v3011 = vadd.f32 %v2876, %v2947
        %v3012 = vadd.f32 %v2877, %v2948
        %v3013 = vadd.f32 %v2878, %v2949
        %v3014 = vadd.f32 %v2879, %v2950
        %v3015 = vadd.f32 %v2880, %v2951
        %v3016 = vadd.f32 %v2881, %v2952
        %v3017 = vadd.f32 %v2882, %v2953
        %v3018 = vld [vmem:[%s8] sm:$0x1]
        %v3020 = vlaneseq
        %v3021 = vshrl.u32 %v3020, 7
        %v3022 = vsub.s32 0, %v3021
        %v3023 = vrot.slane %v3018, %v3022
        %v3025 = vadd.f32 %v2954, %v3023
        %v3026 = vadd.f32 %v2955, %v3023
        %v3027 = vadd.f32 %v2956, %v3023
        %v3028 = vadd.f32 %v2957, %v3023
        %v3029 = vadd.f32 %v2958, %v3023
        %v3030 = vadd.f32 %v2959, %v3023
        %v3031 = vadd.f32 %v2960, %v3023
        %v3032 = vadd.f32 %v2961, %v3023
        %v3033 = vadd.f32 %v2962, %v3023
        %v3034 = vadd.f32 %v2963, %v3023
        %v3035 = vadd.f32 %v2964, %v3023
        %v3036 = vadd.f32 %v2965, %v3023
        %v3037 = vadd.f32 %v2966, %v3023
        %v3038 = vadd.f32 %v2967, %v3023
        %v3039 = vadd.f32 %v2968, %v3023
        %v3040 = vadd.f32 %v2969, %v3023
        %v3041 = vadd.f32 %v2970, %v3023
        %v3042 = vadd.f32 %v2971, %v3023
        %v3043 = vadd.f32 %v2972, %v3023
        %v3044 = vadd.f32 %v2973, %v3023
        %v3045 = vadd.f32 %v2974, %v3023
        %v3046 = vadd.f32 %v2975, %v3023
        %v3047 = vadd.f32 %v2976, %v3023
        %v3048 = vadd.f32 %v2977, %v3023
        %v3049 = vadd.f32 %v2978, %v3023
        %v3050 = vadd.f32 %v2979, %v3023
        %v3051 = vadd.f32 %v2980, %v3023
        %v3052 = vadd.f32 %v2981, %v3023
        %v3053 = vadd.f32 %v2982, %v3023
        %v3054 = vadd.f32 %v2983, %v3023
        %v3055 = vadd.f32 %v2984, %v3023
        %v3056 = vadd.f32 %v2985, %v3023
        %v3057 = vadd.f32 %v2986, %v3023
        %v3058 = vadd.f32 %v2987, %v3023
        %v3059 = vadd.f32 %v2988, %v3023
        %v3060 = vadd.f32 %v2989, %v3023
        %v3061 = vadd.f32 %v2990, %v3023
        %v3062 = vadd.f32 %v2991, %v3023
        %v3063 = vadd.f32 %v2992, %v3023
        %v3064 = vadd.f32 %v2993, %v3023
        %v3065 = vadd.f32 %v2994, %v3023
        %v3066 = vadd.f32 %v2995, %v3023
        %v3067 = vadd.f32 %v2996, %v3023
        %v3068 = vadd.f32 %v2997, %v3023
        %v3069 = vadd.f32 %v2998, %v3023
        %v3070 = vadd.f32 %v2999, %v3023
        %v3071 = vadd.f32 %v3000, %v3023
        %v3072 = vadd.f32 %v3001, %v3023
        %v3073 = vadd.f32 %v3002, %v3023
        %v3074 = vadd.f32 %v3003, %v3023
        %v3075 = vadd.f32 %v3004, %v3023
        %v3076 = vadd.f32 %v3005, %v3023
        %v3077 = vadd.f32 %v3006, %v3023
        %v3078 = vadd.f32 %v3007, %v3023
        %v3079 = vadd.f32 %v3008, %v3023
        %v3080 = vadd.f32 %v3009, %v3023
        %v3081 = vadd.f32 %v3010, %v3023
        %v3082 = vadd.f32 %v3011, %v3023
        %v3083 = vadd.f32 %v3012, %v3023
        %v3084 = vadd.f32 %v3013, %v3023
        %v3085 = vadd.f32 %v3014, %v3023
        %v3086 = vadd.f32 %v3015, %v3023
        %v3087 = vadd.f32 %v3016, %v3023
        %v3088 = vadd.f32 %v3017, %v3023
        %v3089 = vmax.f32 %v3025, 0.0
        %v3090 = vmax.f32 %v3026, 0.0
        %v3091 = vmax.f32 %v3027, 0.0
        %v3092 = vmax.f32 %v3028, 0.0
        %v3093 = vmax.f32 %v3029, 0.0
        %v3094 = vmax.f32 %v3030, 0.0
        %v3095 = vmax.f32 %v3031, 0.0
        %v3096 = vmax.f32 %v3032, 0.0
        %v3097 = vmax.f32 %v3033, 0.0
        %v3098 = vmax.f32 %v3034, 0.0
        %v3099 = vmax.f32 %v3035, 0.0
        %v3100 = vmax.f32 %v3036, 0.0
        %v3101 = vmax.f32 %v3037, 0.0
        %v3102 = vmax.f32 %v3038, 0.0
        %v3103 = vmax.f32 %v3039, 0.0
        %v3104 = vmax.f32 %v3040, 0.0
        %v3105 = vmax.f32 %v3041, 0.0
        %v3106 = vmax.f32 %v3042, 0.0
        %v3107 = vmax.f32 %v3043, 0.0
        %v3108 = vmax.f32 %v3044, 0.0
        %v3109 = vmax.f32 %v3045, 0.0
        %v3110 = vmax.f32 %v3046, 0.0
        %v3111 = vmax.f32 %v3047, 0.0
        %v3112 = vmax.f32 %v3048, 0.0
        %v3113 = vmax.f32 %v3049, 0.0
        %v3114 = vmax.f32 %v3050, 0.0
        %v3115 = vmax.f32 %v3051, 0.0
        %v3116 = vmax.f32 %v3052, 0.0
        %v3117 = vmax.f32 %v3053, 0.0
        %v3118 = vmax.f32 %v3054, 0.0
        %v3119 = vmax.f32 %v3055, 0.0
        %v3120 = vmax.f32 %v3056, 0.0
        %v3121 = vmax.f32 %v3057, 0.0
        %v3122 = vmax.f32 %v3058, 0.0
        %v3123 = vmax.f32 %v3059, 0.0
        %v3124 = vmax.f32 %v3060, 0.0
        %v3125 = vmax.f32 %v3061, 0.0
        %v3126 = vmax.f32 %v3062, 0.0
        %v3127 = vmax.f32 %v3063, 0.0
        %v3128 = vmax.f32 %v3064, 0.0
        %v3129 = vmax.f32 %v3065, 0.0
        %v3130 = vmax.f32 %v3066, 0.0
        %v3131 = vmax.f32 %v3067, 0.0
        %v3132 = vmax.f32 %v3068, 0.0
        %v3133 = vmax.f32 %v3069, 0.0
        %v3134 = vmax.f32 %v3070, 0.0
        %v3135 = vmax.f32 %v3071, 0.0
        %v3136 = vmax.f32 %v3072, 0.0
        %v3137 = vmax.f32 %v3073, 0.0
        %v3138 = vmax.f32 %v3074, 0.0
        %v3139 = vmax.f32 %v3075, 0.0
        %v3140 = vmax.f32 %v3076, 0.0
        %v3141 = vmax.f32 %v3077, 0.0
        %v3142 = vmax.f32 %v3078, 0.0
        %v3143 = vmax.f32 %v3079, 0.0
        %v3144 = vmax.f32 %v3080, 0.0
        %v3145 = vmax.f32 %v3081, 0.0
        %v3146 = vmax.f32 %v3082, 0.0
        %v3147 = vmax.f32 %v3083, 0.0
        %v3148 = vmax.f32 %v3084, 0.0
        %v3149 = vmax.f32 %v3085, 0.0
        %v3150 = vmax.f32 %v3086, 0.0
        %v3151 = vmax.f32 %v3087, 0.0
        %v3152 = vmax.f32 %v3088, 0.0
        %v3153 = vpack.c.bf16 %v3090, %v3089
        %v3154 = vpack.c.bf16 %v3092, %v3091
        %v3155 = vpack.c.bf16 %v3094, %v3093
        %v3156 = vpack.c.bf16 %v3096, %v3095
        %v3157 = vpack.c.bf16 %v3098, %v3097
        %v3158 = vpack.c.bf16 %v3100, %v3099
        %v3159 = vpack.c.bf16 %v3102, %v3101
        %v3160 = vpack.c.bf16 %v3104, %v3103
        %v3161 = vpack.c.bf16 %v3106, %v3105
        %v3162 = vpack.c.bf16 %v3108, %v3107
        %v3163 = vpack.c.bf16 %v3110, %v3109
        %v3164 = vpack.c.bf16 %v3112, %v3111
        %v3165 = vpack.c.bf16 %v3114, %v3113
        %v3166 = vpack.c.bf16 %v3116, %v3115
        %v3167 = vpack.c.bf16 %v3118, %v3117
        %v3168 = vpack.c.bf16 %v3120, %v3119
        %v3169 = vpack.c.bf16 %v3122, %v3121
        %v3170 = vpack.c.bf16 %v3124, %v3123
        %v3171 = vpack.c.bf16 %v3126, %v3125
        %v3172 = vpack.c.bf16 %v3128, %v3127
        %v3173 = vpack.c.bf16 %v3130, %v3129
        %v3174 = vpack.c.bf16 %v3132, %v3131
        %v3175 = vpack.c.bf16 %v3134, %v3133
        %v3176 = vpack.c.bf16 %v3136, %v3135
        %v3177 = vpack.c.bf16 %v3138, %v3137
        %v3178 = vpack.c.bf16 %v3140, %v3139
        %v3179 = vpack.c.bf16 %v3142, %v3141
        %v3180 = vpack.c.bf16 %v3144, %v3143
        %v3181 = vpack.c.bf16 %v3146, %v3145
        %v3182 = vpack.c.bf16 %v3148, %v3147
        %v3183 = vpack.c.bf16 %v3150, %v3149
        %v3184 = vpack.c.bf16 %v3152, %v3151
        %v3185 = vld [vmem:[%s9] sm:$0xf]
        %v3186 = vld [vmem:[%s9 + $0x4] sm:$0xf]
        %v3187 = vld [vmem:[%s9 + $0x8] sm:$0xf]
        %v3188 = vld [vmem:[%s9 + $0xc] sm:$0xf]
        %v3189 = vld [vmem:[%s10] sm:$0x1]
        %v3191 = vlaneseq
        %v3192 = vshrl.u32 %v3191, 7
        %v3193 = vsub.s32 0, %v3192
        %v3194 = vrot.slane %v3189, %v3193
        %v3200 = vunpack.c.l.b16 %v3185
        %v3201 = vunpack.c.l.b16 %v3186
        %v3202 = vunpack.c.l.b16 %v3187
        %v3203 = vunpack.c.l.b16 %v3188
        %v3204 = vpack.c.b16 %v3201, %v3200
        %v3205 = vpack.c.b16 %v3203, %v3202
        %vm3208 = vcmask 261120
        %v3210 = vsel %vm3208, %v3153, 0
        %v3213 = vsel %vm3208, %v3154, 0
        %v3216 = vsel %vm3208, %v3155, 0
        %v3219 = vsel %vm3208, %v3156, 0
        %v3222 = vsel %vm3208, %v3157, 0
        %v3225 = vsel %vm3208, %v3158, 0
        %v3228 = vsel %vm3208, %v3159, 0
        %v3231 = vsel %vm3208, %v3160, 0
        %v3234 = vsel %vm3208, %v3161, 0
        %v3237 = vsel %vm3208, %v3162, 0
        %v3240 = vsel %vm3208, %v3163, 0
        %v3243 = vsel %vm3208, %v3164, 0
        %v3246 = vsel %vm3208, %v3165, 0
        %v3249 = vsel %vm3208, %v3166, 0
        %v3252 = vsel %vm3208, %v3167, 0
        %v3255 = vsel %vm3208, %v3168, 0
        %v3258 = vsel %vm3208, %v3169, 0
        %v3261 = vsel %vm3208, %v3170, 0
        %v3264 = vsel %vm3208, %v3171, 0
        %v3267 = vsel %vm3208, %v3172, 0
        %v3270 = vsel %vm3208, %v3173, 0
        %v3273 = vsel %vm3208, %v3174, 0
        %v3276 = vsel %vm3208, %v3175, 0
        %v3279 = vsel %vm3208, %v3176, 0
        %v3282 = vsel %vm3208, %v3177, 0
        %v3285 = vsel %vm3208, %v3178, 0
        %v3288 = vsel %vm3208, %v3179, 0
        %v3291 = vsel %vm3208, %v3180, 0
        %v3294 = vsel %vm3208, %v3181, 0
        %v3297 = vsel %vm3208, %v3182, 0
        %v3300 = vsel %vm3208, %v3183, 0
        %v3303 = vsel %vm3208, %v3184, 0
        %3305 = vmatprep.subr.bf16.mxu0 0
        %3306 = vmatpush1.bf16.msra.mxu0 %v3204
        %3307 = vmatprep.subr.bf16.mxu0 0
        %3308 = vmatpush1.bf16.msra.mxu0 %v3205
        %3309 = vmatprep.subr.bf16.mxu0 0
        %3310 = vmatpush1.bf16.msra.mxu0 0
        %3311 = vmatprep.subr.bf16.mxu0 0
        %3312 = vmatpush1.bf16.msra.mxu0 0
        %3313 = vmatprep.subr.bf16.mxu0 0
        %3314 = vmatpush1.bf16.msra.mxu0 0
        %3315 = vmatprep.subr.bf16.mxu0 0
        %3316 = vmatpush1.bf16.msra.mxu0 0
        %3317 = vmatprep.subr.bf16.mxu0 0
        %3318 = vmatpush1.bf16.msra.mxu0 0
        %3319 = vmatprep.subr.bf16.mxu0 0
        %3320 = vmatpush1.bf16.msra.mxu0 0
        %3321 = vmatprep.subr.bf16.mxu0 0
        %3322 = vmatpush1.bf16.msra.mxu0 0
        %3323 = vmatprep.subr.bf16.mxu0 0
        %3324 = vmatpush1.bf16.msra.mxu0 0
        %3325 = vmatprep.subr.bf16.mxu0 0
        %3326 = vmatpush1.bf16.msra.mxu0 0
        %3327 = vmatprep.subr.bf16.mxu0 0
        %3328 = vmatpush1.bf16.msra.mxu0 0
        %3329 = vmatprep.subr.bf16.mxu0 0
        %3330 = vmatpush1.bf16.msra.mxu0 0
        %3331 = vmatprep.subr.bf16.mxu0 0
        %3332 = vmatpush1.bf16.msra.mxu0 0
        %3333 = vmatprep.subr.bf16.mxu0 0
        %3334 = vmatpush1.bf16.msra.mxu0 0
        %3335 = vmatprep.subr.bf16.mxu0 0
        %3336 = vmatpush1.bf16.msra.mxu0 0
        %3337 = vmatprep.mubr.bf16.mxu0 0
        %3338 = vmatmul.mubr.bf16.gmra.mrb[0].mxu0 %v3210
        %v3339 = vpop.f32.mrb[0].mxu0
        %v3340 = vadd.f32 %v3194, %v3339
        %v3341 = vpop.f32.mrb[0].mxu0
        %v3342 = vpop.f32.mrb[0].mxu0
        %v3343 = vadd.f32 %v3194, %v3342
        %v3344 = vpop.f32.mrb[0].mxu0
        %3345 = vmatprep.mubr.bf16.mxu0 0
        %3346 = vmatmul.mubr.bf16.gmra.mrb[0].mxu0 %v3213
        %v3347 = vpop.f32.mrb[0].mxu0
        %v3348 = vadd.f32 %v3194, %v3347
        %v3349 = vpop.f32.mrb[0].mxu0
        %v3350 = vpop.f32.mrb[0].mxu0
        %v3351 = vadd.f32 %v3194, %v3350
        %v3352 = vpop.f32.mrb[0].mxu0
        %3353 = vmatprep.mubr.bf16.mxu0 0
        %3354 = vmatmul.mubr.bf16.gmra.mrb[0].mxu0 %v3216
        %v3355 = vpop.f32.mrb[0].mxu0
        %v3356 = vadd.f32 %v3194, %v3355
        %v3357 = vpop.f32.mrb[0].mxu0
        %v3358 = vpop.f32.mrb[0].mxu0
        %v3359 = vadd.f32 %v3194, %v3358
        %v3360 = vpop.f32.mrb[0].mxu0
        %3361 = vmatprep.mubr.bf16.mxu0 0
        %3362 = vmatmul.mubr.bf16.gmra.mrb[0].mxu0 %v3219
        %v3363 = vpop.f32.mrb[0].mxu0
        %v3364 = vadd.f32 %v3194, %v3363
        %v3365 = vpop.f32.mrb[0].mxu0
        %v3366 = vpop.f32.mrb[0].mxu0
        %v3367 = vadd.f32 %v3194, %v3366
        %v3368 = vpop.f32.mrb[0].mxu0
        %3369 = vmatprep.mubr.bf16.mxu0 0
        %3370 = vmatmul.mubr.bf16.gmra.mrb[0].mxu0 %v3222
        %v3371 = vpop.f32.mrb[0].mxu0
        %v3372 = vadd.f32 %v3194, %v3371
        %v3373 = vpop.f32.mrb[0].mxu0
        %v3374 = vpop.f32.mrb[0].mxu0
        %v3375 = vadd.f32 %v3194, %v3374
        %v3376 = vpop.f32.mrb[0].mxu0
        %3377 = vmatprep.mubr.bf16.mxu0 0
        %3378 = vmatmul.mubr.bf16.gmra.mrb[0].mxu0 %v3225
        %v3379 = vpop.f32.mrb[0].mxu0
        %v3380 = vadd.f32 %v3194, %v3379
        %v3381 = vpop.f32.mrb[0].mxu0
        %v3382 = vpop.f32.mrb[0].mxu0
        %v3383 = vadd.f32 %v3194, %v3382
        %v3384 = vpop.f32.mrb[0].mxu0
        %3385 = vmatprep.mubr.bf16.mxu0 0
        %3386 = vmatmul.mubr.bf16.gmra.mrb[0].mxu0 %v3228
        %v3387 = vpop.f32.mrb[0].mxu0
        %v3388 = vadd.f32 %v3194, %v3387
        %v3389 = vpop.f32.mrb[0].mxu0
        %v3390 = vpop.f32.mrb[0].mxu0
        %v3391 = vadd.f32 %v3194, %v3390
        %v3392 = vpop.f32.mrb[0].mxu0
        %3393 = vmatprep.mubr.bf16.mxu0 0
        %3394 = vmatmul.mubr.bf16.gmra.mrb[0].mxu0 %v3231
        %v3395 = vpop.f32.mrb[0].mxu0
        %v3396 = vadd.f32 %v3194, %v3395
        %v3397 = vpop.f32.mrb[0].mxu0
        %v3398 = vpop.f32.mrb[0].mxu0
        %v3399 = vadd.f32 %v3194, %v3398
        %v3400 = vpop.f32.mrb[0].mxu0
        %3401 = vmatprep.mubr.bf16.mxu0 0
        %3402 = vmatmul.mubr.bf16.gmra.mrb[0].mxu0 %v3234
        %v3403 = vpop.f32.mrb[0].mxu0
        %v3404 = vadd.f32 %v3194, %v3403
        %v3405 = vpop.f32.mrb[0].mxu0
        %v3406 = vpop.f32.mrb[0].mxu0
        %v3407 = vadd.f32 %v3194, %v3406
        %v3408 = vpop.f32.mrb[0].mxu0
        %3409 = vmatprep.mubr.bf16.mxu0 0
        %3410 = vmatmul.mubr.bf16.gmra.mrb[0].mxu0 %v3237
        %v3411 = vpop.f32.mrb[0].mxu0
        %v3412 = vadd.f32 %v3194, %v3411
        %v3413 = vpop.f32.mrb[0].mxu0
        %v3414 = vpop.f32.mrb[0].mxu0
        %v3415 = vadd.f32 %v3194, %v3414
        %v3416 = vpop.f32.mrb[0].mxu0
        %3417 = vmatprep.mubr.bf16.mxu0 0
        %3418 = vmatmul.mubr.bf16.gmra.mrb[0].mxu0 %v3240
        %v3419 = vpop.f32.mrb[0].mxu0
        %v3420 = vadd.f32 %v3194, %v3419
        %v3421 = vpop.f32.mrb[0].mxu0
        %v3422 = vpop.f32.mrb[0].mxu0
        %v3423 = vadd.f32 %v3194, %v3422
        %v3424 = vpop.f32.mrb[0].mxu0
        %3425 = vmatprep.mubr.bf16.mxu0 0
        %3426 = vmatmul.mubr.bf16.gmra.mrb[0].mxu0 %v3243
        %v3427 = vpop.f32.mrb[0].mxu0
        %v3428 = vadd.f32 %v3194, %v3427
        %v3429 = vpop.f32.mrb[0].mxu0
        %v3430 = vpop.f32.mrb[0].mxu0
        %v3431 = vadd.f32 %v3194, %v3430
        %v3432 = vpop.f32.mrb[0].mxu0
        %3433 = vmatprep.mubr.bf16.mxu0 0
        %3434 = vmatmul.mubr.bf16.gmra.mrb[0].mxu0 %v3246
        %v3435 = vpop.f32.mrb[0].mxu0
        %v3436 = vadd.f32 %v3194, %v3435
        %v3437 = vpop.f32.mrb[0].mxu0
        %v3438 = vpop.f32.mrb[0].mxu0
        %v3439 = vadd.f32 %v3194, %v3438
        %v3440 = vpop.f32.mrb[0].mxu0
        %3441 = vmatprep.mubr.bf16.mxu0 0
        %3442 = vmatmul.mubr.bf16.gmra.mrb[0].mxu0 %v3249
        %v3443 = vpop.f32.mrb[0].mxu0
        %v3444 = vadd.f32 %v3194, %v3443
        %v3445 = vpop.f32.mrb[0].mxu0
        %v3446 = vpop.f32.mrb[0].mxu0
        %v3447 = vadd.f32 %v3194, %v3446
        %v3448 = vpop.f32.mrb[0].mxu0
        %3449 = vmatprep.mubr.bf16.mxu0 0
        %3450 = vmatmul.mubr.bf16.gmra.mrb[0].mxu0 %v3252
        %v3451 = vpop.f32.mrb[0].mxu0
        %v3452 = vadd.f32 %v3194, %v3451
        %v3453 = vpop.f32.mrb[0].mxu0
        %v3454 = vpop.f32.mrb[0].mxu0
        %v3455 = vadd.f32 %v3194, %v3454
        %v3456 = vpop.f32.mrb[0].mxu0
        %3457 = vmatprep.mubr.bf16.mxu0 0
        %3458 = vmatmul.mubr.bf16.gmra.mrb[0].mxu0 %v3255
        %v3459 = vpop.f32.mrb[0].mxu0
        %v3460 = vadd.f32 %v3194, %v3459
        %v3461 = vpop.f32.mrb[0].mxu0
        %v3462 = vpop.f32.mrb[0].mxu0
        %v3463 = vadd.f32 %v3194, %v3462
        %v3464 = vpop.f32.mrb[0].mxu0
        %3465 = vmatprep.mubr.bf16.mxu0 0
        %3466 = vmatmul.mubr.bf16.gmra.mrb[0].mxu0 %v3258
        %v3467 = vpop.f32.mrb[0].mxu0
        %v3468 = vadd.f32 %v3194, %v3467
        %v3469 = vpop.f32.mrb[0].mxu0
        %v3470 = vpop.f32.mrb[0].mxu0
        %v3471 = vadd.f32 %v3194, %v3470
        %v3472 = vpop.f32.mrb[0].mxu0
        %3473 = vmatprep.mubr.bf16.mxu0 0
        %3474 = vmatmul.mubr.bf16.gmra.mrb[0].mxu0 %v3261
        %v3475 = vpop.f32.mrb[0].mxu0
        %v3476 = vadd.f32 %v3194, %v3475
        %v3477 = vpop.f32.mrb[0].mxu0
        %v3478 = vpop.f32.mrb[0].mxu0
        %v3479 = vadd.f32 %v3194, %v3478
        %v3480 = vpop.f32.mrb[0].mxu0
        %3481 = vmatprep.mubr.bf16.mxu0 0
        %3482 = vmatmul.mubr.bf16.gmra.mrb[0].mxu0 %v3264
        %v3483 = vpop.f32.mrb[0].mxu0
        %v3484 = vadd.f32 %v3194, %v3483
        %v3485 = vpop.f32.mrb[0].mxu0
        %v3486 = vpop.f32.mrb[0].mxu0
        %v3487 = vadd.f32 %v3194, %v3486
        %v3488 = vpop.f32.mrb[0].mxu0
        %3489 = vmatprep.mubr.bf16.mxu0 0
        %3490 = vmatmul.mubr.bf16.gmra.mrb[0].mxu0 %v3267
        %v3491 = vpop.f32.mrb[0].mxu0
        %v3492 = vadd.f32 %v3194, %v3491
        %v3493 = vpop.f32.mrb[0].mxu0
        %v3494 = vpop.f32.mrb[0].mxu0
        %v3495 = vadd.f32 %v3194, %v3494
        %v3496 = vpop.f32.mrb[0].mxu0
        %3497 = vmatprep.mubr.bf16.mxu0 0
        %3498 = vmatmul.mubr.bf16.gmra.mrb[0].mxu0 %v3270
        %v3499 = vpop.f32.mrb[0].mxu0
        %v3500 = vadd.f32 %v3194, %v3499
        %v3501 = vpop.f32.mrb[0].mxu0
        %v3502 = vpop.f32.mrb[0].mxu0
        %v3503 = vadd.f32 %v3194, %v3502
        %v3504 = vpop.f32.mrb[0].mxu0
        %3505 = vmatprep.mubr.bf16.mxu0 0
        %3506 = vmatmul.mubr.bf16.gmra.mrb[0].mxu0 %v3273
        %v3507 = vpop.f32.mrb[0].mxu0
        %v3508 = vadd.f32 %v3194, %v3507
        %v3509 = vpop.f32.mrb[0].mxu0
        %v3510 = vpop.f32.mrb[0].mxu0
        %v3511 = vadd.f32 %v3194, %v3510
        %v3512 = vpop.f32.mrb[0].mxu0
        %3513 = vmatprep.mubr.bf16.mxu0 0
        %3514 = vmatmul.mubr.bf16.gmra.mrb[0].mxu0 %v3276
        %v3515 = vpop.f32.mrb[0].mxu0
        %v3516 = vadd.f32 %v3194, %v3515
        %v3517 = vpop.f32.mrb[0].mxu0
        %v3518 = vpop.f32.mrb[0].mxu0
        %v3519 = vadd.f32 %v3194, %v3518
        %v3520 = vpop.f32.mrb[0].mxu0
        %3521 = vmatprep.mubr.bf16.mxu0 0
        %3522 = vmatmul.mubr.bf16.gmra.mrb[0].mxu0 %v3279
        %v3523 = vpop.f32.mrb[0].mxu0
        %v3524 = vadd.f32 %v3194, %v3523
        %v3525 = vpop.f32.mrb[0].mxu0
        %v3526 = vpop.f32.mrb[0].mxu0
        %v3527 = vadd.f32 %v3194, %v3526
        %v3528 = vpop.f32.mrb[0].mxu0
        %3529 = vmatprep.mubr.bf16.mxu0 0
        %3530 = vmatmul.mubr.bf16.gmra.mrb[0].mxu0 %v3282
        %v3531 = vpop.f32.mrb[0].mxu0
        %v3532 = vadd.f32 %v3194, %v3531
        %v3533 = vpop.f32.mrb[0].mxu0
        %v3534 = vpop.f32.mrb[0].mxu0
        %v3535 = vadd.f32 %v3194, %v3534
        %v3536 = vpop.f32.mrb[0].mxu0
        %3537 = vmatprep.mubr.bf16.mxu0 0
        %3538 = vmatmul.mubr.bf16.gmra.mrb[0].mxu0 %v3285
        %v3539 = vpop.f32.mrb[0].mxu0
        %v3540 = vadd.f32 %v3194, %v3539
        %v3541 = vpop.f32.mrb[0].mxu0
        %v3542 = vpop.f32.mrb[0].mxu0
        %v3543 = vadd.f32 %v3194, %v3542
        %v3544 = vpop.f32.mrb[0].mxu0
        %3545 = vmatprep.mubr.bf16.mxu0 0
        %3546 = vmatmul.mubr.bf16.gmra.mrb[0].mxu0 %v3288
        %v3547 = vpop.f32.mrb[0].mxu0
        %v3548 = vadd.f32 %v3194, %v3547
        %v3549 = vpop.f32.mrb[0].mxu0
        %v3550 = vpop.f32.mrb[0].mxu0
        %v3551 = vadd.f32 %v3194, %v3550
        %v3552 = vpop.f32.mrb[0].mxu0
        %3553 = vmatprep.mubr.bf16.mxu0 0
        %3554 = vmatmul.mubr.bf16.gmra.mrb[0].mxu0 %v3291
        %v3555 = vpop.f32.mrb[0].mxu0
        %v3556 = vadd.f32 %v3194, %v3555
        %v3557 = vpop.f32.mrb[0].mxu0
        %v3558 = vpop.f32.mrb[0].mxu0
        %v3559 = vadd.f32 %v3194, %v3558
        %v3560 = vpop.f32.mrb[0].mxu0
        %3561 = vmatprep.mubr.bf16.mxu0 0
        %3562 = vmatmul.mubr.bf16.gmra.mrb[0].mxu0 %v3294
        %v3563 = vpop.f32.mrb[0].mxu0
        %v3564 = vadd.f32 %v3194, %v3563
        %v3565 = vpop.f32.mrb[0].mxu0
        %v3566 = vpop.f32.mrb[0].mxu0
        %v3567 = vadd.f32 %v3194, %v3566
        %v3568 = vpop.f32.mrb[0].mxu0
        %3569 = vmatprep.mubr.bf16.mxu0 0
        %3570 = vmatmul.mubr.bf16.gmra.mrb[0].mxu0 %v3297
        %v3571 = vpop.f32.mrb[0].mxu0
        %v3572 = vadd.f32 %v3194, %v3571
        %v3573 = vpop.f32.mrb[0].mxu0
        %v3574 = vpop.f32.mrb[0].mxu0
        %v3575 = vadd.f32 %v3194, %v3574
        %v3576 = vpop.f32.mrb[0].mxu0
        %3577 = vmatprep.mubr.bf16.mxu0 0
        %3578 = vmatmul.mubr.bf16.gmra.mrb[0].mxu0 %v3300
        %v3579 = vpop.f32.mrb[0].mxu0
        %v3580 = vadd.f32 %v3194, %v3579
        %v3581 = vpop.f32.mrb[0].mxu0
        %v3582 = vpop.f32.mrb[0].mxu0
        %v3583 = vadd.f32 %v3194, %v3582
        %v3584 = vpop.f32.mrb[0].mxu0
        %3585 = vmatprep.mubr.bf16.mxu0 0
        %3586 = vmatmul.mubr.bf16.gmra.mrb[0].mxu0 %v3303
        %v3587 = vpop.f32.mrb[0].mxu0
        %v3588 = vadd.f32 %v3194, %v3587
        %v3589 = vpop.f32.mrb[0].mxu0
        %v3590 = vpop.f32.mrb[0].mxu0
        %v3591 = vadd.f32 %v3194, %v3590
        %v3592 = vpop.f32.mrb[0].mxu0
        %3593 = vdwg.mxu0
        %v3594 = vmax.f32 %v3340, 0.0
        %v3595 = vmax.f32 %v3343, 0.0
        %v3596 = vmax.f32 %v3348, 0.0
        %v3597 = vmax.f32 %v3351, 0.0
        %v3598 = vmax.f32 %v3356, 0.0
        %v3599 = vmax.f32 %v3359, 0.0
        %v3600 = vmax.f32 %v3364, 0.0
        %v3601 = vmax.f32 %v3367, 0.0
        %v3602 = vmax.f32 %v3372, 0.0
        %v3603 = vmax.f32 %v3375, 0.0
        %v3604 = vmax.f32 %v3380, 0.0
        %v3605 = vmax.f32 %v3383, 0.0
        %v3606 = vmax.f32 %v3388, 0.0
        %v3607 = vmax.f32 %v3391, 0.0
        %v3608 = vmax.f32 %v3396, 0.0
        %v3609 = vmax.f32 %v3399, 0.0
        %v3610 = vmax.f32 %v3404, 0.0
        %v3611 = vmax.f32 %v3407, 0.0
        %v3612 = vmax.f32 %v3412, 0.0
        %v3613 = vmax.f32 %v3415, 0.0
        %v3614 = vmax.f32 %v3420, 0.0
        %v3615 = vmax.f32 %v3423, 0.0
        %v3616 = vmax.f32 %v3428, 0.0
        %v3617 = vmax.f32 %v3431, 0.0
        %v3618 = vmax.f32 %v3436, 0.0
        %v3619 = vmax.f32 %v3439, 0.0
        %v3620 = vmax.f32 %v3444, 0.0
        %v3621 = vmax.f32 %v3447, 0.0
        %v3622 = vmax.f32 %v3452, 0.0
        %v3623 = vmax.f32 %v3455, 0.0
        %v3624 = vmax.f32 %v3460, 0.0
        %v3625 = vmax.f32 %v3463, 0.0
        %v3626 = vmax.f32 %v3468, 0.0
        %v3627 = vmax.f32 %v3471, 0.0
        %v3628 = vmax.f32 %v3476, 0.0
        %v3629 = vmax.f32 %v3479, 0.0
        %v3630 = vmax.f32 %v3484, 0.0
        %v3631 = vmax.f32 %v3487, 0.0
        %v3632 = vmax.f32 %v3492, 0.0
        %v3633 = vmax.f32 %v3495, 0.0
        %v3634 = vmax.f32 %v3500, 0.0
        %v3635 = vmax.f32 %v3503, 0.0
        %v3636 = vmax.f32 %v3508, 0.0
        %v3637 = vmax.f32 %v3511, 0.0
        %v3638 = vmax.f32 %v3516, 0.0
        %v3639 = vmax.f32 %v3519, 0.0
        %v3640 = vmax.f32 %v3524, 0.0
        %v3641 = vmax.f32 %v3527, 0.0
        %v3642 = vmax.f32 %v3532, 0.0
        %v3643 = vmax.f32 %v3535, 0.0
        %v3644 = vmax.f32 %v3540, 0.0
        %v3645 = vmax.f32 %v3543, 0.0
        %v3646 = vmax.f32 %v3548, 0.0
        %v3647 = vmax.f32 %v3551, 0.0
        %v3648 = vmax.f32 %v3556, 0.0
        %v3649 = vmax.f32 %v3559, 0.0
        %v3650 = vmax.f32 %v3564, 0.0
        %v3651 = vmax.f32 %v3567, 0.0
        %v3652 = vmax.f32 %v3572, 0.0
        %v3653 = vmax.f32 %v3575, 0.0
        %v3654 = vmax.f32 %v3580, 0.0
        %v3655 = vmax.f32 %v3583, 0.0
        %v3656 = vmax.f32 %v3588, 0.0
        %v3657 = vmax.f32 %v3591, 0.0
        %vm3658 = vcmask 523264
        %3659 = vst.msk [vmem:[#allocation2] sm:$0xff] %vm3658, %v3594
        %3660 = vst.msk [vmem:[#allocation2 + $0x8] sm:$0xff] %vm3658, %v3595
        %3661 = vst.msk [vmem:[#allocation2 + $0x10] sm:$0xff] %vm3658, %v3596
        %3662 = vst.msk [vmem:[#allocation2 + $0x18] sm:$0xff] %vm3658, %v3597
        %3663 = vst.msk [vmem:[#allocation2 + $0x20] sm:$0xff] %vm3658, %v3598
        %3664 = vst.msk [vmem:[#allocation2 + $0x28] sm:$0xff] %vm3658, %v3599
        %3665 = vst.msk [vmem:[#allocation2 + $0x30] sm:$0xff] %vm3658, %v3600
        %3666 = vst.msk [vmem:[#allocation2 + $0x38] sm:$0xff] %vm3658, %v3601
        %3667 = vst.msk [vmem:[#allocation2 + $0x40] sm:$0xff] %vm3658, %v3602
        %3668 = vst.msk [vmem:[#allocation2 + $0x48] sm:$0xff] %vm3658, %v3603
        %3669 = vst.msk [vmem:[#allocation2 + $0x50] sm:$0xff] %vm3658, %v3604
        %3670 = vst.msk [vmem:[#allocation2 + $0x58] sm:$0xff] %vm3658, %v3605
        %3671 = vst.msk [vmem:[#allocation2 + $0x60] sm:$0xff] %vm3658, %v3606
        %3672 = vst.msk [vmem:[#allocation2 + $0x68] sm:$0xff] %vm3658, %v3607
        %3673 = vst.msk [vmem:[#allocation2 + $0x70] sm:$0xff] %vm3658, %v3608
        %3674 = vst.msk [vmem:[#allocation2 + $0x78] sm:$0xff] %vm3658, %v3609
        %3675 = vst.msk [vmem:[#allocation2 + $0x80] sm:$0xff] %vm3658, %v3610
        %3676 = vst.msk [vmem:[#allocation2 + $0x88] sm:$0xff] %vm3658, %v3611
        %3677 = vst.msk [vmem:[#allocation2 + $0x90] sm:$0xff] %vm3658, %v3612
        %3678 = vst.msk [vmem:[#allocation2 + $0x98] sm:$0xff] %vm3658, %v3613
        %3679 = vst.msk [vmem:[#allocation2 + $0xa0] sm:$0xff] %vm3658, %v3614
        %3680 = vst.msk [vmem:[#allocation2 + $0xa8] sm:$0xff] %vm3658, %v3615
        %3681 = vst.msk [vmem:[#allocation2 + $0xb0] sm:$0xff] %vm3658, %v3616
        %3682 = vst.msk [vmem:[#allocation2 + $0xb8] sm:$0xff] %vm3658, %v3617
        %3683 = vst.msk [vmem:[#allocation2 + $0xc0] sm:$0xff] %vm3658, %v3618
        %3684 = vst.msk [vmem:[#allocation2 + $0xc8] sm:$0xff] %vm3658, %v3619
        %3685 = vst.msk [vmem:[#allocation2 + $0xd0] sm:$0xff] %vm3658, %v3620
        %3686 = vst.msk [vmem:[#allocation2 + $0xd8] sm:$0xff] %vm3658, %v3621
        %3687 = vst.msk [vmem:[#allocation2 + $0xe0] sm:$0xff] %vm3658, %v3622
        %3688 = vst.msk [vmem:[#allocation2 + $0xe8] sm:$0xff] %vm3658, %v3623
        %3689 = vst.msk [vmem:[#allocation2 + $0xf0] sm:$0xff] %vm3658, %v3624
        %3690 = vst.msk [vmem:[#allocation2 + $0xf8] sm:$0xff] %vm3658, %v3625
        %3691 = vst.msk [vmem:[#allocation2 + $0x100] sm:$0xff] %vm3658, %v3626
        %3692 = vst.msk [vmem:[#allocation2 + $0x108] sm:$0xff] %vm3658, %v3627
        %3693 = vst.msk [vmem:[#allocation2 + $0x110] sm:$0xff] %vm3658, %v3628
        %3694 = vst.msk [vmem:[#allocation2 + $0x118] sm:$0xff] %vm3658, %v3629
        %3695 = vst.msk [vmem:[#allocation2 + $0x120] sm:$0xff] %vm3658, %v3630
        %3696 = vst.msk [vmem:[#allocation2 + $0x128] sm:$0xff] %vm3658, %v3631
        %3697 = vst.msk [vmem:[#allocation2 + $0x130] sm:$0xff] %vm3658, %v3632
        %3698 = vst.msk [vmem:[#allocation2 + $0x138] sm:$0xff] %vm3658, %v3633
        %3699 = vst.msk [vmem:[#allocation2 + $0x140] sm:$0xff] %vm3658, %v3634
        %3700 = vst.msk [vmem:[#allocation2 + $0x148] sm:$0xff] %vm3658, %v3635
        %3701 = vst.msk [vmem:[#allocation2 + $0x150] sm:$0xff] %vm3658, %v3636
        %3702 = vst.msk [vmem:[#allocation2 + $0x158] sm:$0xff] %vm3658, %v3637
        %3703 = vst.msk [vmem:[#allocation2 + $0x160] sm:$0xff] %vm3658, %v3638
        %3704 = vst.msk [vmem:[#allocation2 + $0x168] sm:$0xff] %vm3658, %v3639
        %3705 = vst.msk [vmem:[#allocation2 + $0x170] sm:$0xff] %vm3658, %v3640
        %3706 = vst.msk [vmem:[#allocation2 + $0x178] sm:$0xff] %vm3658, %v3641
        %3707 = vst.msk [vmem:[#allocation2 + $0x180] sm:$0xff] %vm3658, %v3642
        %3708 = vst.msk [vmem:[#allocation2 + $0x188] sm:$0xff] %vm3658, %v3643
        %3709 = vst.msk [vmem:[#allocation2 + $0x190] sm:$0xff] %vm3658, %v3644
        %3710 = vst.msk [vmem:[#allocation2 + $0x198] sm:$0xff] %vm3658, %v3645
        %3711 = vst.msk [vmem:[#allocation2 + $0x1a0] sm:$0xff] %vm3658, %v3646
        %3712 = vst.msk [vmem:[#allocation2 + $0x1a8] sm:$0xff] %vm3658, %v3647
        %3713 = vst.msk [vmem:[#allocation2 + $0x1b0] sm:$0xff] %vm3658, %v3648
        %3714 = vst.msk [vmem:[#allocation2 + $0x1b8] sm:$0xff] %vm3658, %v3649
        %3715 = vst.msk [vmem:[#allocation2 + $0x1c0] sm:$0xff] %vm3658, %v3650
        %3716 = vst.msk [vmem:[#allocation2 + $0x1c8] sm:$0xff] %vm3658, %v3651
        %3717 = vst.msk [vmem:[#allocation2 + $0x1d0] sm:$0xff] %vm3658, %v3652
        %3718 = vst.msk [vmem:[#allocation2 + $0x1d8] sm:$0xff] %vm3658, %v3653
        %3719 = vst.msk [vmem:[#allocation2 + $0x1e0] sm:$0xff] %vm3658, %v3654
        %3720 = vst.msk [vmem:[#allocation2 + $0x1e8] sm:$0xff] %vm3658, %v3655
        %3721 = vst.msk [vmem:[#allocation2 + $0x1f0] sm:$0xff] %vm3658, %v3656
        %3722 = vst.msk [vmem:[#allocation2 + $0x1f8] sm:$0xff] %vm3658, %v3657
        %v3723 = vld [vmem:[#allocation2] ss:$2 sm:$0xff]
        %s3724 = scalar_lea.vmem [#allocation2], 16
        %v3725 = vld [vmem:[%s3724] ss:$2 sm:$0xff]
        %s3726 = scalar_lea.vmem [#allocation2], 32
        %v3727 = vld [vmem:[%s3726] ss:$2 sm:$0xff]
        %s3728 = scalar_lea.vmem [#allocation2], 48
        %v3729 = vld [vmem:[%s3728] ss:$2 sm:$0xff]
        %s3730 = scalar_lea.vmem [#allocation2], 64
        %v3731 = vld [vmem:[%s3730] ss:$2 sm:$0xff]
        %s3732 = scalar_lea.vmem [#allocation2], 80
        %v3733 = vld [vmem:[%s3732] ss:$2 sm:$0xff]
        %s3734 = scalar_lea.vmem [#allocation2], 96
        %v3735 = vld [vmem:[%s3734] ss:$2 sm:$0xff]
        %s3736 = scalar_lea.vmem [#allocation2], 112
        %v3737 = vld [vmem:[%s3736] ss:$2 sm:$0xff]
        %s3738 = scalar_lea.vmem [#allocation2], 128
        %v3739 = vld [vmem:[%s3738] ss:$2 sm:$0xff]
        %s3740 = scalar_lea.vmem [#allocation2], 144
        %v3741 = vld [vmem:[%s3740] ss:$2 sm:$0xff]
        %s3742 = scalar_lea.vmem [#allocation2], 160
        %v3743 = vld [vmem:[%s3742] ss:$2 sm:$0xff]
        %s3744 = scalar_lea.vmem [#allocation2], 176
        %v3745 = vld [vmem:[%s3744] ss:$2 sm:$0xff]
        %s3746 = scalar_lea.vmem [#allocation2], 192
        %v3747 = vld [vmem:[%s3746] ss:$2 sm:$0xff]
        %s3748 = scalar_lea.vmem [#allocation2], 208
        %v3749 = vld [vmem:[%s3748] ss:$2 sm:$0xff]
        %s3750 = scalar_lea.vmem [#allocation2], 224
        %v3751 = vld [vmem:[%s3750] ss:$2 sm:$0xff]
        %s3752 = scalar_lea.vmem [#allocation2], 240
        %v3753 = vld [vmem:[%s3752] ss:$2 sm:$0xff]
        %s3754 = scalar_lea.vmem [#allocation2], 256
        %v3755 = vld [vmem:[%s3754] ss:$2 sm:$0xff]
        %s3756 = scalar_lea.vmem [#allocation2], 272
        %v3757 = vld [vmem:[%s3756] ss:$2 sm:$0xff]
        %s3758 = scalar_lea.vmem [#allocation2], 288
        %v3759 = vld [vmem:[%s3758] ss:$2 sm:$0xff]
        %s3760 = scalar_lea.vmem [#allocation2], 304
        %v3761 = vld [vmem:[%s3760] ss:$2 sm:$0xff]
        %s3762 = scalar_lea.vmem [#allocation2], 320
        %v3763 = vld [vmem:[%s3762] ss:$2 sm:$0xff]
        %s3764 = scalar_lea.vmem [#allocation2], 336
        %v3765 = vld [vmem:[%s3764] ss:$2 sm:$0xff]
        %s3766 = scalar_lea.vmem [#allocation2], 352
        %v3767 = vld [vmem:[%s3766] ss:$2 sm:$0xff]
        %s3768 = scalar_lea.vmem [#allocation2], 368
        %v3769 = vld [vmem:[%s3768] ss:$2 sm:$0xff]
        %s3770 = scalar_lea.vmem [#allocation2], 384
        %v3771 = vld [vmem:[%s3770] ss:$2 sm:$0xff]
        %s3772 = scalar_lea.vmem [#allocation2], 400
        %v3773 = vld [vmem:[%s3772] ss:$2 sm:$0xff]
        %s3774 = scalar_lea.vmem [#allocation2], 416
        %v3775 = vld [vmem:[%s3774] ss:$2 sm:$0xff]
        %s3776 = scalar_lea.vmem [#allocation2], 432
        %v3777 = vld [vmem:[%s3776] ss:$2 sm:$0xff]
        %s3778 = scalar_lea.vmem [#allocation2], 448
        %v3779 = vld [vmem:[%s3778] ss:$2 sm:$0xff]
        %s3780 = scalar_lea.vmem [#allocation2], 464
        %v3781 = vld [vmem:[%s3780] ss:$2 sm:$0xff]
        %s3782 = scalar_lea.vmem [#allocation2], 480
        %v3783 = vld [vmem:[%s3782] ss:$2 sm:$0xff]
        %s3784 = scalar_lea.vmem [#allocation2], 496
        %v3785 = vld [vmem:[%s3784] ss:$2 sm:$0xff]
        %s3786 = scalar_lea.vmem [#allocation2], 1
        %v3787 = vld [vmem:[%s3786] ss:$2 sm:$0xff]
        %s3788 = scalar_lea.vmem [#allocation2], 17
        %v3789 = vld [vmem:[%s3788] ss:$2 sm:$0xff]
        %s3790 = scalar_lea.vmem [#allocation2], 33
        %v3791 = vld [vmem:[%s3790] ss:$2 sm:$0xff]
        %s3792 = scalar_lea.vmem [#allocation2], 49
        %v3793 = vld [vmem:[%s3792] ss:$2 sm:$0xff]
        %s3794 = scalar_lea.vmem [#allocation2], 65
        %v3795 = vld [vmem:[%s3794] ss:$2 sm:$0xff]
        %s3796 = scalar_lea.vmem [#allocation2], 81
        %v3797 = vld [vmem:[%s3796] ss:$2 sm:$0xff]
        %s3798 = scalar_lea.vmem [#allocation2], 97
        %v3799 = vld [vmem:[%s3798] ss:$2 sm:$0xff]
        %s3800 = scalar_lea.vmem [#allocation2], 113
        %v3801 = vld [vmem:[%s3800] ss:$2 sm:$0xff]
        %s3802 = scalar_lea.vmem [#allocation2], 129
        %v3803 = vld [vmem:[%s3802] ss:$2 sm:$0xff]
        %s3804 = scalar_lea.vmem [#allocation2], 145
        %v3805 = vld [vmem:[%s3804] ss:$2 sm:$0xff]
        %s3806 = scalar_lea.vmem [#allocation2], 161
        %v3807 = vld [vmem:[%s3806] ss:$2 sm:$0xff]
        %s3808 = scalar_lea.vmem [#allocation2], 177
        %v3809 = vld [vmem:[%s3808] ss:$2 sm:$0xff]
        %s3810 = scalar_lea.vmem [#allocation2], 193
        %v3811 = vld [vmem:[%s3810] ss:$2 sm:$0xff]
        %s3812 = scalar_lea.vmem [#allocation2], 209
        %v3813 = vld [vmem:[%s3812] ss:$2 sm:$0xff]
        %s3814 = scalar_lea.vmem [#allocation2], 225
        %v3815 = vld [vmem:[%s3814] ss:$2 sm:$0xff]
        %s3816 = scalar_lea.vmem [#allocation2], 241
        %v3817 = vld [vmem:[%s3816] ss:$2 sm:$0xff]
        %s3818 = scalar_lea.vmem [#allocation2], 257
        %v3819 = vld [vmem:[%s3818] ss:$2 sm:$0xff]
        %s3820 = scalar_lea.vmem [#allocation2], 273
        %v3821 = vld [vmem:[%s3820] ss:$2 sm:$0xff]
        %s3822 = scalar_lea.vmem [#allocation2], 289
        %v3823 = vld [vmem:[%s3822] ss:$2 sm:$0xff]
        %s3824 = scalar_lea.vmem [#allocation2], 305
        %v3825 = vld [vmem:[%s3824] ss:$2 sm:$0xff]
        %s3826 = scalar_lea.vmem [#allocation2], 321
        %v3827 = vld [vmem:[%s3826] ss:$2 sm:$0xff]
        %s3828 = scalar_lea.vmem [#allocation2], 337
        %v3829 = vld [vmem:[%s3828] ss:$2 sm:$0xff]
        %s3830 = scalar_lea.vmem [#allocation2], 353
        %v3831 = vld [vmem:[%s3830] ss:$2 sm:$0xff]
        %s3832 = scalar_lea.vmem [#allocation2], 369
        %v3833 = vld [vmem:[%s3832] ss:$2 sm:$0xff]
        %s3834 = scalar_lea.vmem [#allocation2], 385
        %v3835 = vld [vmem:[%s3834] ss:$2 sm:$0xff]
        %s3836 = scalar_lea.vmem [#allocation2], 401
        %v3837 = vld [vmem:[%s3836] ss:$2 sm:$0xff]
        %s3838 = scalar_lea.vmem [#allocation2], 417
        %v3839 = vld [vmem:[%s3838] ss:$2 sm:$0xff]
        %s3840 = scalar_lea.vmem [#allocation2], 433
        %v3841 = vld [vmem:[%s3840] ss:$2 sm:$0xff]
        %s3842 = scalar_lea.vmem [#allocation2], 449
        %v3843 = vld [vmem:[%s3842] ss:$2 sm:$0xff]
        %s3844 = scalar_lea.vmem [#allocation2], 465
        %v3845 = vld [vmem:[%s3844] ss:$2 sm:$0xff]
        %s3846 = scalar_lea.vmem [#allocation2], 481
        %v3847 = vld [vmem:[%s3846] ss:$2 sm:$0xff]
        %s3848 = scalar_lea.vmem [#allocation2], 497
        %v3849 = vld [vmem:[%s3848] ss:$2 sm:$0xff]
        %v3850 = vmax.f32 %v3723, %v3787
        %v3851 = vmax.f32 %v3725, %v3789
        %v3852 = vmax.f32 %v3727, %v3791
        %v3853 = vmax.f32 %v3729, %v3793
        %v3854 = vmax.f32 %v3731, %v3795
        %v3855 = vmax.f32 %v3733, %v3797
        %v3856 = vmax.f32 %v3735, %v3799
        %v3857 = vmax.f32 %v3737, %v3801
        %v3858 = vmax.f32 %v3739, %v3803
        %v3859 = vmax.f32 %v3741, %v3805
        %v3860 = vmax.f32 %v3743, %v3807
        %v3861 = vmax.f32 %v3745, %v3809
        %v3862 = vmax.f32 %v3747, %v3811
        %v3863 = vmax.f32 %v3749, %v3813
        %v3864 = vmax.f32 %v3751, %v3815
        %v3865 = vmax.f32 %v3753, %v3817
        %v3866 = vmax.f32 %v3755, %v3819
        %v3867 = vmax.f32 %v3757, %v3821
        %v3868 = vmax.f32 %v3759, %v3823
        %v3869 = vmax.f32 %v3761, %v3825
        %v3870 = vmax.f32 %v3763, %v3827
        %v3871 = vmax.f32 %v3765, %v3829
        %v3872 = vmax.f32 %v3767, %v3831
        %v3873 = vmax.f32 %v3769, %v3833
        %v3874 = vmax.f32 %v3771, %v3835
        %v3875 = vmax.f32 %v3773, %v3837
        %v3876 = vmax.f32 %v3775, %v3839
        %v3877 = vmax.f32 %v3777, %v3841
        %v3878 = vmax.f32 %v3779, %v3843
        %v3879 = vmax.f32 %v3781, %v3845
        %v3880 = vmax.f32 %v3783, %v3847
        %v3881 = vmax.f32 %v3785, %v3849
        %v3882 = vrot.slane %v3850, 7
        %v3883 = vrot.slane %v3851, 7
        %v3884 = vrot.slane %v3852, 7
        %v3885 = vrot.slane %v3853, 7
        %v3886 = vrot.slane %v3854, 7
        %v3887 = vrot.slane %v3855, 7
        %v3888 = vrot.slane %v3856, 7
        %v3889 = vrot.slane %v3857, 7
        %v3890 = vrot.slane %v3858, 7
        %v3891 = vrot.slane %v3859, 7
        %v3892 = vrot.slane %v3860, 7
        %v3893 = vrot.slane %v3861, 7
        %v3894 = vrot.slane %v3862, 7
        %v3895 = vrot.slane %v3863, 7
        %v3896 = vrot.slane %v3864, 7
        %v3897 = vrot.slane %v3865, 7
        %v3898 = vrot.slane %v3866, 7
        %v3899 = vrot.slane %v3867, 7
        %v3900 = vrot.slane %v3868, 7
        %v3901 = vrot.slane %v3869, 7
        %v3902 = vrot.slane %v3870, 7
        %v3903 = vrot.slane %v3871, 7
        %v3904 = vrot.slane %v3872, 7
        %v3905 = vrot.slane %v3873, 7
        %v3906 = vrot.slane %v3874, 7
        %v3907 = vrot.slane %v3875, 7
        %v3908 = vrot.slane %v3876, 7
        %v3909 = vrot.slane %v3877, 7
        %v3910 = vrot.slane %v3878, 7
        %v3911 = vrot.slane %v3879, 7
        %v3912 = vrot.slane %v3880, 7
        %v3913 = vrot.slane %v3881, 7
        %v3914 = vsel %vm1844, %v3912, %v3913
        %v3915 = vsel %vm1844, %v3911, %v3912
        %v3916 = vsel %vm1844, %v3910, %v3911
        %v3917 = vsel %vm1844, %v3909, %v3910
        %v3918 = vsel %vm1844, %v3908, %v3909
        %v3919 = vsel %vm1844, %v3907, %v3908
        %v3920 = vsel %vm1844, %v3906, %v3907
        %v3921 = vsel %vm1844, %v3905, %v3906
        %v3922 = vsel %vm1844, %v3904, %v3905
        %v3923 = vsel %vm1844, %v3903, %v3904
        %v3924 = vsel %vm1844, %v3902, %v3903
        %v3925 = vsel %vm1844, %v3901, %v3902
        %v3926 = vsel %vm1844, %v3900, %v3901
        %v3927 = vsel %vm1844, %v3899, %v3900
        %v3928 = vsel %vm1844, %v3898, %v3899
        %v3929 = vsel %vm1844, %v3897, %v3898
        %v3930 = vsel %vm1844, %v3896, %v3897
        %v3931 = vsel %vm1844, %v3895, %v3896
        %v3932 = vsel %vm1844, %v3894, %v3895
        %v3933 = vsel %vm1844, %v3893, %v3894
        %v3934 = vsel %vm1844, %v3892, %v3893
        %v3935 = vsel %vm1844, %v3891, %v3892
        %v3936 = vsel %vm1844, %v3890, %v3891
        %v3937 = vsel %vm1844, %v3889, %v3890
        %v3938 = vsel %vm1844, %v3888, %v3889
        %v3939 = vsel %vm1844, %v3887, %v3888
        %v3940 = vsel %vm1844, %v3886, %v3887
        %v3941 = vsel %vm1844, %v3885, %v3886
        %v3942 = vsel %vm1844, %v3884, %v3885
        %v3943 = vsel %vm1844, %v3883, %v3884
        %v3944 = vsel %vm1844, %v3882, %v3883
        %v3945 = vsel %vm1844, %v3913, %v3882
        %v3946 = vrot.slane %v3850, 1
        %v3947 = vrot.slane %v3851, 1
        %v3948 = vrot.slane %v3852, 1
        %v3949 = vrot.slane %v3853, 1
        %v3950 = vrot.slane %v3854, 1
        %v3951 = vrot.slane %v3855, 1
        %v3952 = vrot.slane %v3856, 1
        %v3953 = vrot.slane %v3857, 1
        %v3954 = vrot.slane %v3858, 1
        %v3955 = vrot.slane %v3859, 1
        %v3956 = vrot.slane %v3860, 1
        %v3957 = vrot.slane %v3861, 1
        %v3958 = vrot.slane %v3862, 1
        %v3959 = vrot.slane %v3863, 1
        %v3960 = vrot.slane %v3864, 1
        %v3961 = vrot.slane %v3865, 1
        %v3962 = vrot.slane %v3866, 1
        %v3963 = vrot.slane %v3867, 1
        %v3964 = vrot.slane %v3868, 1
        %v3965 = vrot.slane %v3869, 1
        %v3966 = vrot.slane %v3870, 1
        %v3967 = vrot.slane %v3871, 1
        %v3968 = vrot.slane %v3872, 1
        %v3969 = vrot.slane %v3873, 1
        %v3970 = vrot.slane %v3874, 1
        %v3971 = vrot.slane %v3875, 1
        %v3972 = vrot.slane %v3876, 1
        %v3973 = vrot.slane %v3877, 1
        %v3974 = vrot.slane %v3878, 1
        %v3975 = vrot.slane %v3879, 1
        %v3976 = vrot.slane %v3880, 1
        %v3977 = vrot.slane %v3881, 1
        %v3978 = vsel %vm1973, %v3976, %v3977
        %v3979 = vsel %vm1973, %v3975, %v3976
        %v3980 = vsel %vm1973, %v3974, %v3975
        %v3981 = vsel %vm1973, %v3973, %v3974
        %v3982 = vsel %vm1973, %v3972, %v3973
        %v3983 = vsel %vm1973, %v3971, %v3972
        %v3984 = vsel %vm1973, %v3970, %v3971
        %v3985 = vsel %vm1973, %v3969, %v3970
        %v3986 = vsel %vm1973, %v3968, %v3969
        %v3987 = vsel %vm1973, %v3967, %v3968
        %v3988 = vsel %vm1973, %v3966, %v3967
        %v3989 = vsel %vm1973, %v3965, %v3966
        %v3990 = vsel %vm1973, %v3964, %v3965
        %v3991 = vsel %vm1973, %v3963, %v3964
        %v3992 = vsel %vm1973, %v3962, %v3963
        %v3993 = vsel %vm1973, %v3961, %v3962
        %v3994 = vsel %vm1973, %v3960, %v3961
        %v3995 = vsel %vm1973, %v3959, %v3960
        %v3996 = vsel %vm1973, %v3958, %v3959
        %v3997 = vsel %vm1973, %v3957, %v3958
        %v3998 = vsel %vm1973, %v3956, %v3957
        %v3999 = vsel %vm1973, %v3955, %v3956
        %v4000 = vsel %vm1973, %v3954, %v3955
        %v4001 = vsel %vm1973, %v3953, %v3954
        %v4002 = vsel %vm1973, %v3952, %v3953
        %v4003 = vsel %vm1973, %v3951, %v3952
        %v4004 = vsel %vm1973, %v3950, %v3951
        %v4005 = vsel %vm1973, %v3949, %v3950
        %v4006 = vsel %vm1973, %v3948, %v3949
        %v4007 = vsel %vm1973, %v3947, %v3948
        %v4008 = vsel %vm1973, %v3946, %v3947
        %v4009 = vsel %vm1973, %v3977, %v3946
        %v4010 = vand.u32 %v1843, 31
        %v4011 = vand.u32 %v2038, 31
        %v4012 = vand.u32 %v2039, 31
        %v4013 = vand.u32 %v2040, 31
        %v4014 = vand.u32 %v2041, 31
        %v4015 = vand.u32 %v2042, 31
        %v4016 = vand.u32 %v2043, 31
        %v4017 = vand.u32 %v2044, 31
        %v4018 = vand.u32 %v2045, 31
        %v4019 = vand.u32 %v2046, 31
        %v4020 = vand.u32 %v2047, 31
        %v4021 = vand.u32 %v2048, 31
        %v4022 = vand.u32 %v2049, 31
        %v4023 = vand.u32 %v2050, 31
        %v4024 = vand.u32 %v2051, 31
        %v4025 = vand.u32 %v2052, 31
        %v4026 = vand.u32 %v2053, 31
        %v4027 = vand.u32 %v2054, 31
        %v4028 = vand.u32 %v2055, 31
        %v4029 = vand.u32 %v2056, 31
        %v4030 = vand.u32 %v2057, 31
        %v4031 = vand.u32 %v2058, 31
        %v4032 = vand.u32 %v2059, 31
        %v4033 = vand.u32 %v2060, 31
        %v4034 = vand.u32 %v2061, 31
        %v4035 = vand.u32 %v2062, 31
        %v4036 = vand.u32 %v2063, 31
        %v4037 = vand.u32 %v2064, 31
        %v4038 = vand.u32 %v2065, 31
        %v4039 = vand.u32 %v2066, 31
        %v4040 = vand.u32 %v2067, 31
        %v4041 = vand.u32 %v2068, 31
        %vm4042 = vcmp.eq.s32.totalorder %v4010, 0
        %vm4043 = vcmp.eq.s32.totalorder %v4011, 0
        %vm4044 = vcmp.eq.s32.totalorder %v4012, 0
        %vm4045 = vcmp.eq.s32.totalorder %v4013, 0
        %vm4046 = vcmp.eq.s32.totalorder %v4014, 0
        %vm4047 = vcmp.eq.s32.totalorder %v4015, 0
        %vm4048 = vcmp.eq.s32.totalorder %v4016, 0
        %vm4049 = vcmp.eq.s32.totalorder %v4017, 0
        %vm4050 = vcmp.eq.s32.totalorder %v4018, 0
        %vm4051 = vcmp.eq.s32.totalorder %v4019, 0
        %vm4052 = vcmp.eq.s32.totalorder %v4020, 0
        %vm4053 = vcmp.eq.s32.totalorder %v4021, 0
        %vm4054 = vcmp.eq.s32.totalorder %v4022, 0
        %vm4055 = vcmp.eq.s32.totalorder %v4023, 0
        %vm4056 = vcmp.eq.s32.totalorder %v4024, 0
        %vm4057 = vcmp.eq.s32.totalorder %v4025, 0
        %vm4058 = vcmp.eq.s32.totalorder %v4026, 0
        %vm4059 = vcmp.eq.s32.totalorder %v4027, 0
        %vm4060 = vcmp.eq.s32.totalorder %v4028, 0
        %vm4061 = vcmp.eq.s32.totalorder %v4029, 0
        %vm4062 = vcmp.eq.s32.totalorder %v4030, 0
        %vm4063 = vcmp.eq.s32.totalorder %v4031, 0
        %vm4064 = vcmp.eq.s32.totalorder %v4032, 0
        %vm4065 = vcmp.eq.s32.totalorder %v4033, 0
        %vm4066 = vcmp.eq.s32.totalorder %v4034, 0
        %vm4067 = vcmp.eq.s32.totalorder %v4035, 0
        %vm4068 = vcmp.eq.s32.totalorder %v4036, 0
        %vm4069 = vcmp.eq.s32.totalorder %v4037, 0
        %vm4070 = vcmp.eq.s32.totalorder %v4038, 0
        %vm4071 = vcmp.eq.s32.totalorder %v4039, 0
        %vm4072 = vcmp.eq.s32.totalorder %v4040, 0
        %vm4073 = vcmp.eq.s32.totalorder %v4041, 0
        %v4074 = vsel %vm4042, 1, 0
        %v4075 = vsel %vm4043, 1, 0
        %v4076 = vsel %vm4044, 1, 0
        %v4077 = vsel %vm4045, 1, 0
        %v4078 = vsel %vm4046, 1, 0
        %v4079 = vsel %vm4047, 1, 0
        %v4080 = vsel %vm4048, 1, 0
        %v4081 = vsel %vm4049, 1, 0
        %v4082 = vsel %vm4050, 1, 0
        %v4083 = vsel %vm4051, 1, 0
        %v4084 = vsel %vm4052, 1, 0
        %v4085 = vsel %vm4053, 1, 0
        %v4086 = vsel %vm4054, 1, 0
        %v4087 = vsel %vm4055, 1, 0
        %v4088 = vsel %vm4056, 1, 0
        %v4089 = vsel %vm4057, 1, 0
        %v4090 = vsel %vm4058, 1, 0
        %v4091 = vsel %vm4059, 1, 0
        %v4092 = vsel %vm4060, 1, 0
        %v4093 = vsel %vm4061, 1, 0
        %v4094 = vsel %vm4062, 1, 0
        %v4095 = vsel %vm4063, 1, 0
        %v4096 = vsel %vm4064, 1, 0
        %v4097 = vsel %vm4065, 1, 0
        %v4098 = vsel %vm4066, 1, 0
        %v4099 = vsel %vm4067, 1, 0
        %v4100 = vsel %vm4068, 1, 0
        %v4101 = vsel %vm4069, 1, 0
        %v4102 = vsel %vm4070, 1, 0
        %v4103 = vsel %vm4071, 1, 0
        %v4104 = vsel %vm4072, 1, 0
        %v4105 = vsel %vm4073, 1, 0
        %vm4106 = vcmp.eq.s32.totalorder %v4074, 1
        %vm4107 = vcmp.eq.s32.totalorder %v4075, 1
        %vm4108 = vcmp.eq.s32.totalorder %v4076, 1
        %vm4109 = vcmp.eq.s32.totalorder %v4077, 1
        %vm4110 = vcmp.eq.s32.totalorder %v4078, 1
        %vm4111 = vcmp.eq.s32.totalorder %v4079, 1
        %vm4112 = vcmp.eq.s32.totalorder %v4080, 1
        %vm4113 = vcmp.eq.s32.totalorder %v4081, 1
        %vm4114 = vcmp.eq.s32.totalorder %v4082, 1
        %vm4115 = vcmp.eq.s32.totalorder %v4083, 1
        %vm4116 = vcmp.eq.s32.totalorder %v4084, 1
        %vm4117 = vcmp.eq.s32.totalorder %v4085, 1
        %vm4118 = vcmp.eq.s32.totalorder %v4086, 1
        %vm4119 = vcmp.eq.s32.totalorder %v4087, 1
        %vm4120 = vcmp.eq.s32.totalorder %v4088, 1
        %vm4121 = vcmp.eq.s32.totalorder %v4089, 1
        %vm4122 = vcmp.eq.s32.totalorder %v4090, 1
        %vm4123 = vcmp.eq.s32.totalorder %v4091, 1
        %vm4124 = vcmp.eq.s32.totalorder %v4092, 1
        %vm4125 = vcmp.eq.s32.totalorder %v4093, 1
        %vm4126 = vcmp.eq.s32.totalorder %v4094, 1
        %vm4127 = vcmp.eq.s32.totalorder %v4095, 1
        %vm4128 = vcmp.eq.s32.totalorder %v4096, 1
        %vm4129 = vcmp.eq.s32.totalorder %v4097, 1
        %vm4130 = vcmp.eq.s32.totalorder %v4098, 1
        %vm4131 = vcmp.eq.s32.totalorder %v4099, 1
        %vm4132 = vcmp.eq.s32.totalorder %v4100, 1
        %vm4133 = vcmp.eq.s32.totalorder %v4101, 1
        %vm4134 = vcmp.eq.s32.totalorder %v4102, 1
        %vm4135 = vcmp.eq.s32.totalorder %v4103, 1
        %vm4136 = vcmp.eq.s32.totalorder %v4104, 1
        %vm4137 = vcmp.eq.s32.totalorder %v4105, 1
        %v4138 = vsel %vm4106, 0.0, %v3945
        %v4139 = vsel %vm4107, 0.0, %v3944
        %v4140 = vsel %vm4108, 0.0, %v3943
        %v4141 = vsel %vm4109, 0.0, %v3942
        %v4142 = vsel %vm4110, 0.0, %v3941
        %v4143 = vsel %vm4111, 0.0, %v3940
        %v4144 = vsel %vm4112, 0.0, %v3939
        %v4145 = vsel %vm4113, 0.0, %v3938
        %v4146 = vsel %vm4114, 0.0, %v3937
        %v4147 = vsel %vm4115, 0.0, %v3936
        %v4148 = vsel %vm4116, 0.0, %v3935
        %v4149 = vsel %vm4117, 0.0, %v3934
        %v4150 = vsel %vm4118, 0.0, %v3933
        %v4151 = vsel %vm4119, 0.0, %v3932
        %v4152 = vsel %vm4120, 0.0, %v3931
        %v4153 = vsel %vm4121, 0.0, %v3930
        %v4154 = vsel %vm4122, 0.0, %v3929
        %v4155 = vsel %vm4123, 0.0, %v3928
        %v4156 = vsel %vm4124, 0.0, %v3927
        %v4157 = vsel %vm4125, 0.0, %v3926
        %v4158 = vsel %vm4126, 0.0, %v3925
        %v4159 = vsel %vm4127, 0.0, %v3924
        %v4160 = vsel %vm4128, 0.0, %v3923
        %v4161 = vsel %vm4129, 0.0, %v3922
        %v4162 = vsel %vm4130, 0.0, %v3921
        %v4163 = vsel %vm4131, 0.0, %v3920
        %v4164 = vsel %vm4132, 0.0, %v3919
        %v4165 = vsel %vm4133, 0.0, %v3918
        %v4166 = vsel %vm4134, 0.0, %v3917
        %v4167 = vsel %vm4135, 0.0, %v3916
        %v4168 = vsel %vm4136, 0.0, %v3915
        %v4169 = vsel %vm4137, 0.0, %v3914
        %vm4170 = vcmp.eq.s32.totalorder %v4010, 31
        %vm4171 = vcmp.eq.s32.totalorder %v4011, 31
        %vm4172 = vcmp.eq.s32.totalorder %v4012, 31
        %vm4173 = vcmp.eq.s32.totalorder %v4013, 31
        %vm4174 = vcmp.eq.s32.totalorder %v4014, 31
        %vm4175 = vcmp.eq.s32.totalorder %v4015, 31
        %vm4176 = vcmp.eq.s32.totalorder %v4016, 31
        %vm4177 = vcmp.eq.s32.totalorder %v4017, 31
        %vm4178 = vcmp.eq.s32.totalorder %v4018, 31
        %vm4179 = vcmp.eq.s32.totalorder %v4019, 31
        %vm4180 = vcmp.eq.s32.totalorder %v4020, 31
        %vm4181 = vcmp.eq.s32.totalorder %v4021, 31
        %vm4182 = vcmp.eq.s32.totalorder %v4022, 31
        %vm4183 = vcmp.eq.s32.totalorder %v4023, 31
        %vm4184 = vcmp.eq.s32.totalorder %v4024, 31
        %vm4185 = vcmp.eq.s32.totalorder %v4025, 31
        %vm4186 = vcmp.eq.s32.totalorder %v4026, 31
        %vm4187 = vcmp.eq.s32.totalorder %v4027, 31
        %vm4188 = vcmp.eq.s32.totalorder %v4028, 31
        %vm4189 = vcmp.eq.s32.totalorder %v4029, 31
        %vm4190 = vcmp.eq.s32.totalorder %v4030, 31
        %vm4191 = vcmp.eq.s32.totalorder %v4031, 31
        %vm4192 = vcmp.eq.s32.totalorder %v4032, 31
        %vm4193 = vcmp.eq.s32.totalorder %v4033, 31
        %vm4194 = vcmp.eq.s32.totalorder %v4034, 31
        %vm4195 = vcmp.eq.s32.totalorder %v4035, 31
        %vm4196 = vcmp.eq.s32.totalorder %v4036, 31
        %vm4197 = vcmp.eq.s32.totalorder %v4037, 31
        %vm4198 = vcmp.eq.s32.totalorder %v4038, 31
        %vm4199 = vcmp.eq.s32.totalorder %v4039, 31
        %vm4200 = vcmp.eq.s32.totalorder %v4040, 31
        %vm4201 = vcmp.eq.s32.totalorder %v4041, 31
        %v4202 = vsel %vm4170, 1, 0
        %v4203 = vsel %vm4171, 1, 0
        %v4204 = vsel %vm4172, 1, 0
        %v4205 = vsel %vm4173, 1, 0
        %v4206 = vsel %vm4174, 1, 0
        %v4207 = vsel %vm4175, 1, 0
        %v4208 = vsel %vm4176, 1, 0
        %v4209 = vsel %vm4177, 1, 0
        %v4210 = vsel %vm4178, 1, 0
        %v4211 = vsel %vm4179, 1, 0
        %v4212 = vsel %vm4180, 1, 0
        %v4213 = vsel %vm4181, 1, 0
        %v4214 = vsel %vm4182, 1, 0
        %v4215 = vsel %vm4183, 1, 0
        %v4216 = vsel %vm4184, 1, 0
        %v4217 = vsel %vm4185, 1, 0
        %v4218 = vsel %vm4186, 1, 0
        %v4219 = vsel %vm4187, 1, 0
        %v4220 = vsel %vm4188, 1, 0
        %v4221 = vsel %vm4189, 1, 0
        %v4222 = vsel %vm4190, 1, 0
        %v4223 = vsel %vm4191, 1, 0
        %v4224 = vsel %vm4192, 1, 0
        %v4225 = vsel %vm4193, 1, 0
        %v4226 = vsel %vm4194, 1, 0
        %v4227 = vsel %vm4195, 1, 0
        %v4228 = vsel %vm4196, 1, 0
        %v4229 = vsel %vm4197, 1, 0
        %v4230 = vsel %vm4198, 1, 0
        %v4231 = vsel %vm4199, 1, 0
        %v4232 = vsel %vm4200, 1, 0
        %v4233 = vsel %vm4201, 1, 0
        %vm4234 = vcmp.eq.s32.totalorder %v4202, 1
        %vm4235 = vcmp.eq.s32.totalorder %v4203, 1
        %vm4236 = vcmp.eq.s32.totalorder %v4204, 1
        %vm4237 = vcmp.eq.s32.totalorder %v4205, 1
        %vm4238 = vcmp.eq.s32.totalorder %v4206, 1
        %vm4239 = vcmp.eq.s32.totalorder %v4207, 1
        %vm4240 = vcmp.eq.s32.totalorder %v4208, 1
        %vm4241 = vcmp.eq.s32.totalorder %v4209, 1
        %vm4242 = vcmp.eq.s32.totalorder %v4210, 1
        %vm4243 = vcmp.eq.s32.totalorder %v4211, 1
        %vm4244 = vcmp.eq.s32.totalorder %v4212, 1
        %vm4245 = vcmp.eq.s32.totalorder %v4213, 1
        %vm4246 = vcmp.eq.s32.totalorder %v4214, 1
        %vm4247 = vcmp.eq.s32.totalorder %v4215, 1
        %vm4248 = vcmp.eq.s32.totalorder %v4216, 1
        %vm4249 = vcmp.eq.s32.totalorder %v4217, 1
        %vm4250 = vcmp.eq.s32.totalorder %v4218, 1
        %vm4251 = vcmp.eq.s32.totalorder %v4219, 1
        %vm4252 = vcmp.eq.s32.totalorder %v4220, 1
        %vm4253 = vcmp.eq.s32.totalorder %v4221, 1
        %vm4254 = vcmp.eq.s32.totalorder %v4222, 1
        %vm4255 = vcmp.eq.s32.totalorder %v4223, 1
        %vm4256 = vcmp.eq.s32.totalorder %v4224, 1
        %vm4257 = vcmp.eq.s32.totalorder %v4225, 1
        %vm4258 = vcmp.eq.s32.totalorder %v4226, 1
        %vm4259 = vcmp.eq.s32.totalorder %v4227, 1
        %vm4260 = vcmp.eq.s32.totalorder %v4228, 1
        %vm4261 = vcmp.eq.s32.totalorder %v4229, 1
        %vm4262 = vcmp.eq.s32.totalorder %v4230, 1
        %vm4263 = vcmp.eq.s32.totalorder %v4231, 1
        %vm4264 = vcmp.eq.s32.totalorder %v4232, 1
        %vm4265 = vcmp.eq.s32.totalorder %v4233, 1
        %v4266 = vsel %vm4234, 0.0, %v4008
        %v4267 = vsel %vm4235, 0.0, %v4007
        %v4268 = vsel %vm4236, 0.0, %v4006
        %v4269 = vsel %vm4237, 0.0, %v4005
        %v4270 = vsel %vm4238, 0.0, %v4004
        %v4271 = vsel %vm4239, 0.0, %v4003
        %v4272 = vsel %vm4240, 0.0, %v4002
        %v4273 = vsel %vm4241, 0.0, %v4001
        %v4274 = vsel %vm4242, 0.0, %v4000
        %v4275 = vsel %vm4243, 0.0, %v3999
        %v4276 = vsel %vm4244, 0.0, %v3998
        %v4277 = vsel %vm4245, 0.0, %v3997
        %v4278 = vsel %vm4246, 0.0, %v3996
        %v4279 = vsel %vm4247, 0.0, %v3995
        %v4280 = vsel %vm4248, 0.0, %v3994
        %v4281 = vsel %vm4249, 0.0, %v3993
        %v4282 = vsel %vm4250, 0.0, %v3992
        %v4283 = vsel %vm4251, 0.0, %v3991
        %v4284 = vsel %vm4252, 0.0, %v3990
        %v4285 = vsel %vm4253, 0.0, %v3989
        %v4286 = vsel %vm4254, 0.0, %v3988
        %v4287 = vsel %vm4255, 0.0, %v3987
        %v4288 = vsel %vm4256, 0.0, %v3986
        %v4289 = vsel %vm4257, 0.0, %v3985
        %v4290 = vsel %vm4258, 0.0, %v3984
        %v4291 = vsel %vm4259, 0.0, %v3983
        %v4292 = vsel %vm4260, 0.0, %v3982
        %v4293 = vsel %vm4261, 0.0, %v3981
        %v4294 = vsel %vm4262, 0.0, %v3980
        %v4295 = vsel %vm4263, 0.0, %v3979
        %v4296 = vsel %vm4264, 0.0, %v3978
        %v4297 = vsel %vm4265, 0.0, %v4009
        %v4298 = vld [vmem:[%s11] sm:$0x1]
        %v4300 = vlaneseq
        %v4301 = vshrl.u32 %v4300, 7
        %v4302 = vsub.s32 0, %v4301
        %v4303 = vrot.slane %v4298, %v4302
        %v4305 = vmul.f32 %v4138, %v4303
        %v4306 = vmul.f32 %v4139, %v4303
        %v4307 = vmul.f32 %v4140, %v4303
        %v4308 = vmul.f32 %v4141, %v4303
        %v4309 = vmul.f32 %v4142, %v4303
        %v4310 = vmul.f32 %v4143, %v4303
        %v4311 = vmul.f32 %v4144, %v4303
        %v4312 = vmul.f32 %v4145, %v4303
        %v4313 = vmul.f32 %v4146, %v4303
        %v4314 = vmul.f32 %v4147, %v4303
        %v4315 = vmul.f32 %v4148, %v4303
        %v4316 = vmul.f32 %v4149, %v4303
        %v4317 = vmul.f32 %v4150, %v4303
        %v4318 = vmul.f32 %v4151, %v4303
        %v4319 = vmul.f32 %v4152, %v4303
        %v4320 = vmul.f32 %v4153, %v4303
        %v4321 = vmul.f32 %v4154, %v4303
        %v4322 = vmul.f32 %v4155, %v4303
        %v4323 = vmul.f32 %v4156, %v4303
        %v4324 = vmul.f32 %v4157, %v4303
        %v4325 = vmul.f32 %v4158, %v4303
        %v4326 = vmul.f32 %v4159, %v4303
        %v4327 = vmul.f32 %v4160, %v4303
        %v4328 = vmul.f32 %v4161, %v4303
        %v4329 = vmul.f32 %v4162, %v4303
        %v4330 = vmul.f32 %v4163, %v4303
        %v4331 = vmul.f32 %v4164, %v4303
        %v4332 = vmul.f32 %v4165, %v4303
        %v4333 = vmul.f32 %v4166, %v4303
        %v4334 = vmul.f32 %v4167, %v4303
        %v4335 = vmul.f32 %v4168, %v4303
        %v4336 = vmul.f32 %v4169, %v4303
        %v4337 = vld [vmem:[%s12] sm:$0x1]
        %v4339 = vlaneseq
        %v4340 = vshrl.u32 %v4339, 7
        %v4341 = vsub.s32 0, %v4340
        %v4342 = vrot.slane %v4337, %v4341
        %v4344 = vmul.f32 %v3850, %v4342
        %v4345 = vmul.f32 %v3851, %v4342
        %v4346 = vmul.f32 %v3852, %v4342
        %v4347 = vmul.f32 %v3853, %v4342
        %v4348 = vmul.f32 %v3854, %v4342
        %v4349 = vmul.f32 %v3855, %v4342
        %v4350 = vmul.f32 %v3856, %v4342
        %v4351 = vmul.f32 %v3857, %v4342
        %v4352 = vmul.f32 %v3858, %v4342
        %v4353 = vmul.f32 %v3859, %v4342
        %v4354 = vmul.f32 %v3860, %v4342
        %v4355 = vmul.f32 %v3861, %v4342
        %v4356 = vmul.f32 %v3862, %v4342
        %v4357 = vmul.f32 %v3863, %v4342
        %v4358 = vmul.f32 %v3864, %v4342
        %v4359 = vmul.f32 %v3865, %v4342
        %v4360 = vmul.f32 %v3866, %v4342
        %v4361 = vmul.f32 %v3867, %v4342
        %v4362 = vmul.f32 %v3868, %v4342
        %v4363 = vmul.f32 %v3869, %v4342
        %v4364 = vmul.f32 %v3870, %v4342
        %v4365 = vmul.f32 %v3871, %v4342
        %v4366 = vmul.f32 %v3872, %v4342
        %v4367 = vmul.f32 %v3873, %v4342
        %v4368 = vmul.f32 %v3874, %v4342
        %v4369 = vmul.f32 %v3875, %v4342
        %v4370 = vmul.f32 %v3876, %v4342
        %v4371 = vmul.f32 %v3877, %v4342
        %v4372 = vmul.f32 %v3878, %v4342
        %v4373 = vmul.f32 %v3879, %v4342
        %v4374 = vmul.f32 %v3880, %v4342
        %v4375 = vmul.f32 %v3881, %v4342
        %v4376 = vadd.f32 %v4305, %v4344
        %v4377 = vadd.f32 %v4306, %v4345
        %v4378 = vadd.f32 %v4307, %v4346
        %v4379 = vadd.f32 %v4308, %v4347
        %v4380 = vadd.f32 %v4309, %v4348
        %v4381 = vadd.f32 %v4310, %v4349
        %v4382 = vadd.f32 %v4311, %v4350
        %v4383 = vadd.f32 %v4312, %v4351
        %v4384 = vadd.f32 %v4313, %v4352
        %v4385 = vadd.f32 %v4314, %v4353
        %v4386 = vadd.f32 %v4315, %v4354
        %v4387 = vadd.f32 %v4316, %v4355
        %v4388 = vadd.f32 %v4317, %v4356
        %v4389 = vadd.f32 %v4318, %v4357
        %v4390 = vadd.f32 %v4319, %v4358
        %v4391 = vadd.f32 %v4320, %v4359
        %v4392 = vadd.f32 %v4321, %v4360
        %v4393 = vadd.f32 %v4322, %v4361
        %v4394 = vadd.f32 %v4323, %v4362
        %v4395 = vadd.f32 %v4324, %v4363
        %v4396 = vadd.f32 %v4325, %v4364
        %v4397 = vadd.f32 %v4326, %v4365
        %v4398 = vadd.f32 %v4327, %v4366
        %v4399 = vadd.f32 %v4328, %v4367
        %v4400 = vadd.f32 %v4329, %v4368
        %v4401 = vadd.f32 %v4330, %v4369
        %v4402 = vadd.f32 %v4331, %v4370
        %v4403 = vadd.f32 %v4332, %v4371
        %v4404 = vadd.f32 %v4333, %v4372
        %v4405 = vadd.f32 %v4334, %v4373
        %v4406 = vadd.f32 %v4335, %v4374
        %v4407 = vadd.f32 %v4336, %v4375
        %v4408 = vld [vmem:[%s13] sm:$0x1]
        %v4410 = vlaneseq
        %v4411 = vshrl.u32 %v4410, 7
        %v4412 = vsub.s32 0, %v4411
        %v4413 = vrot.slane %v4408, %v4412
        %v4415 = vmul.f32 %v4266, %v4413
        %v4416 = vmul.f32 %v4267, %v4413
        %v4417 = vmul.f32 %v4268, %v4413
        %v4418 = vmul.f32 %v4269, %v4413
        %v4419 = vmul.f32 %v4270, %v4413
        %v4420 = vmul.f32 %v4271, %v4413
        %v4421 = vmul.f32 %v4272, %v4413
        %v4422 = vmul.f32 %v4273, %v4413
        %v4423 = vmul.f32 %v4274, %v4413
        %v4424 = vmul.f32 %v4275, %v4413
        %v4425 = vmul.f32 %v4276, %v4413
        %v4426 = vmul.f32 %v4277, %v4413
        %v4427 = vmul.f32 %v4278, %v4413
        %v4428 = vmul.f32 %v4279, %v4413
        %v4429 = vmul.f32 %v4280, %v4413
        %v4430 = vmul.f32 %v4281, %v4413
        %v4431 = vmul.f32 %v4282, %v4413
        %v4432 = vmul.f32 %v4283, %v4413
        %v4433 = vmul.f32 %v4284, %v4413
        %v4434 = vmul.f32 %v4285, %v4413
        %v4435 = vmul.f32 %v4286, %v4413
        %v4436 = vmul.f32 %v4287, %v4413
        %v4437 = vmul.f32 %v4288, %v4413
        %v4438 = vmul.f32 %v4289, %v4413
        %v4439 = vmul.f32 %v4290, %v4413
        %v4440 = vmul.f32 %v4291, %v4413
        %v4441 = vmul.f32 %v4292, %v4413
        %v4442 = vmul.f32 %v4293, %v4413
        %v4443 = vmul.f32 %v4294, %v4413
        %v4444 = vmul.f32 %v4295, %v4413
        %v4445 = vmul.f32 %v4296, %v4413
        %v4446 = vmul.f32 %v4297, %v4413
        %v4447 = vadd.f32 %v4376, %v4415
        %v4448 = vadd.f32 %v4377, %v4416
        %v4449 = vadd.f32 %v4378, %v4417
        %v4450 = vadd.f32 %v4379, %v4418
        %v4451 = vadd.f32 %v4380, %v4419
        %v4452 = vadd.f32 %v4381, %v4420
        %v4453 = vadd.f32 %v4382, %v4421
        %v4454 = vadd.f32 %v4383, %v4422
        %v4455 = vadd.f32 %v4384, %v4423
        %v4456 = vadd.f32 %v4385, %v4424
        %v4457 = vadd.f32 %v4386, %v4425
        %v4458 = vadd.f32 %v4387, %v4426
        %v4459 = vadd.f32 %v4388, %v4427
        %v4460 = vadd.f32 %v4389, %v4428
        %v4461 = vadd.f32 %v4390, %v4429
        %v4462 = vadd.f32 %v4391, %v4430
        %v4463 = vadd.f32 %v4392, %v4431
        %v4464 = vadd.f32 %v4393, %v4432
        %v4465 = vadd.f32 %v4394, %v4433
        %v4466 = vadd.f32 %v4395, %v4434
        %v4467 = vadd.f32 %v4396, %v4435
        %v4468 = vadd.f32 %v4397, %v4436
        %v4469 = vadd.f32 %v4398, %v4437
        %v4470 = vadd.f32 %v4399, %v4438
        %v4471 = vadd.f32 %v4400, %v4439
        %v4472 = vadd.f32 %v4401, %v4440
        %v4473 = vadd.f32 %v4402, %v4441
        %v4474 = vadd.f32 %v4403, %v4442
        %v4475 = vadd.f32 %v4404, %v4443
        %v4476 = vadd.f32 %v4405, %v4444
        %v4477 = vadd.f32 %v4406, %v4445
        %v4478 = vadd.f32 %v4407, %v4446
        %v4479 = vld [vmem:[%s14] sm:$0x1]
        %v4481 = vlaneseq
        %v4482 = vshrl.u32 %v4481, 7
        %v4483 = vsub.s32 0, %v4482
        %v4484 = vrot.slane %v4479, %v4483
        %v4486 = vadd.f32 %v4447, %v4484
        %v4487 = vadd.f32 %v4448, %v4484
        %v4488 = vadd.f32 %v4449, %v4484
        %v4489 = vadd.f32 %v4450, %v4484
        %v4490 = vadd.f32 %v4451, %v4484
        %v4491 = vadd.f32 %v4452, %v4484
        %v4492 = vadd.f32 %v4453, %v4484
        %v4493 = vadd.f32 %v4454, %v4484
        %v4494 = vadd.f32 %v4455, %v4484
        %v4495 = vadd.f32 %v4456, %v4484
        %v4496 = vadd.f32 %v4457, %v4484
        %v4497 = vadd.f32 %v4458, %v4484
        %v4498 = vadd.f32 %v4459, %v4484
        %v4499 = vadd.f32 %v4460, %v4484
        %v4500 = vadd.f32 %v4461, %v4484
        %v4501 = vadd.f32 %v4462, %v4484
        %v4502 = vadd.f32 %v4463, %v4484
        %v4503 = vadd.f32 %v4464, %v4484
        %v4504 = vadd.f32 %v4465, %v4484
        %v4505 = vadd.f32 %v4466, %v4484
        %v4506 = vadd.f32 %v4467, %v4484
        %v4507 = vadd.f32 %v4468, %v4484
        %v4508 = vadd.f32 %v4469, %v4484
        %v4509 = vadd.f32 %v4470, %v4484
        %v4510 = vadd.f32 %v4471, %v4484
        %v4511 = vadd.f32 %v4472, %v4484
        %v4512 = vadd.f32 %v4473, %v4484
        %v4513 = vadd.f32 %v4474, %v4484
        %v4514 = vadd.f32 %v4475, %v4484
        %v4515 = vadd.f32 %v4476, %v4484
        %v4516 = vadd.f32 %v4477, %v4484
        %v4517 = vadd.f32 %v4478, %v4484
        %v4518 = vmax.f32 %v4486, 0.0
        %v4519 = vmax.f32 %v4487, 0.0
        %v4520 = vmax.f32 %v4488, 0.0
        %v4521 = vmax.f32 %v4489, 0.0
        %v4522 = vmax.f32 %v4490, 0.0
        %v4523 = vmax.f32 %v4491, 0.0
        %v4524 = vmax.f32 %v4492, 0.0
        %v4525 = vmax.f32 %v4493, 0.0
        %v4526 = vmax.f32 %v4494, 0.0
        %v4527 = vmax.f32 %v4495, 0.0
        %v4528 = vmax.f32 %v4496, 0.0
        %v4529 = vmax.f32 %v4497, 0.0
        %v4530 = vmax.f32 %v4498, 0.0
        %v4531 = vmax.f32 %v4499, 0.0
        %v4532 = vmax.f32 %v4500, 0.0
        %v4533 = vmax.f32 %v4501, 0.0
        %v4534 = vmax.f32 %v4502, 0.0
        %v4535 = vmax.f32 %v4503, 0.0
        %v4536 = vmax.f32 %v4504, 0.0
        %v4537 = vmax.f32 %v4505, 0.0
        %v4538 = vmax.f32 %v4506, 0.0
        %v4539 = vmax.f32 %v4507, 0.0
        %v4540 = vmax.f32 %v4508, 0.0
        %v4541 = vmax.f32 %v4509, 0.0
        %v4542 = vmax.f32 %v4510, 0.0
        %v4543 = vmax.f32 %v4511, 0.0
        %v4544 = vmax.f32 %v4512, 0.0
        %v4545 = vmax.f32 %v4513, 0.0
        %v4546 = vmax.f32 %v4514, 0.0
        %v4547 = vmax.f32 %v4515, 0.0
        %v4548 = vmax.f32 %v4516, 0.0
        %v4549 = vmax.f32 %v4517, 0.0
        %v4550 = vpack.c.bf16 %v4519, %v4518
        %v4551 = vpack.c.bf16 %v4521, %v4520
        %v4552 = vpack.c.bf16 %v4523, %v4522
        %v4553 = vpack.c.bf16 %v4525, %v4524
        %v4554 = vpack.c.bf16 %v4527, %v4526
        %v4555 = vpack.c.bf16 %v4529, %v4528
        %v4556 = vpack.c.bf16 %v4531, %v4530
        %v4557 = vpack.c.bf16 %v4533, %v4532
        %v4558 = vpack.c.bf16 %v4535, %v4534
        %v4559 = vpack.c.bf16 %v4537, %v4536
        %v4560 = vpack.c.bf16 %v4539, %v4538
        %v4561 = vpack.c.bf16 %v4541, %v4540
        %v4562 = vpack.c.bf16 %v4543, %v4542
        %v4563 = vpack.c.bf16 %v4545, %v4544
        %v4564 = vpack.c.bf16 %v4547, %v4546
        %v4565 = vpack.c.bf16 %v4549, %v4548
        %v4566 = vld [vmem:[%s15] sm:$0xf]
        %v4567 = vld [vmem:[%s15 + $0x4] sm:$0xf]
        %v4568 = vld [vmem:[%s15 + $0x8] sm:$0xf]
        %v4569 = vld [vmem:[%s15 + $0xc] sm:$0xf]
        %v4570 = vld [vmem:[%s15 + $0x10] sm:$0xf]
        %v4571 = vld [vmem:[%s15 + $0x14] sm:$0xf]
        %v4572 = vld [vmem:[%s15 + $0x18] sm:$0xf]
        %v4573 = vld [vmem:[%s15 + $0x1c] sm:$0xf]
        %v4574 = vld [vmem:[%s16] sm:$0x1]
        %v4576 = vlaneseq
        %v4577 = vshrl.u32 %v4576, 7
        %v4578 = vsub.s32 0, %v4577
        %v4579 = vrot.slane %v4574, %v4578
        %v4589 = vunpack.c.l.b16 %v4566
        %v4590 = vunpack.c.l.b16 %v4567
        %v4591 = vunpack.c.l.b16 %v4568
        %v4592 = vunpack.c.l.b16 %v4569
        %v4593 = vunpack.c.l.b16 %v4570
        %v4594 = vunpack.c.l.b16 %v4571
        %v4595 = vunpack.c.l.b16 %v4572
        %v4596 = vunpack.c.l.b16 %v4573
        %v4597 = vpack.c.b16 %v4590, %v4589
        %v4598 = vpack.c.b16 %v4592, %v4591
        %v4599 = vpack.c.b16 %v4594, %v4593
        %v4600 = vpack.c.b16 %v4596, %v4595
        %v4606 = vsel %vm3658, %v4550, 0
        %v4609 = vsel %vm3658, %v4551, 0
        %v4612 = vsel %vm3658, %v4552, 0
        %v4615 = vsel %vm3658, %v4553, 0
        %v4618 = vsel %vm3658, %v4554, 0
        %v4621 = vsel %vm3658, %v4555, 0
        %v4624 = vsel %vm3658, %v4556, 0
        %v4627 = vsel %vm3658, %v4557, 0
        %v4630 = vsel %vm3658, %v4558, 0
        %v4633 = vsel %vm3658, %v4559, 0
        %v4636 = vsel %vm3658, %v4560, 0
        %v4639 = vsel %vm3658, %v4561, 0
        %v4642 = vsel %vm3658, %v4562, 0
        %v4645 = vsel %vm3658, %v4563, 0
        %v4648 = vsel %vm3658, %v4564, 0
        %v4651 = vsel %vm3658, %v4565, 0
        %4653 = vmatprep.subr.bf16.mxu0 0
        %4654 = vmatpush1.bf16.msra.mxu0 %v4597
        %4655 = vmatprep.subr.bf16.mxu0 0
        %4656 = vmatpush1.bf16.msra.mxu0 %v4598
        %4657 = vmatprep.subr.bf16.mxu0 0
        %4658 = vmatpush1.bf16.msra.mxu0 %v4599
        %4659 = vmatprep.subr.bf16.mxu0 0
        %4660 = vmatpush1.bf16.msra.mxu0 %v4600
        %4661 = vmatprep.subr.bf16.mxu0 0
        %4662 = vmatpush1.bf16.msra.mxu0 0
        %4663 = vmatprep.subr.bf16.mxu0 0
        %4664 = vmatpush1.bf16.msra.mxu0 0
        %4665 = vmatprep.subr.bf16.mxu0 0
        %4666 = vmatpush1.bf16.msra.mxu0 0
        %4667 = vmatprep.subr.bf16.mxu0 0
        %4668 = vmatpush1.bf16.msra.mxu0 0
        %4669 = vmatprep.subr.bf16.mxu0 0
        %4670 = vmatpush1.bf16.msra.mxu0 0
        %4671 = vmatprep.subr.bf16.mxu0 0
        %4672 = vmatpush1.bf16.msra.mxu0 0
        %4673 = vmatprep.subr.bf16.mxu0 0
        %4674 = vmatpush1.bf16.msra.mxu0 0
        %4675 = vmatprep.subr.bf16.mxu0 0
        %4676 = vmatpush1.bf16.msra.mxu0 0
        %4677 = vmatprep.subr.bf16.mxu0 0
        %4678 = vmatpush1.bf16.msra.mxu0 0
        %4679 = vmatprep.subr.bf16.mxu0 0
        %4680 = vmatpush1.bf16.msra.mxu0 0
        %4681 = vmatprep.subr.bf16.mxu0 0
        %4682 = vmatpush1.bf16.msra.mxu0 0
        %4683 = vmatprep.subr.bf16.mxu0 0
        %4684 = vmatpush1.bf16.msra.mxu0 0
        %4685 = vmatprep.mubr.bf16.mxu0 0
        %4686 = vmatmul.mubr.bf16.gmra.mrb[0].mxu0 %v4606
        %v4687 = vpop.f32.mrb[0].mxu0
        %v4688 = vadd.f32 %v4579, %v4687
        %v4689 = vpop.f32.mrb[0].mxu0
        %v4690 = vpop.f32.mrb[0].mxu0
        %v4691 = vadd.f32 %v4579, %v4690
        %v4692 = vpop.f32.mrb[0].mxu0
        %4693 = vmatprep.mubr.bf16.mxu0 0
        %4694 = vmatmul.mubr.bf16.gmra.mrb[0].mxu0 %v4609
        %v4695 = vpop.f32.mrb[0].mxu0
        %v4696 = vadd.f32 %v4579, %v4695
        %v4697 = vpop.f32.mrb[0].mxu0
        %v4698 = vpop.f32.mrb[0].mxu0
        %v4699 = vadd.f32 %v4579, %v4698
        %v4700 = vpop.f32.mrb[0].mxu0
        %4701 = vmatprep.mubr.bf16.mxu0 0
        %4702 = vmatmul.mubr.bf16.gmra.mrb[0].mxu0 %v4612
        %v4703 = vpop.f32.mrb[0].mxu0
        %v4704 = vadd.f32 %v4579, %v4703
        %v4705 = vpop.f32.mrb[0].mxu0
        %v4706 = vpop.f32.mrb[0].mxu0
        %v4707 = vadd.f32 %v4579, %v4706
        %v4708 = vpop.f32.mrb[0].mxu0
        %4709 = vmatprep.mubr.bf16.mxu0 0
        %4710 = vmatmul.mubr.bf16.gmra.mrb[0].mxu0 %v4615
        %v4711 = vpop.f32.mrb[0].mxu0
        %v4712 = vadd.f32 %v4579, %v4711
        %v4713 = vpop.f32.mrb[0].mxu0
        %v4714 = vpop.f32.mrb[0].mxu0
        %v4715 = vadd.f32 %v4579, %v4714
        %v4716 = vpop.f32.mrb[0].mxu0
        %4717 = vmatprep.mubr.bf16.mxu0 0
        %4718 = vmatmul.mubr.bf16.gmra.mrb[0].mxu0 %v4618
        %v4719 = vpop.f32.mrb[0].mxu0
        %v4720 = vadd.f32 %v4579, %v4719
        %v4721 = vpop.f32.mrb[0].mxu0
        %v4722 = vpop.f32.mrb[0].mxu0
        %v4723 = vadd.f32 %v4579, %v4722
        %v4724 = vpop.f32.mrb[0].mxu0
        %4725 = vmatprep.mubr.bf16.mxu0 0
        %4726 = vmatmul.mubr.bf16.gmra.mrb[0].mxu0 %v4621
        %v4727 = vpop.f32.mrb[0].mxu0
        %v4728 = vadd.f32 %v4579, %v4727
        %v4729 = vpop.f32.mrb[0].mxu0
        %v4730 = vpop.f32.mrb[0].mxu0
        %v4731 = vadd.f32 %v4579, %v4730
        %v4732 = vpop.f32.mrb[0].mxu0
        %4733 = vmatprep.mubr.bf16.mxu0 0
        %4734 = vmatmul.mubr.bf16.gmra.mrb[0].mxu0 %v4624
        %v4735 = vpop.f32.mrb[0].mxu0
        %v4736 = vadd.f32 %v4579, %v4735
        %v4737 = vpop.f32.mrb[0].mxu0
        %v4738 = vpop.f32.mrb[0].mxu0
        %v4739 = vadd.f32 %v4579, %v4738
        %v4740 = vpop.f32.mrb[0].mxu0
        %4741 = vmatprep.mubr.bf16.mxu0 0
        %4742 = vmatmul.mubr.bf16.gmra.mrb[0].mxu0 %v4627
        %v4743 = vpop.f32.mrb[0].mxu0
        %v4744 = vadd.f32 %v4579, %v4743
        %v4745 = vpop.f32.mrb[0].mxu0
        %v4746 = vpop.f32.mrb[0].mxu0
        %v4747 = vadd.f32 %v4579, %v4746
        %v4748 = vpop.f32.mrb[0].mxu0
        %4749 = vmatprep.mubr.bf16.mxu0 0
        %4750 = vmatmul.mubr.bf16.gmra.mrb[0].mxu0 %v4630
        %v4751 = vpop.f32.mrb[0].mxu0
        %v4752 = vadd.f32 %v4579, %v4751
        %v4753 = vpop.f32.mrb[0].mxu0
        %v4754 = vpop.f32.mrb[0].mxu0
        %v4755 = vadd.f32 %v4579, %v4754
        %v4756 = vpop.f32.mrb[0].mxu0
        %4757 = vmatprep.mubr.bf16.mxu0 0
        %4758 = vmatmul.mubr.bf16.gmra.mrb[0].mxu0 %v4633
        %v4759 = vpop.f32.mrb[0].mxu0
        %v4760 = vadd.f32 %v4579, %v4759
        %v4761 = vpop.f32.mrb[0].mxu0
        %v4762 = vpop.f32.mrb[0].mxu0
        %v4763 = vadd.f32 %v4579, %v4762
        %v4764 = vpop.f32.mrb[0].mxu0
        %4765 = vmatprep.mubr.bf16.mxu0 0
        %4766 = vmatmul.mubr.bf16.gmra.mrb[0].mxu0 %v4636
        %v4767 = vpop.f32.mrb[0].mxu0
        %v4768 = vadd.f32 %v4579, %v4767
        %v4769 = vpop.f32.mrb[0].mxu0
        %v4770 = vpop.f32.mrb[0].mxu0
        %v4771 = vadd.f32 %v4579, %v4770
        %v4772 = vpop.f32.mrb[0].mxu0
        %4773 = vmatprep.mubr.bf16.mxu0 0
        %4774 = vmatmul.mubr.bf16.gmra.mrb[0].mxu0 %v4639
        %v4775 = vpop.f32.mrb[0].mxu0
        %v4776 = vadd.f32 %v4579, %v4775
        %v4777 = vpop.f32.mrb[0].mxu0
        %v4778 = vpop.f32.mrb[0].mxu0
        %v4779 = vadd.f32 %v4579, %v4778
        %v4780 = vpop.f32.mrb[0].mxu0
        %4781 = vmatprep.mubr.bf16.mxu0 0
        %4782 = vmatmul.mubr.bf16.gmra.mrb[0].mxu0 %v4642
        %v4783 = vpop.f32.mrb[0].mxu0
        %v4784 = vadd.f32 %v4579, %v4783
        %v4785 = vpop.f32.mrb[0].mxu0
        %v4786 = vpop.f32.mrb[0].mxu0
        %v4787 = vadd.f32 %v4579, %v4786
        %v4788 = vpop.f32.mrb[0].mxu0
        %4789 = vmatprep.mubr.bf16.mxu0 0
        %4790 = vmatmul.mubr.bf16.gmra.mrb[0].mxu0 %v4645
        %v4791 = vpop.f32.mrb[0].mxu0
        %v4792 = vadd.f32 %v4579, %v4791
        %v4793 = vpop.f32.mrb[0].mxu0
        %v4794 = vpop.f32.mrb[0].mxu0
        %v4795 = vadd.f32 %v4579, %v4794
        %v4796 = vpop.f32.mrb[0].mxu0
        %4797 = vmatprep.mubr.bf16.mxu0 0
        %4798 = vmatmul.mubr.bf16.gmra.mrb[0].mxu0 %v4648
        %v4799 = vpop.f32.mrb[0].mxu0
        %v4800 = vadd.f32 %v4579, %v4799
        %v4801 = vpop.f32.mrb[0].mxu0
        %v4802 = vpop.f32.mrb[0].mxu0
        %v4803 = vadd.f32 %v4579, %v4802
        %v4804 = vpop.f32.mrb[0].mxu0
        %4805 = vmatprep.mubr.bf16.mxu0 0
        %4806 = vmatmul.mubr.bf16.gmra.mrb[0].mxu0 %v4651
        %v4807 = vpop.f32.mrb[0].mxu0
        %v4808 = vadd.f32 %v4579, %v4807
        %v4809 = vpop.f32.mrb[0].mxu0
        %v4810 = vpop.f32.mrb[0].mxu0
        %v4811 = vadd.f32 %v4579, %v4810
        %v4812 = vpop.f32.mrb[0].mxu0
        %4813 = vdwg.mxu0
        %v4814 = vmax.f32 %v4688, 0.0
        %v4815 = vmax.f32 %v4691, 0.0
        %v4816 = vmax.f32 %v4696, 0.0
        %v4817 = vmax.f32 %v4699, 0.0
        %v4818 = vmax.f32 %v4704, 0.0
        %v4819 = vmax.f32 %v4707, 0.0
        %v4820 = vmax.f32 %v4712, 0.0
        %v4821 = vmax.f32 %v4715, 0.0
        %v4822 = vmax.f32 %v4720, 0.0
        %v4823 = vmax.f32 %v4723, 0.0
        %v4824 = vmax.f32 %v4728, 0.0
        %v4825 = vmax.f32 %v4731, 0.0
        %v4826 = vmax.f32 %v4736, 0.0
        %v4827 = vmax.f32 %v4739, 0.0
        %v4828 = vmax.f32 %v4744, 0.0
        %v4829 = vmax.f32 %v4747, 0.0
        %v4830 = vmax.f32 %v4752, 0.0
        %v4831 = vmax.f32 %v4755, 0.0
        %v4832 = vmax.f32 %v4760, 0.0
        %v4833 = vmax.f32 %v4763, 0.0
        %v4834 = vmax.f32 %v4768, 0.0
        %v4835 = vmax.f32 %v4771, 0.0
        %v4836 = vmax.f32 %v4776, 0.0
        %v4837 = vmax.f32 %v4779, 0.0
        %v4838 = vmax.f32 %v4784, 0.0
        %v4839 = vmax.f32 %v4787, 0.0
        %v4840 = vmax.f32 %v4792, 0.0
        %v4841 = vmax.f32 %v4795, 0.0
        %v4842 = vmax.f32 %v4800, 0.0
        %v4843 = vmax.f32 %v4803, 0.0
        %v4844 = vmax.f32 %v4808, 0.0
        %v4845 = vmax.f32 %v4811, 0.0
        %vm4846 = vcmask 785408
        %4847 = vst.msk [vmem:[#allocation2] sm:$0xff] %vm4846, %v4814
        %4848 = vst.msk [vmem:[#allocation2 + $0x8] sm:$0xff] %vm4846, %v4815
        %4849 = vst.msk [vmem:[#allocation2 + $0x10] sm:$0xff] %vm4846, %v4816
        %4850 = vst.msk [vmem:[#allocation2 + $0x18] sm:$0xff] %vm4846, %v4817
        %4851 = vst.msk [vmem:[#allocation2 + $0x20] sm:$0xff] %vm4846, %v4818
        %4852 = vst.msk [vmem:[#allocation2 + $0x28] sm:$0xff] %vm4846, %v4819
        %4853 = vst.msk [vmem:[#allocation2 + $0x30] sm:$0xff] %vm4846, %v4820
        %4854 = vst.msk [vmem:[#allocation2 + $0x38] sm:$0xff] %vm4846, %v4821
        %4855 = vst.msk [vmem:[#allocation2 + $0x40] sm:$0xff] %vm4846, %v4822
        %4856 = vst.msk [vmem:[#allocation2 + $0x48] sm:$0xff] %vm4846, %v4823
        %4857 = vst.msk [vmem:[#allocation2 + $0x50] sm:$0xff] %vm4846, %v4824
        %4858 = vst.msk [vmem:[#allocation2 + $0x58] sm:$0xff] %vm4846, %v4825
        %4859 = vst.msk [vmem:[#allocation2 + $0x60] sm:$0xff] %vm4846, %v4826
        %4860 = vst.msk [vmem:[#allocation2 + $0x68] sm:$0xff] %vm4846, %v4827
        %4861 = vst.msk [vmem:[#allocation2 + $0x70] sm:$0xff] %vm4846, %v4828
        %4862 = vst.msk [vmem:[#allocation2 + $0x78] sm:$0xff] %vm4846, %v4829
        %4863 = vst.msk [vmem:[#allocation2 + $0x80] sm:$0xff] %vm4846, %v4830
        %4864 = vst.msk [vmem:[#allocation2 + $0x88] sm:$0xff] %vm4846, %v4831
        %4865 = vst.msk [vmem:[#allocation2 + $0x90] sm:$0xff] %vm4846, %v4832
        %4866 = vst.msk [vmem:[#allocation2 + $0x98] sm:$0xff] %vm4846, %v4833
        %4867 = vst.msk [vmem:[#allocation2 + $0xa0] sm:$0xff] %vm4846, %v4834
        %4868 = vst.msk [vmem:[#allocation2 + $0xa8] sm:$0xff] %vm4846, %v4835
        %4869 = vst.msk [vmem:[#allocation2 + $0xb0] sm:$0xff] %vm4846, %v4836
        %4870 = vst.msk [vmem:[#allocation2 + $0xb8] sm:$0xff] %vm4846, %v4837
        %4871 = vst.msk [vmem:[#allocation2 + $0xc0] sm:$0xff] %vm4846, %v4838
        %4872 = vst.msk [vmem:[#allocation2 + $0xc8] sm:$0xff] %vm4846, %v4839
        %4873 = vst.msk [vmem:[#allocation2 + $0xd0] sm:$0xff] %vm4846, %v4840
        %4874 = vst.msk [vmem:[#allocation2 + $0xd8] sm:$0xff] %vm4846, %v4841
        %4875 = vst.msk [vmem:[#allocation2 + $0xe0] sm:$0xff] %vm4846, %v4842
        %4876 = vst.msk [vmem:[#allocation2 + $0xe8] sm:$0xff] %vm4846, %v4843
        %4877 = vst.msk [vmem:[#allocation2 + $0xf0] sm:$0xff] %vm4846, %v4844
        %4878 = vst.msk [vmem:[#allocation2 + $0xf8] sm:$0xff] %vm4846, %v4845
        %v4879 = vld [vmem:[#allocation2] ss:$2 sm:$0xff]
        %s4880 = scalar_lea.vmem [#allocation2], 16
        %v4881 = vld [vmem:[%s4880] ss:$2 sm:$0xff]
        %s4882 = scalar_lea.vmem [#allocation2], 32
        %v4883 = vld [vmem:[%s4882] ss:$2 sm:$0xff]
        %s4884 = scalar_lea.vmem [#allocation2], 48
        %v4885 = vld [vmem:[%s4884] ss:$2 sm:$0xff]
        %s4886 = scalar_lea.vmem [#allocation2], 64
        %v4887 = vld [vmem:[%s4886] ss:$2 sm:$0xff]
        %s4888 = scalar_lea.vmem [#allocation2], 80
        %v4889 = vld [vmem:[%s4888] ss:$2 sm:$0xff]
        %s4890 = scalar_lea.vmem [#allocation2], 96
        %v4891 = vld [vmem:[%s4890] ss:$2 sm:$0xff]
        %s4892 = scalar_lea.vmem [#allocation2], 112
        %v4893 = vld [vmem:[%s4892] ss:$2 sm:$0xff]
        %s4894 = scalar_lea.vmem [#allocation2], 128
        %v4895 = vld [vmem:[%s4894] ss:$2 sm:$0xff]
        %s4896 = scalar_lea.vmem [#allocation2], 144
        %v4897 = vld [vmem:[%s4896] ss:$2 sm:$0xff]
        %s4898 = scalar_lea.vmem [#allocation2], 160
        %v4899 = vld [vmem:[%s4898] ss:$2 sm:$0xff]
        %s4900 = scalar_lea.vmem [#allocation2], 176
        %v4901 = vld [vmem:[%s4900] ss:$2 sm:$0xff]
        %s4902 = scalar_lea.vmem [#allocation2], 192
        %v4903 = vld [vmem:[%s4902] ss:$2 sm:$0xff]
        %s4904 = scalar_lea.vmem [#allocation2], 208
        %v4905 = vld [vmem:[%s4904] ss:$2 sm:$0xff]
        %s4906 = scalar_lea.vmem [#allocation2], 224
        %v4907 = vld [vmem:[%s4906] ss:$2 sm:$0xff]
        %s4908 = scalar_lea.vmem [#allocation2], 240
        %v4909 = vld [vmem:[%s4908] ss:$2 sm:$0xff]
        %v4910 = vld [vmem:[%s3786] ss:$2 sm:$0xff]
        %v4911 = vld [vmem:[%s3788] ss:$2 sm:$0xff]
        %v4912 = vld [vmem:[%s3790] ss:$2 sm:$0xff]
        %v4913 = vld [vmem:[%s3792] ss:$2 sm:$0xff]
        %v4914 = vld [vmem:[%s3794] ss:$2 sm:$0xff]
        %v4915 = vld [vmem:[%s3796] ss:$2 sm:$0xff]
        %v4916 = vld [vmem:[%s3798] ss:$2 sm:$0xff]
        %v4917 = vld [vmem:[%s3800] ss:$2 sm:$0xff]
        %v4918 = vld [vmem:[%s3802] ss:$2 sm:$0xff]
        %v4919 = vld [vmem:[%s3804] ss:$2 sm:$0xff]
        %v4920 = vld [vmem:[%s3806] ss:$2 sm:$0xff]
        %v4921 = vld [vmem:[%s3808] ss:$2 sm:$0xff]
        %v4922 = vld [vmem:[%s3810] ss:$2 sm:$0xff]
        %v4923 = vld [vmem:[%s3812] ss:$2 sm:$0xff]
        %v4924 = vld [vmem:[%s3814] ss:$2 sm:$0xff]
        %v4925 = vld [vmem:[%s3816] ss:$2 sm:$0xff]
        %v4926 = vmax.f32 %v4879, %v4910
        %v4927 = vmax.f32 %v4881, %v4911
        %v4928 = vmax.f32 %v4883, %v4912
        %v4929 = vmax.f32 %v4885, %v4913
        %v4930 = vmax.f32 %v4887, %v4914
        %v4931 = vmax.f32 %v4889, %v4915
        %v4932 = vmax.f32 %v4891, %v4916
        %v4933 = vmax.f32 %v4893, %v4917
        %v4934 = vmax.f32 %v4895, %v4918
        %v4935 = vmax.f32 %v4897, %v4919
        %v4936 = vmax.f32 %v4899, %v4920
        %v4937 = vmax.f32 %v4901, %v4921
        %v4938 = vmax.f32 %v4903, %v4922
        %v4939 = vmax.f32 %v4905, %v4923
        %v4940 = vmax.f32 %v4907, %v4924
        %v4941 = vmax.f32 %v4909, %v4925
        %v4942 = vrot.slane %v4926, 7
        %v4943 = vrot.slane %v4927, 7
        %v4944 = vrot.slane %v4928, 7
        %v4945 = vrot.slane %v4929, 7
        %v4946 = vrot.slane %v4930, 7
        %v4947 = vrot.slane %v4931, 7
        %v4948 = vrot.slane %v4932, 7
        %v4949 = vrot.slane %v4933, 7
        %v4950 = vrot.slane %v4934, 7
        %v4951 = vrot.slane %v4935, 7
        %v4952 = vrot.slane %v4936, 7
        %v4953 = vrot.slane %v4937, 7
        %v4954 = vrot.slane %v4938, 7
        %v4955 = vrot.slane %v4939, 7
        %v4956 = vrot.slane %v4940, 7
        %v4957 = vrot.slane %v4941, 7
        %v4958 = vsel %vm1844, %v4956, %v4957
        %v4959 = vsel %vm1844, %v4955, %v4956
        %v4960 = vsel %vm1844, %v4954, %v4955
        %v4961 = vsel %vm1844, %v4953, %v4954
        %v4962 = vsel %vm1844, %v4952, %v4953
        %v4963 = vsel %vm1844, %v4951, %v4952
        %v4964 = vsel %vm1844, %v4950, %v4951
        %v4965 = vsel %vm1844, %v4949, %v4950
        %v4966 = vsel %vm1844, %v4948, %v4949
        %v4967 = vsel %vm1844, %v4947, %v4948
        %v4968 = vsel %vm1844, %v4946, %v4947
        %v4969 = vsel %vm1844, %v4945, %v4946
        %v4970 = vsel %vm1844, %v4944, %v4945
        %v4971 = vsel %vm1844, %v4943, %v4944
        %v4972 = vsel %vm1844, %v4942, %v4943
        %v4973 = vsel %vm1844, %v4957, %v4942
        %v4974 = vrot.slane %v4926, 1
        %v4975 = vrot.slane %v4927, 1
        %v4976 = vrot.slane %v4928, 1
        %v4977 = vrot.slane %v4929, 1
        %v4978 = vrot.slane %v4930, 1
        %v4979 = vrot.slane %v4931, 1
        %v4980 = vrot.slane %v4932, 1
        %v4981 = vrot.slane %v4933, 1
        %v4982 = vrot.slane %v4934, 1
        %v4983 = vrot.slane %v4935, 1
        %v4984 = vrot.slane %v4936, 1
        %v4985 = vrot.slane %v4937, 1
        %v4986 = vrot.slane %v4938, 1
        %v4987 = vrot.slane %v4939, 1
        %v4988 = vrot.slane %v4940, 1
        %v4989 = vrot.slane %v4941, 1
        %v4990 = vsel %vm1973, %v4988, %v4989
        %v4991 = vsel %vm1973, %v4987, %v4988
        %v4992 = vsel %vm1973, %v4986, %v4987
        %v4993 = vsel %vm1973, %v4985, %v4986
        %v4994 = vsel %vm1973, %v4984, %v4985
        %v4995 = vsel %vm1973, %v4983, %v4984
        %v4996 = vsel %vm1973, %v4982, %v4983
        %v4997 = vsel %vm1973, %v4981, %v4982
        %v4998 = vsel %vm1973, %v4980, %v4981
        %v4999 = vsel %vm1973, %v4979, %v4980
        %v5000 = vsel %vm1973, %v4978, %v4979
        %v5001 = vsel %vm1973, %v4977, %v4978
        %v5002 = vsel %vm1973, %v4976, %v4977
        %v5003 = vsel %vm1973, %v4975, %v4976
        %v5004 = vsel %vm1973, %v4974, %v4975
        %v5005 = vsel %vm1973, %v4989, %v4974
        %v5006 = vand.u32 %v1843, 15
        %v5007 = vand.u32 %v2038, 15
        %v5008 = vand.u32 %v2039, 15
        %v5009 = vand.u32 %v2040, 15
        %v5010 = vand.u32 %v2041, 15
        %v5011 = vand.u32 %v2042, 15
        %v5012 = vand.u32 %v2043, 15
        %v5013 = vand.u32 %v2044, 15
        %v5014 = vand.u32 %v2045, 15
        %v5015 = vand.u32 %v2046, 15
        %v5016 = vand.u32 %v2047, 15
        %v5017 = vand.u32 %v2048, 15
        %v5018 = vand.u32 %v2049, 15
        %v5019 = vand.u32 %v2050, 15
        %v5020 = vand.u32 %v2051, 15
        %v5021 = vand.u32 %v2052, 15
        %vm5022 = vcmp.eq.s32.totalorder %v5006, 0
        %vm5023 = vcmp.eq.s32.totalorder %v5007, 0
        %vm5024 = vcmp.eq.s32.totalorder %v5008, 0
        %vm5025 = vcmp.eq.s32.totalorder %v5009, 0
        %vm5026 = vcmp.eq.s32.totalorder %v5010, 0
        %vm5027 = vcmp.eq.s32.totalorder %v5011, 0
        %vm5028 = vcmp.eq.s32.totalorder %v5012, 0
        %vm5029 = vcmp.eq.s32.totalorder %v5013, 0
        %vm5030 = vcmp.eq.s32.totalorder %v5014, 0
        %vm5031 = vcmp.eq.s32.totalorder %v5015, 0
        %vm5032 = vcmp.eq.s32.totalorder %v5016, 0
        %vm5033 = vcmp.eq.s32.totalorder %v5017, 0
        %vm5034 = vcmp.eq.s32.totalorder %v5018, 0
        %vm5035 = vcmp.eq.s32.totalorder %v5019, 0
        %vm5036 = vcmp.eq.s32.totalorder %v5020, 0
        %vm5037 = vcmp.eq.s32.totalorder %v5021, 0
        %v5038 = vsel %vm5022, 1, 0
        %v5039 = vsel %vm5023, 1, 0
        %v5040 = vsel %vm5024, 1, 0
        %v5041 = vsel %vm5025, 1, 0
        %v5042 = vsel %vm5026, 1, 0
        %v5043 = vsel %vm5027, 1, 0
        %v5044 = vsel %vm5028, 1, 0
        %v5045 = vsel %vm5029, 1, 0
        %v5046 = vsel %vm5030, 1, 0
        %v5047 = vsel %vm5031, 1, 0
        %v5048 = vsel %vm5032, 1, 0
        %v5049 = vsel %vm5033, 1, 0
        %v5050 = vsel %vm5034, 1, 0
        %v5051 = vsel %vm5035, 1, 0
        %v5052 = vsel %vm5036, 1, 0
        %v5053 = vsel %vm5037, 1, 0
        %vm5054 = vcmp.eq.s32.totalorder %v5038, 1
        %vm5055 = vcmp.eq.s32.totalorder %v5039, 1
        %vm5056 = vcmp.eq.s32.totalorder %v5040, 1
        %vm5057 = vcmp.eq.s32.totalorder %v5041, 1
        %vm5058 = vcmp.eq.s32.totalorder %v5042, 1
        %vm5059 = vcmp.eq.s32.totalorder %v5043, 1
        %vm5060 = vcmp.eq.s32.totalorder %v5044, 1
        %vm5061 = vcmp.eq.s32.totalorder %v5045, 1
        %vm5062 = vcmp.eq.s32.totalorder %v5046, 1
        %vm5063 = vcmp.eq.s32.totalorder %v5047, 1
        %vm5064 = vcmp.eq.s32.totalorder %v5048, 1
        %vm5065 = vcmp.eq.s32.totalorder %v5049, 1
        %vm5066 = vcmp.eq.s32.totalorder %v5050, 1
        %vm5067 = vcmp.eq.s32.totalorder %v5051, 1
        %vm5068 = vcmp.eq.s32.totalorder %v5052, 1
        %vm5069 = vcmp.eq.s32.totalorder %v5053, 1
        %v5070 = vsel %vm5054, 0.0, %v4973
        %v5071 = vsel %vm5055, 0.0, %v4972
        %v5072 = vsel %vm5056, 0.0, %v4971
        %v5073 = vsel %vm5057, 0.0, %v4970
        %v5074 = vsel %vm5058, 0.0, %v4969
        %v5075 = vsel %vm5059, 0.0, %v4968
        %v5076 = vsel %vm5060, 0.0, %v4967
        %v5077 = vsel %vm5061, 0.0, %v4966
        %v5078 = vsel %vm5062, 0.0, %v4965
        %v5079 = vsel %vm5063, 0.0, %v4964
        %v5080 = vsel %vm5064, 0.0, %v4963
        %v5081 = vsel %vm5065, 0.0, %v4962
        %v5082 = vsel %vm5066, 0.0, %v4961
        %v5083 = vsel %vm5067, 0.0, %v4960
        %v5084 = vsel %vm5068, 0.0, %v4959
        %v5085 = vsel %vm5069, 0.0, %v4958
        %vm5086 = vcmp.eq.s32.totalorder %v5006, 15
        %vm5087 = vcmp.eq.s32.totalorder %v5007, 15
        %vm5088 = vcmp.eq.s32.totalorder %v5008, 15
        %vm5089 = vcmp.eq.s32.totalorder %v5009, 15
        %vm5090 = vcmp.eq.s32.totalorder %v5010, 15
        %vm5091 = vcmp.eq.s32.totalorder %v5011, 15
        %vm5092 = vcmp.eq.s32.totalorder %v5012, 15
        %vm5093 = vcmp.eq.s32.totalorder %v5013, 15
        %vm5094 = vcmp.eq.s32.totalorder %v5014, 15
        %vm5095 = vcmp.eq.s32.totalorder %v5015, 15
        %vm5096 = vcmp.eq.s32.totalorder %v5016, 15
        %vm5097 = vcmp.eq.s32.totalorder %v5017, 15
        %vm5098 = vcmp.eq.s32.totalorder %v5018, 15
        %vm5099 = vcmp.eq.s32.totalorder %v5019, 15
        %vm5100 = vcmp.eq.s32.totalorder %v5020, 15
        %vm5101 = vcmp.eq.s32.totalorder %v5021, 15
        %v5102 = vsel %vm5086, 1, 0
        %v5103 = vsel %vm5087, 1, 0
        %v5104 = vsel %vm5088, 1, 0
        %v5105 = vsel %vm5089, 1, 0
        %v5106 = vsel %vm5090, 1, 0
        %v5107 = vsel %vm5091, 1, 0
        %v5108 = vsel %vm5092, 1, 0
        %v5109 = vsel %vm5093, 1, 0
        %v5110 = vsel %vm5094, 1, 0
        %v5111 = vsel %vm5095, 1, 0
        %v5112 = vsel %vm5096, 1, 0
        %v5113 = vsel %vm5097, 1, 0
        %v5114 = vsel %vm5098, 1, 0
        %v5115 = vsel %vm5099, 1, 0
        %v5116 = vsel %vm5100, 1, 0
        %v5117 = vsel %vm5101, 1, 0
        %vm5118 = vcmp.eq.s32.totalorder %v5102, 1
        %vm5119 = vcmp.eq.s32.totalorder %v5103, 1
        %vm5120 = vcmp.eq.s32.totalorder %v5104, 1
        %vm5121 = vcmp.eq.s32.totalorder %v5105, 1
        %vm5122 = vcmp.eq.s32.totalorder %v5106, 1
        %vm5123 = vcmp.eq.s32.totalorder %v5107, 1
        %vm5124 = vcmp.eq.s32.totalorder %v5108, 1
        %vm5125 = vcmp.eq.s32.totalorder %v5109, 1
        %vm5126 = vcmp.eq.s32.totalorder %v5110, 1
        %vm5127 = vcmp.eq.s32.totalorder %v5111, 1
        %vm5128 = vcmp.eq.s32.totalorder %v5112, 1
        %vm5129 = vcmp.eq.s32.totalorder %v5113, 1
        %vm5130 = vcmp.eq.s32.totalorder %v5114, 1
        %vm5131 = vcmp.eq.s32.totalorder %v5115, 1
        %vm5132 = vcmp.eq.s32.totalorder %v5116, 1
        %vm5133 = vcmp.eq.s32.totalorder %v5117, 1
        %v5134 = vsel %vm5118, 0.0, %v5004
        %v5135 = vsel %vm5119, 0.0, %v5003
        %v5136 = vsel %vm5120, 0.0, %v5002
        %v5137 = vsel %vm5121, 0.0, %v5001
        %v5138 = vsel %vm5122, 0.0, %v5000
        %v5139 = vsel %vm5123, 0.0, %v4999
        %v5140 = vsel %vm5124, 0.0, %v4998
        %v5141 = vsel %vm5125, 0.0, %v4997
        %v5142 = vsel %vm5126, 0.0, %v4996
        %v5143 = vsel %vm5127, 0.0, %v4995
        %v5144 = vsel %vm5128, 0.0, %v4994
        %v5145 = vsel %vm5129, 0.0, %v4993
        %v5146 = vsel %vm5130, 0.0, %v4992
        %v5147 = vsel %vm5131, 0.0, %v4991
        %v5148 = vsel %vm5132, 0.0, %v4990
        %v5149 = vsel %vm5133, 0.0, %v5005
        %v5150 = vld [vmem:[%s17] sm:$0x1]
        %v5152 = vlaneseq
        %v5153 = vshrl.u32 %v5152, 7
        %v5154 = vsub.s32 0, %v5153
        %v5155 = vrot.slane %v5150, %v5154
        %v5157 = vmul.f32 %v5070, %v5155
        %v5158 = vmul.f32 %v5071, %v5155
        %v5159 = vmul.f32 %v5072, %v5155
        %v5160 = vmul.f32 %v5073, %v5155
        %v5161 = vmul.f32 %v5074, %v5155
        %v5162 = vmul.f32 %v5075, %v5155
        %v5163 = vmul.f32 %v5076, %v5155
        %v5164 = vmul.f32 %v5077, %v5155
        %v5165 = vmul.f32 %v5078, %v5155
        %v5166 = vmul.f32 %v5079, %v5155
        %v5167 = vmul.f32 %v5080, %v5155
        %v5168 = vmul.f32 %v5081, %v5155
        %v5169 = vmul.f32 %v5082, %v5155
        %v5170 = vmul.f32 %v5083, %v5155
        %v5171 = vmul.f32 %v5084, %v5155
        %v5172 = vmul.f32 %v5085, %v5155
        %v5173 = vld [vmem:[%s18] sm:$0x1]
        %v5175 = vlaneseq
        %v5176 = vshrl.u32 %v5175, 7
        %v5177 = vsub.s32 0, %v5176
        %v5178 = vrot.slane %v5173, %v5177
        %v5180 = vmul.f32 %v4926, %v5178
        %v5181 = vmul.f32 %v4927, %v5178
        %v5182 = vmul.f32 %v4928, %v5178
        %v5183 = vmul.f32 %v4929, %v5178
        %v5184 = vmul.f32 %v4930, %v5178
        %v5185 = vmul.f32 %v4931, %v5178
        %v5186 = vmul.f32 %v4932, %v5178
        %v5187 = vmul.f32 %v4933, %v5178
        %v5188 = vmul.f32 %v4934, %v5178
        %v5189 = vmul.f32 %v4935, %v5178
        %v5190 = vmul.f32 %v4936, %v5178
        %v5191 = vmul.f32 %v4937, %v5178
        %v5192 = vmul.f32 %v4938, %v5178
        %v5193 = vmul.f32 %v4939, %v5178
        %v5194 = vmul.f32 %v4940, %v5178
        %v5195 = vmul.f32 %v4941, %v5178
        %v5196 = vadd.f32 %v5157, %v5180
        %v5197 = vadd.f32 %v5158, %v5181
        %v5198 = vadd.f32 %v5159, %v5182
        %v5199 = vadd.f32 %v5160, %v5183
        %v5200 = vadd.f32 %v5161, %v5184
        %v5201 = vadd.f32 %v5162, %v5185
        %v5202 = vadd.f32 %v5163, %v5186
        %v5203 = vadd.f32 %v5164, %v5187
        %v5204 = vadd.f32 %v5165, %v5188
        %v5205 = vadd.f32 %v5166, %v5189
        %v5206 = vadd.f32 %v5167, %v5190
        %v5207 = vadd.f32 %v5168, %v5191
        %v5208 = vadd.f32 %v5169, %v5192
        %v5209 = vadd.f32 %v5170, %v5193
        %v5210 = vadd.f32 %v5171, %v5194
        %v5211 = vadd.f32 %v5172, %v5195
        %v5212 = vld [vmem:[%s19] sm:$0x1]
        %v5214 = vlaneseq
        %v5215 = vshrl.u32 %v5214, 7
        %v5216 = vsub.s32 0, %v5215
        %v5217 = vrot.slane %v5212, %v5216
        %v5219 = vmul.f32 %v5134, %v5217
        %v5220 = vmul.f32 %v5135, %v5217
        %v5221 = vmul.f32 %v5136, %v5217
        %v5222 = vmul.f32 %v5137, %v5217
        %v5223 = vmul.f32 %v5138, %v5217
        %v5224 = vmul.f32 %v5139, %v5217
        %v5225 = vmul.f32 %v5140, %v5217
        %v5226 = vmul.f32 %v5141, %v5217
        %v5227 = vmul.f32 %v5142, %v5217
        %v5228 = vmul.f32 %v5143, %v5217
        %v5229 = vmul.f32 %v5144, %v5217
        %v5230 = vmul.f32 %v5145, %v5217
        %v5231 = vmul.f32 %v5146, %v5217
        %v5232 = vmul.f32 %v5147, %v5217
        %v5233 = vmul.f32 %v5148, %v5217
        %v5234 = vmul.f32 %v5149, %v5217
        %v5235 = vadd.f32 %v5196, %v5219
        %v5236 = vadd.f32 %v5197, %v5220
        %v5237 = vadd.f32 %v5198, %v5221
        %v5238 = vadd.f32 %v5199, %v5222
        %v5239 = vadd.f32 %v5200, %v5223
        %v5240 = vadd.f32 %v5201, %v5224
        %v5241 = vadd.f32 %v5202, %v5225
        %v5242 = vadd.f32 %v5203, %v5226
        %v5243 = vadd.f32 %v5204, %v5227
        %v5244 = vadd.f32 %v5205, %v5228
        %v5245 = vadd.f32 %v5206, %v5229
        %v5246 = vadd.f32 %v5207, %v5230
        %v5247 = vadd.f32 %v5208, %v5231
        %v5248 = vadd.f32 %v5209, %v5232
        %v5249 = vadd.f32 %v5210, %v5233
        %v5250 = vadd.f32 %v5211, %v5234
        %v5251 = vld [vmem:[%s20] sm:$0x1]
        %v5253 = vlaneseq
        %v5254 = vshrl.u32 %v5253, 7
        %v5255 = vsub.s32 0, %v5254
        %v5256 = vrot.slane %v5251, %v5255
        %v5258 = vadd.f32 %v5235, %v5256
        %v5259 = vadd.f32 %v5236, %v5256
        %v5260 = vadd.f32 %v5237, %v5256
        %v5261 = vadd.f32 %v5238, %v5256
        %v5262 = vadd.f32 %v5239, %v5256
        %v5263 = vadd.f32 %v5240, %v5256
        %v5264 = vadd.f32 %v5241, %v5256
        %v5265 = vadd.f32 %v5242, %v5256
        %v5266 = vadd.f32 %v5243, %v5256
        %v5267 = vadd.f32 %v5244, %v5256
        %v5268 = vadd.f32 %v5245, %v5256
        %v5269 = vadd.f32 %v5246, %v5256
        %v5270 = vadd.f32 %v5247, %v5256
        %v5271 = vadd.f32 %v5248, %v5256
        %v5272 = vadd.f32 %v5249, %v5256
        %v5273 = vadd.f32 %v5250, %v5256
        %v5274 = vmax.f32 %v5258, 0.0
        %v5275 = vmax.f32 %v5259, 0.0
        %v5276 = vmax.f32 %v5260, 0.0
        %v5277 = vmax.f32 %v5261, 0.0
        %v5278 = vmax.f32 %v5262, 0.0
        %v5279 = vmax.f32 %v5263, 0.0
        %v5280 = vmax.f32 %v5264, 0.0
        %v5281 = vmax.f32 %v5265, 0.0
        %v5282 = vmax.f32 %v5266, 0.0
        %v5283 = vmax.f32 %v5267, 0.0
        %v5284 = vmax.f32 %v5268, 0.0
        %v5285 = vmax.f32 %v5269, 0.0
        %v5286 = vmax.f32 %v5270, 0.0
        %v5287 = vmax.f32 %v5271, 0.0
        %v5288 = vmax.f32 %v5272, 0.0
        %v5289 = vmax.f32 %v5273, 0.0
        %v5290 = vpack.c.bf16 %v5275, %v5274
        %v5291 = vpack.c.bf16 %v5277, %v5276
        %v5292 = vpack.c.bf16 %v5279, %v5278
        %v5293 = vpack.c.bf16 %v5281, %v5280
        %v5294 = vpack.c.bf16 %v5283, %v5282
        %v5295 = vpack.c.bf16 %v5285, %v5284
        %v5296 = vpack.c.bf16 %v5287, %v5286
        %v5297 = vpack.c.bf16 %v5289, %v5288
        %v5298 = vld [vmem:[%s21] sm:$0xf]
        %v5299 = vld [vmem:[%s21 + $0x4] sm:$0xf]
        %v5300 = vld [vmem:[%s21 + $0x8] sm:$0xf]
        %v5301 = vld [vmem:[%s21 + $0xc] sm:$0xf]
        %v5302 = vld [vmem:[%s21 + $0x10] sm:$0xf]
        %v5303 = vld [vmem:[%s21 + $0x14] sm:$0xf]
        %v5304 = vld [vmem:[%s21 + $0x18] sm:$0xf]
        %v5305 = vld [vmem:[%s21 + $0x1c] sm:$0xf]
        %v5306 = vld [vmem:[%s21 + $0x20] sm:$0xf]
        %v5307 = vld [vmem:[%s21 + $0x24] sm:$0xf]
        %v5308 = vld [vmem:[%s21 + $0x28] sm:$0xf]
        %v5309 = vld [vmem:[%s21 + $0x2c] sm:$0xf]
        %v5310 = vld [vmem:[%s22] sm:$0x1]
        %v5312 = vlaneseq
        %v5313 = vshrl.u32 %v5312, 7
        %v5314 = vsub.s32 0, %v5313
        %v5315 = vrot.slane %v5310, %v5314
        %v5329 = vunpack.c.l.b16 %v5298
        %v5330 = vunpack.c.l.b16 %v5299
        %v5331 = vunpack.c.l.b16 %v5300
        %v5332 = vunpack.c.l.b16 %v5301
        %v5333 = vunpack.c.l.b16 %v5302
        %v5334 = vunpack.c.l.b16 %v5303
        %v5335 = vunpack.c.l.b16 %v5304
        %v5336 = vunpack.c.l.b16 %v5305
        %v5337 = vunpack.c.l.b16 %v5306
        %v5338 = vunpack.c.l.b16 %v5307
        %v5339 = vunpack.c.l.b16 %v5308
        %v5340 = vunpack.c.l.b16 %v5309
        %v5341 = vpack.c.b16 %v5330, %v5329
        %v5342 = vpack.c.b16 %v5332, %v5331
        %v5343 = vpack.c.b16 %v5334, %v5333
        %v5344 = vpack.c.b16 %v5336, %v5335
        %v5345 = vpack.c.b16 %v5338, %v5337
        %v5346 = vpack.c.b16 %v5340, %v5339
        %v5354 = vsel %vm4846, %v5290, 0
        %v5357 = vsel %vm4846, %v5291, 0
        %v5360 = vsel %vm4846, %v5292, 0
        %v5363 = vsel %vm4846, %v5293, 0
        %v5366 = vsel %vm4846, %v5294, 0
        %v5369 = vsel %vm4846, %v5295, 0
        %v5372 = vsel %vm4846, %v5296, 0
        %v5375 = vsel %vm4846, %v5297, 0
        %5377 = vmatprep.subr.bf16.mxu0 0
        %5378 = vmatpush1.bf16.msra.mxu0 %v5341
        %5379 = vmatprep.subr.bf16.mxu0 0
        %5380 = vmatpush1.bf16.msra.mxu0 %v5342
        %5381 = vmatprep.subr.bf16.mxu0 0
        %5382 = vmatpush1.bf16.msra.mxu0 %v5343
        %5383 = vmatprep.subr.bf16.mxu0 0
        %5384 = vmatpush1.bf16.msra.mxu0 %v5344
        %5385 = vmatprep.subr.bf16.mxu0 0
        %5386 = vmatpush1.bf16.msra.mxu0 %v5345
        %5387 = vmatprep.subr.bf16.mxu0 0
        %5388 = vmatpush1.bf16.msra.mxu0 %v5346
        %5389 = vmatprep.subr.bf16.mxu0 0
        %5390 = vmatpush1.bf16.msra.mxu0 0
        %5391 = vmatprep.subr.bf16.mxu0 0
        %5392 = vmatpush1.bf16.msra.mxu0 0
        %5393 = vmatprep.subr.bf16.mxu0 0
        %5394 = vmatpush1.bf16.msra.mxu0 0
        %5395 = vmatprep.subr.bf16.mxu0 0
        %5396 = vmatpush1.bf16.msra.mxu0 0
        %5397 = vmatprep.subr.bf16.mxu0 0
        %5398 = vmatpush1.bf16.msra.mxu0 0
        %5399 = vmatprep.subr.bf16.mxu0 0
        %5400 = vmatpush1.bf16.msra.mxu0 0
        %5401 = vmatprep.subr.bf16.mxu0 0
        %5402 = vmatpush1.bf16.msra.mxu0 0
        %5403 = vmatprep.subr.bf16.mxu0 0
        %5404 = vmatpush1.bf16.msra.mxu0 0
        %5405 = vmatprep.subr.bf16.mxu0 0
        %5406 = vmatpush1.bf16.msra.mxu0 0
        %5407 = vmatprep.subr.bf16.mxu0 0
        %5408 = vmatpush1.bf16.msra.mxu0 0
        %5409 = vmatprep.mubr.bf16.mxu0 0
        %5410 = vmatmul.mubr.bf16.gmra.mrb[0].mxu0 %v5354
        %v5411 = vpop.f32.mrb[0].mxu0
        %v5412 = vadd.f32 %v5315, %v5411
        %v5413 = vpop.f32.mrb[0].mxu0
        %v5414 = vpop.f32.mrb[0].mxu0
        %v5415 = vadd.f32 %v5315, %v5414
        %v5416 = vpop.f32.mrb[0].mxu0
        %5417 = vmatprep.mubr.bf16.mxu0 0
        %5418 = vmatmul.mubr.bf16.gmra.mrb[0].mxu0 %v5357
        %v5419 = vpop.f32.mrb[0].mxu0
        %v5420 = vadd.f32 %v5315, %v5419
        %v5421 = vpop.f32.mrb[0].mxu0
        %v5422 = vpop.f32.mrb[0].mxu0
        %v5423 = vadd.f32 %v5315, %v5422
        %v5424 = vpop.f32.mrb[0].mxu0
        %5425 = vmatprep.mubr.bf16.mxu0 0
        %5426 = vmatmul.mubr.bf16.gmra.mrb[0].mxu0 %v5360
        %v5427 = vpop.f32.mrb[0].mxu0
        %v5428 = vadd.f32 %v5315, %v5427
        %v5429 = vpop.f32.mrb[0].mxu0
        %v5430 = vpop.f32.mrb[0].mxu0
        %v5431 = vadd.f32 %v5315, %v5430
        %v5432 = vpop.f32.mrb[0].mxu0
        %5433 = vmatprep.mubr.bf16.mxu0 0
        %5434 = vmatmul.mubr.bf16.gmra.mrb[0].mxu0 %v5363
        %v5435 = vpop.f32.mrb[0].mxu0
        %v5436 = vadd.f32 %v5315, %v5435
        %v5437 = vpop.f32.mrb[0].mxu0
        %v5438 = vpop.f32.mrb[0].mxu0
        %v5439 = vadd.f32 %v5315, %v5438
        %v5440 = vpop.f32.mrb[0].mxu0
        %5441 = vmatprep.mubr.bf16.mxu0 0
        %5442 = vmatmul.mubr.bf16.gmra.mrb[0].mxu0 %v5366
        %v5443 = vpop.f32.mrb[0].mxu0
        %v5444 = vadd.f32 %v5315, %v5443
        %v5445 = vpop.f32.mrb[0].mxu0
        %v5446 = vpop.f32.mrb[0].mxu0
        %v5447 = vadd.f32 %v5315, %v5446
        %v5448 = vpop.f32.mrb[0].mxu0
        %5449 = vmatprep.mubr.bf16.mxu0 0
        %5450 = vmatmul.mubr.bf16.gmra.mrb[0].mxu0 %v5369
        %v5451 = vpop.f32.mrb[0].mxu0
        %v5452 = vadd.f32 %v5315, %v5451
        %v5453 = vpop.f32.mrb[0].mxu0
        %v5454 = vpop.f32.mrb[0].mxu0
        %v5455 = vadd.f32 %v5315, %v5454
        %v5456 = vpop.f32.mrb[0].mxu0
        %5457 = vmatprep.mubr.bf16.mxu0 0
        %5458 = vmatmul.mubr.bf16.gmra.mrb[0].mxu0 %v5372
        %v5459 = vpop.f32.mrb[0].mxu0
        %v5460 = vadd.f32 %v5315, %v5459
        %v5461 = vpop.f32.mrb[0].mxu0
        %v5462 = vpop.f32.mrb[0].mxu0
        %v5463 = vadd.f32 %v5315, %v5462
        %v5464 = vpop.f32.mrb[0].mxu0
        %5465 = vmatprep.mubr.bf16.mxu0 0
        %5466 = vmatmul.mubr.bf16.gmra.mrb[0].mxu0 %v5375
        %v5467 = vpop.f32.mrb[0].mxu0
        %v5468 = vadd.f32 %v5315, %v5467
        %v5469 = vpop.f32.mrb[0].mxu0
        %v5470 = vpop.f32.mrb[0].mxu0
        %v5471 = vadd.f32 %v5315, %v5470
        %v5472 = vpop.f32.mrb[0].mxu0
        %5473 = vdwg.mxu0
        %v5474 = vmax.f32 %v5412, 0.0
        %v5475 = vmax.f32 %v5415, 0.0
        %v5476 = vmax.f32 %v5420, 0.0
        %v5477 = vmax.f32 %v5423, 0.0
        %v5478 = vmax.f32 %v5428, 0.0
        %v5479 = vmax.f32 %v5431, 0.0
        %v5480 = vmax.f32 %v5436, 0.0
        %v5481 = vmax.f32 %v5439, 0.0
        %v5482 = vmax.f32 %v5444, 0.0
        %v5483 = vmax.f32 %v5447, 0.0
        %v5484 = vmax.f32 %v5452, 0.0
        %v5485 = vmax.f32 %v5455, 0.0
        %v5486 = vmax.f32 %v5460, 0.0
        %v5487 = vmax.f32 %v5463, 0.0
        %v5488 = vmax.f32 %v5468, 0.0
        %v5489 = vmax.f32 %v5471, 0.0
        %5490 = vst [vmem:[#allocation2] sm:$0xff] %v5474
        %5491 = vst [vmem:[#allocation2 + $0x8] sm:$0xff] %v5475
        %5492 = vst [vmem:[#allocation2 + $0x10] sm:$0xff] %v5476
        %5493 = vst [vmem:[#allocation2 + $0x18] sm:$0xff] %v5477
        %5494 = vst [vmem:[#allocation2 + $0x20] sm:$0xff] %v5478
        %5495 = vst [vmem:[#allocation2 + $0x28] sm:$0xff] %v5479
        %5496 = vst [vmem:[#allocation2 + $0x30] sm:$0xff] %v5480
        %5497 = vst [vmem:[#allocation2 + $0x38] sm:$0xff] %v5481
        %5498 = vst [vmem:[#allocation2 + $0x40] sm:$0xff] %v5482
        %5499 = vst [vmem:[#allocation2 + $0x48] sm:$0xff] %v5483
        %5500 = vst [vmem:[#allocation2 + $0x50] sm:$0xff] %v5484
        %5501 = vst [vmem:[#allocation2 + $0x58] sm:$0xff] %v5485
        %5502 = vst [vmem:[#allocation2 + $0x60] sm:$0xff] %v5486
        %5503 = vst [vmem:[#allocation2 + $0x68] sm:$0xff] %v5487
        %5504 = vst [vmem:[#allocation2 + $0x70] sm:$0xff] %v5488
        %5505 = vst [vmem:[#allocation2 + $0x78] sm:$0xff] %v5489
        %v5506 = vld [vmem:[#allocation2] ss:$2 sm:$0xff]
        %v5507 = vld [vmem:[%s4880] ss:$2 sm:$0xff]
        %v5508 = vld [vmem:[%s4882] ss:$2 sm:$0xff]
        %v5509 = vld [vmem:[%s4884] ss:$2 sm:$0xff]
        %v5510 = vld [vmem:[%s4886] ss:$2 sm:$0xff]
        %v5511 = vld [vmem:[%s4888] ss:$2 sm:$0xff]
        %v5512 = vld [vmem:[%s4890] ss:$2 sm:$0xff]
        %v5513 = vld [vmem:[%s4892] ss:$2 sm:$0xff]
        %v5514 = vld [vmem:[%s3786] ss:$2 sm:$0xff]
        %v5515 = vld [vmem:[%s3788] ss:$2 sm:$0xff]
        %v5516 = vld [vmem:[%s3790] ss:$2 sm:$0xff]
        %v5517 = vld [vmem:[%s3792] ss:$2 sm:$0xff]
        %v5518 = vld [vmem:[%s3794] ss:$2 sm:$0xff]
        %v5519 = vld [vmem:[%s3796] ss:$2 sm:$0xff]
        %v5520 = vld [vmem:[%s3798] ss:$2 sm:$0xff]
        %v5521 = vld [vmem:[%s3800] ss:$2 sm:$0xff]
        %v5522 = vmax.f32 %v5506, %v5514
        %v5523 = vmax.f32 %v5507, %v5515
        %v5524 = vmax.f32 %v5508, %v5516
        %v5525 = vmax.f32 %v5509, %v5517
        %v5526 = vmax.f32 %v5510, %v5518
        %v5527 = vmax.f32 %v5511, %v5519
        %v5528 = vmax.f32 %v5512, %v5520
        %v5529 = vmax.f32 %v5513, %v5521
        %5530 = vst [vmem:[%s706] sm:$0xff] %v5522
        %5531 = vst [vmem:[%s706 + $0x8] sm:$0xff] %v5523
        %5532 = vst [vmem:[%s706 + $0x10] sm:$0xff] %v5524
        %5533 = vst [vmem:[%s706 + $0x18] sm:$0xff] %v5525
        %5534 = vst [vmem:[%s706 + $0x20] sm:$0xff] %v5526
        %5535 = vst [vmem:[%s706 + $0x28] sm:$0xff] %v5527
        %5536 = vst [vmem:[%s706 + $0x30] sm:$0xff] %v5528
        %5537 = vst [vmem:[%s706 + $0x38] sm:$0xff] %v5529
        %s5538 = sand.u32 %s533, 1
        %s5539 = scalar_lea.sflag [#allocation4], %s5538
        %s5540 = sand.u32 %s533, 1
        %s5541 = smul.addr %s5540, 64
        %s5542 = scalar_lea.vmem [#allocation3], %s5541
        // Predicated region
        $region113: #{tpu_custom_call.1} parent=111 // pred_check
          %p5543 = pneg %p543
        $region114: #{tpu_custom_call.1} parent=111 // pred_check_branch
          %5545 = sbr.rel (%p5543) target = $region116
        $region115: #{tpu_custom_call.1} parent=111 // pred_region
          %s5546 = smul.u32 8, %s37
          %s5548 = ssub.s32 1024, 1024
          %5549 = vsyncadd %s5539, %s5548
          %s5550 = smul.addr %s5546, 128
          %s5551 = scalar_lea.hbm %s23, %s5550
          %s5552 = sshll.u32 %s5542, 4
          %s5553 = int_to_ptr.vmem [resolvable:$true] %s5552
          %5558 = dma.vmem_to_hbm [thread:$0]  %s5553, 1024, %s5551, %s5539, 128, 128, 8
        $region116: #{tpu_custom_call.1} parent=111 // pred_fallthru
          _
      $region112: #{tpu_custom_call.1} parent=5 // pred_fallthru
        _
      %p5559 = scmp.le.s32.totalorder 2, %s32
      // Predicated region
      $region117: #{tpu_custom_call.1} parent=5 // pred_check
        %p5560 = pneg %p5559
      $region118: #{tpu_custom_call.1} parent=5 // pred_check_branch
        %5562 = sbr.rel (%p5560) target = $region120
      $region119: #{tpu_custom_call.1} parent=5 // pred_region
        %s5563 = ssub.s32 %s32, 2
        // Predicated region
        $region121: #{tpu_custom_call.1} parent=119 // pred_check
          %p5564 = pneg %p549
        $region122: #{tpu_custom_call.1} parent=119 // pred_check_branch
          %5566 = sbr.rel (%p5564) target = $region124
        $region123: #{tpu_custom_call.1} parent=119 // pred_region
          %s5567 = sand.u32 %s534, 1
          %s5568 = scalar_lea.sflag [#allocation4], %s5567
          %s5569 = sand.u32 %s534, 1
          %s5570 = smul.addr %s5569, 64
          %s5571 = scalar_lea.vmem [#allocation3], %s5570
          %5572 = dma.done %s5568, 1024
        $region124: #{tpu_custom_call.1} parent=119 // pred_fallthru
          _
      $region120: #{tpu_custom_call.1} parent=5 // pred_fallthru
        _
    $region6: #{tpu_custom_call.1} parent=1 // loop_footer
      %s36 = sadd.s32 1, %s32
    $region7: #{tpu_custom_call.1} parent=1 // loop_footer_branch
      %31 = sbr.rel target = $region3
    $region8: #{tpu_custom_call.1} parent=1 // loop_exit
      _
    %5573 = vsyncpa [#allocation4], 1
    %s5574 = scalar_lea.sflag [#allocation4], 1
    %5575 = vsyncpa %s5574, 1

</llo_original>
